<compile_context>
chip_gen: v7x
topology: tpu7x:2x2x1
jax: 0.10.0
libtpu: 0.0.40
codegen_flags: <defaults>
</compile_context>

<pallas_src>
import functools

import jax
import jax.numpy as jnp
from jax import lax
from jax.experimental import pallas as pl
from jax.experimental.pallas import tpu as pltpu


def _round_up(n: int, m: int) -> int:
    return ((n + m - 1) // m) * m


def _pick_tile_rows(H, W, ICP, OCP, budget_bytes=12 * 2**20):
    """Largest divisor of H whose per-grid-step VMEM footprint fits the budget."""
    def est(th):
        x_blk = 2 * (th + 2) * (W + 2) * ICP * 2       # input tile, dbuf, bf16
        w_blk = 4 * 4 * ICP * OCP * 2                  # folded weights, bf16
        raw_blk = 2 * 4 * th * W * OCP * 2             # raw out block (lane-padded)
        accs = 4 * th * W * OCP * 4                    # 4 fp32 phase accumulators
        cols = 2 * th * W * 4 * ICP * 2                # im2col LHS (transient)
        return x_blk + w_blk + raw_blk + accs + cols
    cands = [d for d in range(1, H + 1) if H % d == 0 and est(d) <= budget_bytes]
    th = max(cands) if cands else 1
    return th, est(th)


def _fold_phase_weights(w, icp, ocp):
    """Fold the 3x3 kernel into four 2x2 phase kernels (sub-pixel decomposition)
    and pack each as a (4*icp, ocp) matmul RHS, tap-major / channel-minor."""
    oc, ic, _, _ = w.shape
    # R[ph, dr, kh]: which original kernel rows land on padded-row offset dr for
    # output phase ph (same matrix is used for columns).
    R = jnp.array([[[1., 0., 0.], [0., 1., 1.]],
                   [[1., 1., 0.], [0., 0., 1.]]], dtype=jnp.float32)
    wf = jnp.einsum('pak,qbl,oikl->pqabio', R, R, w.astype(jnp.float32))
    wf = jnp.pad(wf, ((0, 0),) * 4 + ((0, icp - ic), (0, ocp - oc)))
    return wf.reshape(4, 4 * icp, ocp).astype(jnp.bfloat16)   # phase = 2*ph + pw


# ---------------------------------------------------------------------------
# Kernel 1: per (sample, row-tile): 4 phase matmuls + per-tile two-pass stats.
# ---------------------------------------------------------------------------
def _conv_stats_kernel(x_ref, w_ref, raw_ref, stats_ref, *, th, wi, icp, ocp, oc):
    """x_ref:  (1,1,th+2,wi+2,icp) bf16  replicate-padded input tile (+halo)
       w_ref:  (4, 4*icp, ocp)     bf16  folded per-phase weights
       raw_ref:(1,1,2,2,th,wi,oc)  bf16  un-normalized conv output (phase-split)
       stats_ref:(1,1,2,ocp)       f32   [tile sum, tile centered sum-of-squares]
    """
    xt = x_ref[0, 0, :, :, :]                                  # (th+2, wi+2, icp)
    inv_n = 1.0 / float(4 * th * wi)

    accs = []
    s1 = jnp.zeros((1, ocp), jnp.float32)
    for ph in range(2):
        for pw in range(2):
            taps = [xt[ph + dr:ph + dr + th, pw + dc:pw + dc + wi, :]
                    for dr in range(2) for dc in range(2)]
            cols = jnp.concatenate(taps, axis=-1).reshape(th * wi, 4 * icp)
            acc = jnp.dot(cols, w_ref[2 * ph + pw],
                          preferred_element_type=jnp.float32)  # (th*wi, ocp)
            raw_ref[0, 0, ph, pw, :, :, :] = (
                acc[:, :oc].reshape(th, wi, oc).astype(raw_ref.dtype))
            s1 = s1 + jnp.sum(acc, axis=0, keepdims=True)
            accs.append(acc)

    mean = s1 * inv_n                                          # per-channel tile mean
    m2 = jnp.zeros((1, ocp), jnp.float32)
    for acc in accs:                                           # centered second pass
        d = acc - mean
        m2 = m2 + jnp.sum(d * d, axis=0, keepdims=True)
    stats_ref[0, 0, :, :] = jnp.concatenate([s1, m2], axis=0)


# ---------------------------------------------------------------------------
# Kernel 2: fused InstanceNorm (pre-collapsed scale/shift) + ReLU per tile.
# ---------------------------------------------------------------------------
def _norm_relu_kernel(raw_ref, scale_ref, shift_ref, o_ref):
    s = scale_ref[0, :, :]                                     # (1, oc) f32
    sh = shift_ref[0, :, :]
    for ph in range(2):
        for pw in range(2):
            y = raw_ref[0, 0, ph, pw, :, :, :].astype(jnp.float32)
            o_ref[0, 0, ph, pw, :, :, :] = jnp.maximum(y * s + sh, 0.0)


# ---------------------------------------------------------------------------
# Wrapper
# ---------------------------------------------------------------------------
@functools.partial(jax.jit, static_argnames=("k", "up"))
def uconv_forward(x_nchw, w, b, gamma, beta, *, k=3, up=2):
    """uconv forward: nearest-up x2, reflect-pad 1, 3x3 conv s=1, InstanceNorm, ReLU.

    x_nchw (N, IC, H, W) f32; w (OC, IC, 3, 3); b/gamma/beta (OC,).
    Returns (N, OC, 2H, 2W) f32.  The conv bias `b` is accepted for API parity
    but unused: InstanceNorm subtracts the per-channel mean so the bias cancels
    exactly (invariant only holds while the norm stays enabled).
    """
    if k != 3 or up != 2:
        raise NotImplementedError("uconv_forward: only k=3, up=2 is implemented")
    del b

    N, IC, H, W = x_nchw.shape
    OC = w.shape[0]
    ICP = _round_up(IC, 32)        # 4*ICP is a multiple of 128 -> dense MXU feed
    OCP = _round_up(OC, 128)
    th, est = _pick_tile_rows(H, W, ICP, OCP)
    T = H // th
    vmem_limit = int(min(48 * 2**20, max(16 * 2**20, 2 * est)))

    # NHWC, 1px replicate halo at ORIGINAL resolution (== reflect pad of the
    # upsampled image for up=2/k=3), zero-pad IC, cast to bf16.
    x = jnp.transpose(x_nchw, (0, 2, 3, 1)).astype(jnp.bfloat16)
    x = jnp.pad(x, ((0, 0), (1, 1), (1, 1), (0, 0)), mode="edge")
    x = jnp.pad(x, ((0, 0), (0, 0), (0, 0), (0, ICP - IC)))
    # Overlapping row tiles (1-row halo each side), built wrapper-side so the
    # Pallas blocks stay plain non-overlapping Blocked specs.
    x_tiles = jnp.stack([x[:, t * th:t * th + th + 2] for t in range(T)], axis=1)

    w_all = _fold_phase_weights(w, ICP, OCP)                   # (4, 4*ICP, OCP)

    conv_stats = functools.partial(_conv_stats_kernel, th=th, wi=W,
                                   icp=ICP, ocp=OCP, oc=OC)
    raw, stats = pl.pallas_call(
        conv_stats,
        out_shape=(jax.ShapeDtypeStruct((N, T, 2, 2, th, W, OC), jnp.bfloat16),
                   jax.ShapeDtypeStruct((N, T, 2, OCP), jnp.float32)),
        grid_spec=pltpu.PrefetchScalarGridSpec(
            num_scalar_prefetch=0,
            grid=(N, T),
            in_specs=[
                pl.BlockSpec((1, 1, th + 2, W + 2, ICP),
                             lambda n, t: (n, t, 0, 0, 0)),
                pl.BlockSpec((4, 4 * ICP, OCP), lambda n, t: (0, 0, 0)),
            ],
            out_specs=[
                pl.BlockSpec((1, 1, 2, 2, th, W, OC),
                             lambda n, t: (n, t, 0, 0, 0, 0, 0)),
                pl.BlockSpec((1, 1, 2, OCP), lambda n, t: (n, t, 0, 0)),
            ],
        ),
        compiler_params=pltpu.CompilerParams(
            dimension_semantics=("parallel", "parallel"),
            vmem_limit_bytes=vmem_limit),
    )(x_tiles, w_all)

    # Combine per-tile stats (Chan's parallel variance) and collapse
    # InstanceNorm(affine) into one per-(sample, channel) scale/shift.
    sums = stats[:, :, 0, :OC]                                 # (N, T, OC)
    m2s = stats[:, :, 1, :OC]
    cnt = 4.0 * th * W
    tot = 4.0 * H * W
    mean_t = sums / cnt
    mu = jnp.sum(sums, axis=1) / tot                           # (N, OC)
    m2 = jnp.sum(m2s + cnt * (mean_t - mu[:, None, :]) ** 2, axis=1)
    var = m2 / tot                                             # biased, as torch
    scale = gamma[None, :].astype(jnp.float32) * lax.rsqrt(var + 1e-5)
    shift = beta[None, :].astype(jnp.float32) - mu * scale
    scale = scale.reshape(N, 1, OC)
    shift = shift.reshape(N, 1, OC)

    y_tiles = pl.pallas_call(
        _norm_relu_kernel,
        out_shape=jax.ShapeDtypeStruct((N, T, 2, 2, th, W, OC), jnp.float32),
        grid_spec=pltpu.PrefetchScalarGridSpec(
            num_scalar_prefetch=0,
            grid=(N, T),
            in_specs=[
                pl.BlockSpec((1, 1, 2, 2, th, W, OC),
                             lambda n, t: (n, t, 0, 0, 0, 0, 0)),
                pl.BlockSpec((1, 1, OC), lambda n, t: (n, 0, 0)),
                pl.BlockSpec((1, 1, OC), lambda n, t: (n, 0, 0)),
            ],
            out_specs=pl.BlockSpec((1, 1, 2, 2, th, W, OC),
                                   lambda n, t: (n, t, 0, 0, 0, 0, 0)),
        ),
        compiler_params=pltpu.CompilerParams(
            dimension_semantics=("parallel", "parallel"),
            vmem_limit_bytes=vmem_limit),
    )(raw, scale, shift)

    # Pixel-shuffle the 4 phases + NCHW for PyTorch API parity (layout-only pass).
    out = jnp.transpose(y_tiles, (0, 6, 1, 4, 2, 5, 3))
    return out.reshape(N, OC, 2 * H, 2 * W)


def _reference(x_nchw, w, b, gamma, beta, *, k=3, up=2):
    """Pure-JAX (fp32) reference for correctness checking."""
    pad = k // 2
    x = jnp.repeat(jnp.repeat(x_nchw, up, axis=2), up, axis=3)
    x = jnp.pad(x, ((0, 0), (0, 0), (pad, pad), (pad, pad)), mode="reflect")
    y = lax.conv_general_dilated(
        x, w, window_strides=(1, 1), padding="VALID",
        dimension_numbers=("NCHW", "OIHW", "NCHW"))
    y = y + b.reshape(1, -1, 1, 1)
    mean = jnp.mean(y, axis=(2, 3), keepdims=True)
    var = jnp.mean((y - mean) ** 2, axis=(2, 3), keepdims=True)
    y = (y - mean) / jnp.sqrt(var + 1e-5)
    y = y * gamma.reshape(1, -1, 1, 1) + beta.reshape(1, -1, 1, 1)
    return jnp.maximum(y, 0.0)


if __name__ == "__main__":
    # Small deterministic example: uconv(ic=4, oc=8, k=3, s=1, up=2)
    N, IC, OC, H, W, K, UP = 2, 4, 8, 16, 16, 3, 2

    key = jax.random.PRNGKey(0)
    kx, kw, kb, kg, kbe = jax.random.split(key, 5)
    x = jax.random.normal(kx, (N, IC, H, W), dtype=jnp.float32)
    w = jax.random.normal(kw, (OC, IC, K, K), dtype=jnp.float32) * 0.1
    b = jax.random.normal(kb, (OC,), dtype=jnp.float32) * 0.1
    gamma = 1.0 + 0.1 * jax.random.normal(kg, (OC,), dtype=jnp.float32)
    beta = 0.1 * jax.random.normal(kbe, (OC,), dtype=jnp.float32)

    out = uconv_forward(x, w, b, gamma, beta, k=K, up=UP)
    out = jax.block_until_ready(out)

    ref = _reference(x, w, b, gamma, beta, k=K, up=UP)
    assert out.shape == (N, OC, UP * H, UP * W), out.shape
    # bf16 MXU inputs + bf16 raw intermediate (fp32 accumulation / stats) => bf16-level tol.
    err = float(jnp.max(jnp.abs(out - ref)))
    assert jnp.allclose(out, ref, atol=3e-2, rtol=3e-2), f"mismatch vs reference, max |err|={err}"

    print("KERNEL_OK")
</pallas_src>

<mosaic_0001>
module attributes {stable_mosaic.version = 11 : i64} {
  func.func @_norm_relu_kernel(%arg0: i32, %arg1: i32, %arg2: memref<1x1x2x2x16x16x8xbf16, #tpu.memory_space<vmem>>, %arg3: memref<1x1x8xf32, #tpu.memory_space<vmem>>, %arg4: memref<1x1x8xf32, #tpu.memory_space<vmem>>, %arg5: memref<1x1x2x2x16x16x8xf32, #tpu.memory_space<vmem>>) attributes {dimension_semantics = [#tpu.dimension_semantics<parallel>, #tpu.dimension_semantics<parallel>], iteration_bounds = array<i64: 2, 1>, scalar_prefetch = 0 : i64, scratch_operands = 0 : i64, tpu.core_type = #tpu.core_type<tc>, window_params = [{transform_indices = @transform_0, window_bounds = array<i64: 1, 1, 2, 2, 16, 16, 8>}, {transform_indices = @transform_1, window_bounds = array<i64: 1, 1, 8>}, {transform_indices = @transform_2, window_bounds = array<i64: 1, 1, 8>}, {transform_indices = @transform_3, window_bounds = array<i64: 1, 1, 2, 2, 16, 16, 8>}]} {
    %c0 = arith.constant 0 : index
    %c0_0 = arith.constant 0 : index
    %c0_1 = arith.constant 0 : index
    %0 = vector.load %arg3[%c0, %c0_0, %c0_1] : memref<1x1x8xf32, #tpu.memory_space<vmem>>, vector<1x1x8xf32>
    %1 = vector.shape_cast %0 : vector<1x1x8xf32> to vector<1x8xf32>
    %c0_2 = arith.constant 0 : index
    %c0_3 = arith.constant 0 : index
    %c0_4 = arith.constant 0 : index
    %2 = vector.load %arg4[%c0_2, %c0_3, %c0_4] : memref<1x1x8xf32, #tpu.memory_space<vmem>>, vector<1x1x8xf32>
    %3 = vector.shape_cast %2 : vector<1x1x8xf32> to vector<1x8xf32>
    %c0_5 = arith.constant 0 : index
    %c0_6 = arith.constant 0 : index
    %c0_7 = arith.constant 0 : index
    %c0_8 = arith.constant 0 : index
    %c0_9 = arith.constant 0 : index
    %c0_10 = arith.constant 0 : index
    %c0_11 = arith.constant 0 : index
    %4 = vector.load %arg2[%c0_5, %c0_6, %c0_7, %c0_8, %c0_9, %c0_10, %c0_11] : memref<1x1x2x2x16x16x8xbf16, #tpu.memory_space<vmem>>, vector<1x1x1x1x16x16x8xbf16>
    %5 = vector.shape_cast %4 : vector<1x1x1x1x16x16x8xbf16> to vector<16x16x8xbf16>
    %6 = arith.extf %5 : vector<16x16x8xbf16> to vector<16x16x8xf32>
    %7 = vector.shape_cast %1 : vector<1x8xf32> to vector<1x1x8xf32>
    %8 = vector.broadcast %7 : vector<1x1x8xf32> to vector<16x16x8xf32>
    %9 = arith.mulf %6, %8 : vector<16x16x8xf32>
    %10 = vector.shape_cast %3 : vector<1x8xf32> to vector<1x1x8xf32>
    %11 = vector.broadcast %10 : vector<1x1x8xf32> to vector<16x16x8xf32>
    %12 = arith.addf %9, %11 : vector<16x16x8xf32>
    %cst = arith.constant 0.000000e+00 : f32
    %13 = vector.broadcast %cst : f32 to vector<16x16x8xf32>
    %14 = arith.maximumf %12, %13 : vector<16x16x8xf32>
    %c0_12 = arith.constant 0 : index
    %c0_13 = arith.constant 0 : index
    %c0_14 = arith.constant 0 : index
    %c0_15 = arith.constant 0 : index
    %c0_16 = arith.constant 0 : index
    %c0_17 = arith.constant 0 : index
    %c0_18 = arith.constant 0 : index
    %15 = vector.load %arg5[%c0_12, %c0_13, %c0_14, %c0_15, %c0_16, %c0_17, %c0_18] : memref<1x1x2x2x16x16x8xf32, #tpu.memory_space<vmem>>, vector<1x1x1x1x16x16x8xf32>
    %16 = vector.shape_cast %15 : vector<1x1x1x1x16x16x8xf32> to vector<16x16x8xf32>
    %17 = vector.shape_cast %14 : vector<16x16x8xf32> to vector<1x1x1x1x16x16x8xf32>
    tpu.vector_store %arg5[%c0_12, %c0_13, %c0_14, %c0_15, %c0_16, %c0_17, %c0_18], %17 {strides = array<i32>} : memref<1x1x2x2x16x16x8xf32, #tpu.memory_space<vmem>>, vector<1x1x1x1x16x16x8xf32>,
    %c0_19 = arith.constant 0 : index
    %c0_20 = arith.constant 0 : index
    %c0_21 = arith.constant 0 : index
    %c1 = arith.constant 1 : index
    %c0_22 = arith.constant 0 : index
    %c0_23 = arith.constant 0 : index
    %c0_24 = arith.constant 0 : index
    %18 = vector.load %arg2[%c0_19, %c0_20, %c0_21, %c1, %c0_22, %c0_23, %c0_24] : memref<1x1x2x2x16x16x8xbf16, #tpu.memory_space<vmem>>, vector<1x1x1x1x16x16x8xbf16>
    %19 = vector.shape_cast %18 : vector<1x1x1x1x16x16x8xbf16> to vector<16x16x8xbf16>
    %20 = arith.extf %19 : vector<16x16x8xbf16> to vector<16x16x8xf32>
    %21 = vector.shape_cast %1 : vector<1x8xf32> to vector<1x1x8xf32>
    %22 = vector.broadcast %21 : vector<1x1x8xf32> to vector<16x16x8xf32>
    %23 = arith.mulf %20, %22 : vector<16x16x8xf32>
    %24 = vector.shape_cast %3 : vector<1x8xf32> to vector<1x1x8xf32>
    %25 = vector.broadcast %24 : vector<1x1x8xf32> to vector<16x16x8xf32>
    %26 = arith.addf %23, %25 : vector<16x16x8xf32>
    %cst_25 = arith.constant 0.000000e+00 : f32
    %27 = vector.broadcast %cst_25 : f32 to vector<16x16x8xf32>
    %28 = arith.maximumf %26, %27 : vector<16x16x8xf32>
    %c0_26 = arith.constant 0 : index
    %c0_27 = arith.constant 0 : index
    %c0_28 = arith.constant 0 : index
    %c1_29 = arith.constant 1 : index
    %c0_30 = arith.constant 0 : index
    %c0_31 = arith.constant 0 : index
    %c0_32 = arith.constant 0 : index
    %29 = vector.load %arg5[%c0_26, %c0_27, %c0_28, %c1_29, %c0_30, %c0_31, %c0_32] : memref<1x1x2x2x16x16x8xf32, #tpu.memory_space<vmem>>, vector<1x1x1x1x16x16x8xf32>
    %30 = vector.shape_cast %29 : vector<1x1x1x1x16x16x8xf32> to vector<16x16x8xf32>
    %31 = vector.shape_cast %28 : vector<16x16x8xf32> to vector<1x1x1x1x16x16x8xf32>
    tpu.vector_store %arg5[%c0_26, %c0_27, %c0_28, %c1_29, %c0_30, %c0_31, %c0_32], %31 {strides = array<i32>} : memref<1x1x2x2x16x16x8xf32, #tpu.memory_space<vmem>>, vector<1x1x1x1x16x16x8xf32>,
    %c0_33 = arith.constant 0 : index
    %c0_34 = arith.constant 0 : index
    %c1_35 = arith.constant 1 : index
    %c0_36 = arith.constant 0 : index
    %c0_37 = arith.constant 0 : index
    %c0_38 = arith.constant 0 : index
    %c0_39 = arith.constant 0 : index
    %32 = vector.load %arg2[%c0_33, %c0_34, %c1_35, %c0_36, %c0_37, %c0_38, %c0_39] : memref<1x1x2x2x16x16x8xbf16, #tpu.memory_space<vmem>>, vector<1x1x1x1x16x16x8xbf16>
    %33 = vector.shape_cast %32 : vector<1x1x1x1x16x16x8xbf16> to vector<16x16x8xbf16>
    %34 = arith.extf %33 : vector<16x16x8xbf16> to vector<16x16x8xf32>
    %35 = vector.shape_cast %1 : vector<1x8xf32> to vector<1x1x8xf32>
    %36 = vector.broadcast %35 : vector<1x1x8xf32> to vector<16x16x8xf32>
    %37 = arith.mulf %34, %36 : vector<16x16x8xf32>
    %38 = vector.shape_cast %3 : vector<1x8xf32> to vector<1x1x8xf32>
    %39 = vector.broadcast %38 : vector<1x1x8xf32> to vector<16x16x8xf32>
    %40 = arith.addf %37, %39 : vector<16x16x8xf32>
    %cst_40 = arith.constant 0.000000e+00 : f32
    %41 = vector.broadcast %cst_40 : f32 to vector<16x16x8xf32>
    %42 = arith.maximumf %40, %41 : vector<16x16x8xf32>
    %c0_41 = arith.constant 0 : index
    %c0_42 = arith.constant 0 : index
    %c1_43 = arith.constant 1 : index
    %c0_44 = arith.constant 0 : index
    %c0_45 = arith.constant 0 : index
    %c0_46 = arith.constant 0 : index
    %c0_47 = arith.constant 0 : index
    %43 = vector.load %arg5[%c0_41, %c0_42, %c1_43, %c0_44, %c0_45, %c0_46, %c0_47] : memref<1x1x2x2x16x16x8xf32, #tpu.memory_space<vmem>>, vector<1x1x1x1x16x16x8xf32>
    %44 = vector.shape_cast %43 : vector<1x1x1x1x16x16x8xf32> to vector<16x16x8xf32>
    %45 = vector.shape_cast %42 : vector<16x16x8xf32> to vector<1x1x1x1x16x16x8xf32>
    tpu.vector_store %arg5[%c0_41, %c0_42, %c1_43, %c0_44, %c0_45, %c0_46, %c0_47], %45 {strides = array<i32>} : memref<1x1x2x2x16x16x8xf32, #tpu.memory_space<vmem>>, vector<1x1x1x1x16x16x8xf32>,
    %c0_48 = arith.constant 0 : index
    %c0_49 = arith.constant 0 : index
    %c1_50 = arith.constant 1 : index
    %c1_51 = arith.constant 1 : index
    %c0_52 = arith.constant 0 : index
    %c0_53 = arith.constant 0 : index
    %c0_54 = arith.constant 0 : index
    %46 = vector.load %arg2[%c0_48, %c0_49, %c1_50, %c1_51, %c0_52, %c0_53, %c0_54] : memref<1x1x2x2x16x16x8xbf16, #tpu.memory_space<vmem>>, vector<1x1x1x1x16x16x8xbf16>
    %47 = vector.shape_cast %46 : vector<1x1x1x1x16x16x8xbf16> to vector<16x16x8xbf16>
    %48 = arith.extf %47 : vector<16x16x8xbf16> to vector<16x16x8xf32>
    %49 = vector.shape_cast %1 : vector<1x8xf32> to vector<1x1x8xf32>
    %50 = vector.broadcast %49 : vector<1x1x8xf32> to vector<16x16x8xf32>
    %51 = arith.mulf %48, %50 : vector<16x16x8xf32>
    %52 = vector.shape_cast %3 : vector<1x8xf32> to vector<1x1x8xf32>
    %53 = vector.broadcast %52 : vector<1x1x8xf32> to vector<16x16x8xf32>
    %54 = arith.addf %51, %53 : vector<16x16x8xf32>
    %cst_55 = arith.constant 0.000000e+00 : f32
    %55 = vector.broadcast %cst_55 : f32 to vector<16x16x8xf32>
    %56 = arith.maximumf %54, %55 : vector<16x16x8xf32>
    %c0_56 = arith.constant 0 : index
    %c0_57 = arith.constant 0 : index
    %c1_58 = arith.constant 1 : index
    %c1_59 = arith.constant 1 : index
    %c0_60 = arith.constant 0 : index
    %c0_61 = arith.constant 0 : index
    %c0_62 = arith.constant 0 : index
    %57 = vector.load %arg5[%c0_56, %c0_57, %c1_58, %c1_59, %c0_60, %c0_61, %c0_62] : memref<1x1x2x2x16x16x8xf32, #tpu.memory_space<vmem>>, vector<1x1x1x1x16x16x8xf32>
    %58 = vector.shape_cast %57 : vector<1x1x1x1x16x16x8xf32> to vector<16x16x8xf32>
    %59 = vector.shape_cast %56 : vector<16x16x8xf32> to vector<1x1x1x1x16x16x8xf32>
    tpu.vector_store %arg5[%c0_56, %c0_57, %c1_58, %c1_59, %c0_60, %c0_61, %c0_62], %59 {strides = array<i32>} : memref<1x1x2x2x16x16x8xf32, #tpu.memory_space<vmem>>, vector<1x1x1x1x16x16x8xf32>,
    return
  }
  func.func @transform_0(%arg0: i32, %arg1: i32) -> (i32, i32, i32, i32, i32, i32, i32) {
    %c0_i32 = arith.constant 0 : i32
    %c0_i32_0 = arith.constant 0 : i32
    %c0_i32_1 = arith.constant 0 : i32
    %c0_i32_2 = arith.constant 0 : i32
    %c0_i32_3 = arith.constant 0 : i32
    %c0_i32_4 = arith.constant 0 : i32
    return %arg0, %arg1, %c0_i32, %c0_i32_0, %c0_i32_1, %c0_i32_2, %c0_i32_3 : i32, i32, i32, i32, i32, i32, i32
  }
  func.func @transform_1(%arg0: i32, %arg1: i32) -> (i32, i32, i32) {
    %c0_i32 = arith.constant 0 : i32
    %c0_i32_0 = arith.constant 0 : i32
    %c0_i32_1 = arith.constant 0 : i32
    return %arg0, %c0_i32, %c0_i32_0 : i32, i32, i32
  }
  func.func @transform_2(%arg0: i32, %arg1: i32) -> (i32, i32, i32) {
    %c0_i32 = arith.constant 0 : i32
    %c0_i32_0 = arith.constant 0 : i32
    %c0_i32_1 = arith.constant 0 : i32
    return %arg0, %c0_i32, %c0_i32_0 : i32, i32, i32
  }
  func.func @transform_3(%arg0: i32, %arg1: i32) -> (i32, i32, i32, i32, i32, i32, i32) {
    %c0_i32 = arith.constant 0 : i32
    %c0_i32_0 = arith.constant 0 : i32
    %c0_i32_1 = arith.constant 0 : i32
    %c0_i32_2 = arith.constant 0 : i32
    %c0_i32_3 = arith.constant 0 : i32
    %c0_i32_4 = arith.constant 0 : i32
    return %arg0, %arg1, %c0_i32, %c0_i32_0, %c0_i32_1, %c0_i32_2, %c0_i32_3 : i32, i32, i32, i32, i32, i32, i32
  }
}

module attributes {stable_mosaic.version = 11 : i64} {
  func.func @_conv_stats_kernel(%arg0: i32, %arg1: i32, %arg2: memref<1x1x18x18x32xbf16, #tpu.memory_space<vmem>>, %arg3: memref<4x128x128xbf16, #tpu.memory_space<vmem>>, %arg4: memref<1x1x2x2x16x16x8xbf16, #tpu.memory_space<vmem>>, %arg5: memref<1x1x2x128xf32, #tpu.memory_space<vmem>>) attributes {dimension_semantics = [#tpu.dimension_semantics<parallel>, #tpu.dimension_semantics<parallel>], iteration_bounds = array<i64: 2, 1>, scalar_prefetch = 0 : i64, scratch_operands = 0 : i64, tpu.core_type = #tpu.core_type<tc>, window_params = [{transform_indices = @transform_0, window_bounds = array<i64: 1, 1, 18, 18, 32>}, {pipeline_mode = #tpu.pipeline_mode<synchronous>, transform_indices = @transform_1, window_bounds = array<i64: 4, 128, 128>}, {transform_indices = @transform_2, window_bounds = array<i64: 1, 1, 2, 2, 16, 16, 8>}, {transform_indices = @transform_3, window_bounds = array<i64: 1, 1, 2, 128>}]} {
    %c0 = arith.constant 0 : index
    %c0_0 = arith.constant 0 : index
    %c0_1 = arith.constant 0 : index
    %c0_2 = arith.constant 0 : index
    %c0_3 = arith.constant 0 : index
    %0 = vector.load %arg2[%c0, %c0_0, %c0_1, %c0_2, %c0_3] : memref<1x1x18x18x32xbf16, #tpu.memory_space<vmem>>, vector<1x1x18x18x32xbf16>
    %1 = vector.shape_cast %0 : vector<1x1x18x18x32xbf16> to vector<18x18x32xbf16>
    %cst = arith.constant 0.000000e+00 : f32
    %2 = vector.broadcast %cst : f32 to vector<1x128xf32>
    %3 = vector.extract_strided_slice %1 {offsets = [0, 0, 0], sizes = [16, 16, 32], strides = [1, 1, 1]} : vector<18x18x32xbf16> to vector<16x16x32xbf16>
    %4 = vector.extract_strided_slice %1 {offsets = [0, 1, 0], sizes = [16, 16, 32], strides = [1, 1, 1]} : vector<18x18x32xbf16> to vector<16x16x32xbf16>
    %5 = vector.extract_strided_slice %1 {offsets = [1, 0, 0], sizes = [16, 16, 32], strides = [1, 1, 1]} : vector<18x18x32xbf16> to vector<16x16x32xbf16>
    %6 = vector.extract_strided_slice %1 {offsets = [1, 1, 0], sizes = [16, 16, 32], strides = [1, 1, 1]} : vector<18x18x32xbf16> to vector<16x16x32xbf16>
    %7 = tpu.concatenate %3, %4, %5, %6 in 2 : vector<16x16x32xbf16>, vector<16x16x32xbf16>, vector<16x16x32xbf16>, vector<16x16x32xbf16> -> vector<16x16x128xbf16>
    %8 = vector.shape_cast %7 : vector<16x16x128xbf16> to vector<256x128xbf16>
    %c0_4 = arith.constant 0 : index
    %c0_5 = arith.constant 0 : index
    %c0_6 = arith.constant 0 : index
    %9 = vector.load %arg3[%c0_4, %c0_5, %c0_6] : memref<4x128x128xbf16, #tpu.memory_space<vmem>>, vector<1x128x128xbf16>
    %10 = vector.shape_cast %9 : vector<1x128x128xbf16> to vector<128x128xbf16>
    %cst_7 = arith.constant dense<0.000000e+00> : vector<256x128xf32>
    %11 = tpu.matmul %8, %10, %cst_7 {dimension_numbers = #tpu.dot_dimension_numbers<[1], [0], [0], [1], [0, 0, 1, 1], [], []>} : vector<256x128xbf16>, vector<128x128xbf16>, vector<256x128xf32> -> vector<256x128xf32>
    %12 = vector.extract_strided_slice %11 {offsets = [0, 0], sizes = [256, 8], strides = [1, 1]} : vector<256x128xf32> to vector<256x8xf32>
    %13 = vector.shape_cast %12 : vector<256x8xf32> to vector<16x16x8xf32>
    %14 = arith.truncf %13 : vector<16x16x8xf32> to vector<16x16x8xbf16>
    %c0_8 = arith.constant 0 : index
    %c0_9 = arith.constant 0 : index
    %c0_10 = arith.constant 0 : index
    %c0_11 = arith.constant 0 : index
    %c0_12 = arith.constant 0 : index
    %c0_13 = arith.constant 0 : index
    %c0_14 = arith.constant 0 : index
    %15 = vector.load %arg4[%c0_8, %c0_9, %c0_10, %c0_11, %c0_12, %c0_13, %c0_14] : memref<1x1x2x2x16x16x8xbf16, #tpu.memory_space<vmem>>, vector<1x1x1x1x16x16x8xbf16>
    %16 = vector.shape_cast %15 : vector<1x1x1x1x16x16x8xbf16> to vector<16x16x8xbf16>
    %17 = vector.shape_cast %14 : vector<16x16x8xbf16> to vector<1x1x1x1x16x16x8xbf16>
    tpu.vector_store %arg4[%c0_8, %c0_9, %c0_10, %c0_11, %c0_12, %c0_13, %c0_14], %17 {strides = array<i32>} : memref<1x1x2x2x16x16x8xbf16, #tpu.memory_space<vmem>>, vector<1x1x1x1x16x16x8xbf16>,
    %cst_15 = arith.constant dense<0.000000e+00> : vector<128xf32>
    %18 = vector.multi_reduction <add>, %11, %cst_15 [0] : vector<256x128xf32> to vector<128xf32>
    %19 = vector.shape_cast %18 : vector<128xf32> to vector<1x128xf32>
    %20 = arith.addf %2, %19 : vector<1x128xf32>
    %21 = vector.extract_strided_slice %1 {offsets = [0, 1, 0], sizes = [16, 16, 32], strides = [1, 1, 1]} : vector<18x18x32xbf16> to vector<16x16x32xbf16>
    %22 = vector.extract_strided_slice %1 {offsets = [0, 2, 0], sizes = [16, 16, 32], strides = [1, 1, 1]} : vector<18x18x32xbf16> to vector<16x16x32xbf16>
    %23 = vector.extract_strided_slice %1 {offsets = [1, 1, 0], sizes = [16, 16, 32], strides = [1, 1, 1]} : vector<18x18x32xbf16> to vector<16x16x32xbf16>
    %24 = vector.extract_strided_slice %1 {offsets = [1, 2, 0], sizes = [16, 16, 32], strides = [1, 1, 1]} : vector<18x18x32xbf16> to vector<16x16x32xbf16>
    %25 = tpu.concatenate %21, %22, %23, %24 in 2 : vector<16x16x32xbf16>, vector<16x16x32xbf16>, vector<16x16x32xbf16>, vector<16x16x32xbf16> -> vector<16x16x128xbf16>
    %26 = vector.shape_cast %25 : vector<16x16x128xbf16> to vector<256x128xbf16>
    %c1 = arith.constant 1 : index
    %c0_16 = arith.constant 0 : index
    %c0_17 = arith.constant 0 : index
    %27 = vector.load %arg3[%c1, %c0_16, %c0_17] : memref<4x128x128xbf16, #tpu.memory_space<vmem>>, vector<1x128x128xbf16>
    %28 = vector.shape_cast %27 : vector<1x128x128xbf16> to vector<128x128xbf16>
    %cst_18 = arith.constant dense<0.000000e+00> : vector<256x128xf32>
    %29 = tpu.matmul %26, %28, %cst_18 {dimension_numbers = #tpu.dot_dimension_numbers<[1], [0], [0], [1], [0, 0, 1, 1], [], []>} : vector<256x128xbf16>, vector<128x128xbf16>, vector<256x128xf32> -> vector<256x128xf32>
    %30 = vector.extract_strided_slice %29 {offsets = [0, 0], sizes = [256, 8], strides = [1, 1]} : vector<256x128xf32> to vector<256x8xf32>
    %31 = vector.shape_cast %30 : vector<256x8xf32> to vector<16x16x8xf32>
    %32 = arith.truncf %31 : vector<16x16x8xf32> to vector<16x16x8xbf16>
    %c0_19 = arith.constant 0 : index
    %c0_20 = arith.constant 0 : index
    %c0_21 = arith.constant 0 : index
    %c1_22 = arith.constant 1 : index
    %c0_23 = arith.constant 0 : index
    %c0_24 = arith.constant 0 : index
    %c0_25 = arith.constant 0 : index
    %33 = vector.load %arg4[%c0_19, %c0_20, %c0_21, %c1_22, %c0_23, %c0_24, %c0_25] : memref<1x1x2x2x16x16x8xbf16, #tpu.memory_space<vmem>>, vector<1x1x1x1x16x16x8xbf16>
    %34 = vector.shape_cast %33 : vector<1x1x1x1x16x16x8xbf16> to vector<16x16x8xbf16>
    %35 = vector.shape_cast %32 : vector<16x16x8xbf16> to vector<1x1x1x1x16x16x8xbf16>
    tpu.vector_store %arg4[%c0_19, %c0_20, %c0_21, %c1_22, %c0_23, %c0_24, %c0_25], %35 {strides = array<i32>} : memref<1x1x2x2x16x16x8xbf16, #tpu.memory_space<vmem>>, vector<1x1x1x1x16x16x8xbf16>,
    %cst_26 = arith.constant dense<0.000000e+00> : vector<128xf32>
    %36 = vector.multi_reduction <add>, %29, %cst_26 [0] : vector<256x128xf32> to vector<128xf32>
    %37 = vector.shape_cast %36 : vector<128xf32> to vector<1x128xf32>
    %38 = arith.addf %20, %37 : vector<1x128xf32>
    %39 = vector.extract_strided_slice %1 {offsets = [1, 0, 0], sizes = [16, 16, 32], strides = [1, 1, 1]} : vector<18x18x32xbf16> to vector<16x16x32xbf16>
    %40 = vector.extract_strided_slice %1 {offsets = [1, 1, 0], sizes = [16, 16, 32], strides = [1, 1, 1]} : vector<18x18x32xbf16> to vector<16x16x32xbf16>
    %41 = vector.extract_strided_slice %1 {offsets = [2, 0, 0], sizes = [16, 16, 32], strides = [1, 1, 1]} : vector<18x18x32xbf16> to vector<16x16x32xbf16>
    %42 = vector.extract_strided_slice %1 {offsets = [2, 1, 0], sizes = [16, 16, 32], strides = [1, 1, 1]} : vector<18x18x32xbf16> to vector<16x16x32xbf16>
    %43 = tpu.concatenate %39, %40, %41, %42 in 2 : vector<16x16x32xbf16>, vector<16x16x32xbf16>, vector<16x16x32xbf16>, vector<16x16x32xbf16> -> vector<16x16x128xbf16>
    %44 = vector.shape_cast %43 : vector<16x16x128xbf16> to vector<256x128xbf16>
    %c2 = arith.constant 2 : index
    %c0_27 = arith.constant 0 : index
    %c0_28 = arith.constant 0 : index
    %45 = vector.load %arg3[%c2, %c0_27, %c0_28] : memref<4x128x128xbf16, #tpu.memory_space<vmem>>, vector<1x128x128xbf16>
    %46 = vector.shape_cast %45 : vector<1x128x128xbf16> to vector<128x128xbf16>
    %cst_29 = arith.constant dense<0.000000e+00> : vector<256x128xf32>
    %47 = tpu.matmul %44, %46, %cst_29 {dimension_numbers = #tpu.dot_dimension_numbers<[1], [0], [0], [1], [0, 0, 1, 1], [], []>} : vector<256x128xbf16>, vector<128x128xbf16>, vector<256x128xf32> -> vector<256x128xf32>
    %48 = vector.extract_strided_slice %47 {offsets = [0, 0], sizes = [256, 8], strides = [1, 1]} : vector<256x128xf32> to vector<256x8xf32>
    %49 = vector.shape_cast %48 : vector<256x8xf32> to vector<16x16x8xf32>
    %50 = arith.truncf %49 : vector<16x16x8xf32> to vector<16x16x8xbf16>
    %c0_30 = arith.constant 0 : index
    %c0_31 = arith.constant 0 : index
    %c1_32 = arith.constant 1 : index
    %c0_33 = arith.constant 0 : index
    %c0_34 = arith.constant 0 : index
    %c0_35 = arith.constant 0 : index
    %c0_36 = arith.constant 0 : index
    %51 = vector.load %arg4[%c0_30, %c0_31, %c1_32, %c0_33, %c0_34, %c0_35, %c0_36] : memref<1x1x2x2x16x16x8xbf16, #tpu.memory_space<vmem>>, vector<1x1x1x1x16x16x8xbf16>
    %52 = vector.shape_cast %51 : vector<1x1x1x1x16x16x8xbf16> to vector<16x16x8xbf16>
    %53 = vector.shape_cast %50 : vector<16x16x8xbf16> to vector<1x1x1x1x16x16x8xbf16>
    tpu.vector_store %arg4[%c0_30, %c0_31, %c1_32, %c0_33, %c0_34, %c0_35, %c0_36], %53 {strides = array<i32>} : memref<1x1x2x2x16x16x8xbf16, #tpu.memory_space<vmem>>, vector<1x1x1x1x16x16x8xbf16>,
    %cst_37 = arith.constant dense<0.000000e+00> : vector<128xf32>
    %54 = vector.multi_reduction <add>, %47, %cst_37 [0] : vector<256x128xf32> to vector<128xf32>
    %55 = vector.shape_cast %54 : vector<128xf32> to vector<1x128xf32>
    %56 = arith.addf %38, %55 : vector<1x128xf32>
    %57 = vector.extract_strided_slice %1 {offsets = [1, 1, 0], sizes = [16, 16, 32], strides = [1, 1, 1]} : vector<18x18x32xbf16> to vector<16x16x32xbf16>
    %58 = vector.extract_strided_slice %1 {offsets = [1, 2, 0], sizes = [16, 16, 32], strides = [1, 1, 1]} : vector<18x18x32xbf16> to vector<16x16x32xbf16>
    %59 = vector.extract_strided_slice %1 {offsets = [2, 1, 0], sizes = [16, 16, 32], strides = [1, 1, 1]} : vector<18x18x32xbf16> to vector<16x16x32xbf16>
    %60 = vector.extract_strided_slice %1 {offsets = [2, 2, 0], sizes = [16, 16, 32], strides = [1, 1, 1]} : vector<18x18x32xbf16> to vector<16x16x32xbf16>
    %61 = tpu.concatenate %57, %58, %59, %60 in 2 : vector<16x16x32xbf16>, vector<16x16x32xbf16>, vector<16x16x32xbf16>, vector<16x16x32xbf16> -> vector<16x16x128xbf16>
    %62 = vector.shape_cast %61 : vector<16x16x128xbf16> to vector<256x128xbf16>
    %c3 = arith.constant 3 : index
    %c0_38 = arith.constant 0 : index
    %c0_39 = arith.constant 0 : index
    %63 = vector.load %arg3[%c3, %c0_38, %c0_39] : memref<4x128x128xbf16, #tpu.memory_space<vmem>>, vector<1x128x128xbf16>
    %64 = vector.shape_cast %63 : vector<1x128x128xbf16> to vector<128x128xbf16>
    %cst_40 = arith.constant dense<0.000000e+00> : vector<256x128xf32>
    %65 = tpu.matmul %62, %64, %cst_40 {dimension_numbers = #tpu.dot_dimension_numbers<[1], [0], [0], [1], [0, 0, 1, 1], [], []>} : vector<256x128xbf16>, vector<128x128xbf16>, vector<256x128xf32> -> vector<256x128xf32>
    %66 = vector.extract_strided_slice %65 {offsets = [0, 0], sizes = [256, 8], strides = [1, 1]} : vector<256x128xf32> to vector<256x8xf32>
    %67 = vector.shape_cast %66 : vector<256x8xf32> to vector<16x16x8xf32>
    %68 = arith.truncf %67 : vector<16x16x8xf32> to vector<16x16x8xbf16>
    %c0_41 = arith.constant 0 : index
    %c0_42 = arith.constant 0 : index
    %c1_43 = arith.constant 1 : index
    %c1_44 = arith.constant 1 : index
    %c0_45 = arith.constant 0 : index
    %c0_46 = arith.constant 0 : index
    %c0_47 = arith.constant 0 : index
    %69 = vector.load %arg4[%c0_41, %c0_42, %c1_43, %c1_44, %c0_45, %c0_46, %c0_47] : memref<1x1x2x2x16x16x8xbf16, #tpu.memory_space<vmem>>, vector<1x1x1x1x16x16x8xbf16>
    %70 = vector.shape_cast %69 : vector<1x1x1x1x16x16x8xbf16> to vector<16x16x8xbf16>
    %71 = vector.shape_cast %68 : vector<16x16x8xbf16> to vector<1x1x1x1x16x16x8xbf16>
    tpu.vector_store %arg4[%c0_41, %c0_42, %c1_43, %c1_44, %c0_45, %c0_46, %c0_47], %71 {strides = array<i32>} : memref<1x1x2x2x16x16x8xbf16, #tpu.memory_space<vmem>>, vector<1x1x1x1x16x16x8xbf16>,
    %cst_48 = arith.constant dense<0.000000e+00> : vector<128xf32>
    %72 = vector.multi_reduction <add>, %65, %cst_48 [0] : vector<256x128xf32> to vector<128xf32>
    %73 = vector.shape_cast %72 : vector<128xf32> to vector<1x128xf32>
    %74 = arith.addf %56, %73 : vector<1x128xf32>
    %cst_49 = arith.constant 9.765625E-4 : f32
    %75 = vector.broadcast %cst_49 : f32 to vector<1x128xf32>
    %76 = arith.mulf %74, %75 : vector<1x128xf32>
    %cst_50 = arith.constant 0.000000e+00 : f32
    %77 = vector.broadcast %cst_50 : f32 to vector<1x128xf32>
    %78 = vector.broadcast %76 : vector<1x128xf32> to vector<256x128xf32>
    %79 = arith.subf %11, %78 : vector<256x128xf32>
    %80 = arith.mulf %79, %79 : vector<256x128xf32>
    %cst_51 = arith.constant dense<0.000000e+00> : vector<128xf32>
    %81 = vector.multi_reduction <add>, %80, %cst_51 [0] : vector<256x128xf32> to vector<128xf32>
    %82 = vector.shape_cast %81 : vector<128xf32> to vector<1x128xf32>
    %83 = arith.addf %77, %82 : vector<1x128xf32>
    %84 = vector.broadcast %76 : vector<1x128xf32> to vector<256x128xf32>
    %85 = arith.subf %29, %84 : vector<256x128xf32>
    %86 = arith.mulf %85, %85 : vector<256x128xf32>
    %cst_52 = arith.constant dense<0.000000e+00> : vector<128xf32>
    %87 = vector.multi_reduction <add>, %86, %cst_52 [0] : vector<256x128xf32> to vector<128xf32>
    %88 = vector.shape_cast %87 : vector<128xf32> to vector<1x128xf32>
    %89 = arith.addf %83, %88 : vector<1x128xf32>
    %90 = vector.broadcast %76 : vector<1x128xf32> to vector<256x128xf32>
    %91 = arith.subf %47, %90 : vector<256x128xf32>
    %92 = arith.mulf %91, %91 : vector<256x128xf32>
    %cst_53 = arith.constant dense<0.000000e+00> : vector<128xf32>
    %93 = vector.multi_reduction <add>, %92, %cst_53 [0] : vector<256x128xf32> to vector<128xf32>
    %94 = vector.shape_cast %93 : vector<128xf32> to vector<1x128xf32>
    %95 = arith.addf %89, %94 : vector<1x128xf32>
    %96 = vector.broadcast %76 : vector<1x128xf32> to vector<256x128xf32>
    %97 = arith.subf %65, %96 : vector<256x128xf32>
    %98 = arith.mulf %97, %97 : vector<256x128xf32>
    %cst_54 = arith.constant dense<0.000000e+00> : vector<128xf32>
    %99 = vector.multi_reduction <add>, %98, %cst_54 [0] : vector<256x128xf32> to vector<128xf32>
    %100 = vector.shape_cast %99 : vector<128xf32> to vector<1x128xf32>
    %101 = arith.addf %95, %100 : vector<1x128xf32>
    %102 = tpu.concatenate %74, %101 in 0 : vector<1x128xf32>, vector<1x128xf32> -> vector<2x128xf32>
    %c0_55 = arith.constant 0 : index
    %c0_56 = arith.constant 0 : index
    %c0_57 = arith.constant 0 : index
    %c0_58 = arith.constant 0 : index
    %103 = vector.load %arg5[%c0_55, %c0_56, %c0_57, %c0_58] : memref<1x1x2x128xf32, #tpu.memory_space<vmem>>, vector<1x1x2x128xf32>
    %104 = vector.shape_cast %103 : vector<1x1x2x128xf32> to vector<2x128xf32>
    %105 = vector.shape_cast %102 : vector<2x128xf32> to vector<1x1x2x128xf32>
    tpu.vector_store %arg5[%c0_55, %c0_56, %c0_57, %c0_58], %105 {strides = array<i32>} : memref<1x1x2x128xf32, #tpu.memory_space<vmem>>, vector<1x1x2x128xf32>,
    return
  }
  func.func @transform_0(%arg0: i32, %arg1: i32) -> (i32, i32, i32, i32, i32) {
    %c0_i32 = arith.constant 0 : i32
    %c0_i32_0 = arith.constant 0 : i32
    %c0_i32_1 = arith.constant 0 : i32
    %c0_i32_2 = arith.constant 0 : i32
    return %arg0, %arg1, %c0_i32, %c0_i32_0, %c0_i32_1 : i32, i32, i32, i32, i32
  }
  func.func @transform_1(%arg0: i32, %arg1: i32) -> (i32, i32, i32) {
    %c0_i32 = arith.constant 0 : i32
    %c0_i32_0 = arith.constant 0 : i32
    %c0_i32_1 = arith.constant 0 : i32
    %c0_i32_2 = arith.constant 0 : i32
    return %c0_i32, %c0_i32_0, %c0_i32_1 : i32, i32, i32
  }
  func.func @transform_2(%arg0: i32, %arg1: i32) -> (i32, i32, i32, i32, i32, i32, i32) {
    %c0_i32 = arith.constant 0 : i32
    %c0_i32_0 = arith.constant 0 : i32
    %c0_i32_1 = arith.constant 0 : i32
    %c0_i32_2 = arith.constant 0 : i32
    %c0_i32_3 = arith.constant 0 : i32
    %c0_i32_4 = arith.constant 0 : i32
    return %arg0, %arg1, %c0_i32, %c0_i32_0, %c0_i32_1, %c0_i32_2, %c0_i32_3 : i32, i32, i32, i32, i32, i32, i32
  }
  func.func @transform_3(%arg0: i32, %arg1: i32) -> (i32, i32, i32, i32) {
    %c0_i32 = arith.constant 0 : i32
    %c0_i32_0 = arith.constant 0 : i32
    %c0_i32_1 = arith.constant 0 : i32
    return %arg0, %arg1, %c0_i32, %c0_i32_0 : i32, i32, i32, i32
  }
}

</mosaic_0001>

<llo_original>
// kernel: uconv_forward.3
$region0: #{uconv_forward.3}
  #allocation0 [shape = 'u32[]', space=smem, size = 0x4, offset = 0x4, fixed_abs, tag = 'smem constant byte address 0x4 - core index']
  #allocation1 [shape = 'u32[144,128]{1,0:T(1,128)}', space=vmem, size = 0x12000, scoped, tag = 'internal scratch']
  %s0 = inlined_call_operand.vmem [shape: bf16[2,1,2,2,16,16,8], index: 0, kind: input, shape index: {}]
  %s1 = inlined_call_operand.vmem [shape: f32[2,1,8], index: 1, kind: input, shape index: {}]
  %s2 = inlined_call_operand.vmem [shape: f32[2,1,8], index: 2, kind: input, shape index: {}]
  %s3 = inlined_call_operand.vmem [shape: f32[2,1,2,2,16,16,8], index: 3, kind: output, shape index: {}]
  %s4 = sld [smem:[#allocation0]]
  $region45: #{uconv_forward.3} parent=0
    _
  %s6 = ssub.s32 1, %s4
  %s7 = scalar_select 0, %s6, %s4
  loop: start=0, step=1, limit=4
  $region2: #{uconv_forward.3} parent=0 // loop_pre_header
    _
  $region3: #{uconv_forward.3} parent=0 // loop_header
    %s9 = sphi 0, %s13
    %p10 = scmp.ge.s32.totalorder %s9, 4
    %s16 = sphi 0, %s28
    %s17 = sphi 0, %s24
    %s18 = sphi 0, %s16
    %s19 = sphi 0, %s17
    %s20 = sphi 0, %s18
    %s21 = sphi 0, %s19
    %s33 = sphi 0, %s35
    %s36 = sphi 0, %s33
    %s37 = sphi 0, %s36
    %s53 = sphi 0, %s37
    %s59 = sphi 0, %s61
    %s62 = sphi 0, %s59
    %s63 = sphi 0, %s62
    %s79 = sphi 0, %s63
    %s85 = sphi 0, %s87
    %s88 = sphi 0, %s85
    %s89 = sphi 0, %s88
    %s105 = sphi 0, %s89
    %s113 = sphi 0, %s115
    %s116 = sphi 0, %s113
    %s117 = sphi 0, %s116
    %s133 = sphi 0, %s117
  $region4: #{uconv_forward.3} parent=0 // loop_header_branch
    %12 = sbr.rel (%p10) target = $region8
  $region5: #{uconv_forward.3} parent=0 // loop_body
    %s14 = ssub.s32 %s9, 1
    %s15 = ssub.s32 %s9, 2
    %s22 = sadd.s32 1, %s17
    %p23 = scmp.ge.s32.totalorder %s22, 1
    %s24 = scalar_select %p23, 0, %s22
    %s25 = sadd.s32 1, %s16
    %s26 = scalar_select %p23, %s25, %s16
    %p27 = scmp.ge.s32.totalorder %s26, 2
    %s28 = scalar_select %p27, 0, %s26
    %s29 = ssub.s32 %s16, %s28
    %s30 = ssub.s32 %s17, %s24
    %s31 = sor.u32 %s29, %s30
    %p32 = scmp.eq.s32.totalorder %s31, 0
    %s34 = sadd.s32 %s33, 1
    %s35 = scalar_select %p32, %s33, %s34
    %p38 = pneg %p32
    %p39 = scmp.eq.s32.totalorder %s9, 1
    %p40 = por %p38, %p39
    %p41 = scmp.ne.s32.totalorder %s33, %s36
    %p42 = scmp.eq.s32.totalorder %s9, 0
    %p43 = por %p41, %p42
    %p44 = scmp.ne.s32.totalorder %s33, %s36
    %p45 = scmp.eq.s32.totalorder %s14, 1
    %p46 = por %p44, %p45
    %p47 = scmp.ne.s32.totalorder %s36, %s37
    %p48 = scmp.eq.s32.totalorder %s14, 0
    %p49 = por %p47, %p48
    %p50 = scmp.ne.s32.totalorder %s36, %s37
    %p51 = scmp.eq.s32.totalorder %s15, 1
    %p52 = por %p50, %p51
    %p54 = scmp.ne.s32.totalorder %s37, %s53
    %p55 = scmp.eq.s32.totalorder %s15, 0
    %p56 = por %p54, %p55
    %s57 = ssub.s32 %s16, %s28
    %p58 = scmp.eq.s32.totalorder %s57, 0
    %s60 = sadd.s32 %s59, 1
    %s61 = scalar_select %p58, %s59, %s60
    %p64 = pneg %p58
    %p65 = scmp.eq.s32.totalorder %s9, 1
    %p66 = por %p64, %p65
    %p67 = scmp.ne.s32.totalorder %s59, %s62
    %p68 = scmp.eq.s32.totalorder %s9, 0
    %p69 = por %p67, %p68
    %p70 = scmp.ne.s32.totalorder %s59, %s62
    %p71 = scmp.eq.s32.totalorder %s14, 1
    %p72 = por %p70, %p71
    %p73 = scmp.ne.s32.totalorder %s62, %s63
    %p74 = scmp.eq.s32.totalorder %s14, 0
    %p75 = por %p73, %p74
    %p76 = scmp.ne.s32.totalorder %s62, %s63
    %p77 = scmp.eq.s32.totalorder %s15, 1
    %p78 = por %p76, %p77
    %p80 = scmp.ne.s32.totalorder %s63, %s79
    %p81 = scmp.eq.s32.totalorder %s15, 0
    %p82 = por %p80, %p81
    %s83 = ssub.s32 %s16, %s28
    %p84 = scmp.eq.s32.totalorder %s83, 0
    %s86 = sadd.s32 %s85, 1
    %s87 = scalar_select %p84, %s85, %s86
    %p90 = pneg %p84
    %p91 = scmp.eq.s32.totalorder %s9, 1
    %p92 = por %p90, %p91
    %p93 = scmp.ne.s32.totalorder %s85, %s88
    %p94 = scmp.eq.s32.totalorder %s9, 0
    %p95 = por %p93, %p94
    %p96 = scmp.ne.s32.totalorder %s85, %s88
    %p97 = scmp.eq.s32.totalorder %s14, 1
    %p98 = por %p96, %p97
    %p99 = scmp.ne.s32.totalorder %s88, %s89
    %p100 = scmp.eq.s32.totalorder %s14, 0
    %p101 = por %p99, %p100
    %p102 = scmp.ne.s32.totalorder %s88, %s89
    %p103 = scmp.eq.s32.totalorder %s15, 1
    %p104 = por %p102, %p103
    %p106 = scmp.ne.s32.totalorder %s89, %s105
    %p107 = scmp.eq.s32.totalorder %s15, 0
    %p108 = por %p106, %p107
    %s109 = ssub.s32 %s16, %s28
    %s110 = ssub.s32 %s17, %s24
    %s111 = sor.u32 %s109, %s110
    %p112 = scmp.eq.s32.totalorder %s111, 0
    %s114 = sadd.s32 %s113, 1
    %s115 = scalar_select %p112, %s113, %s114
    %p118 = pneg %p112
    %p119 = scmp.eq.s32.totalorder %s9, 1
    %p120 = por %p118, %p119
    %p121 = scmp.ne.s32.totalorder %s113, %s116
    %p122 = scmp.eq.s32.totalorder %s9, 0
    %p123 = por %p121, %p122
    %p124 = scmp.ne.s32.totalorder %s113, %s116
    %p125 = scmp.eq.s32.totalorder %s14, 1
    %p126 = por %p124, %p125
    %p127 = scmp.ne.s32.totalorder %s116, %s117
    %p128 = scmp.eq.s32.totalorder %s14, 0
    %p129 = por %p127, %p128
    %p130 = scmp.ne.s32.totalorder %s116, %s117
    %p131 = scmp.eq.s32.totalorder %s15, 1
    %p132 = por %p130, %p131
    %p134 = scmp.ne.s32.totalorder %s117, %s133
    %p135 = scmp.eq.s32.totalorder %s15, 0
    %p136 = por %p134, %p135
    %p137 = scmp.le.s32.totalorder 1, %s9
    %p138 = scmp.lt.s32.totalorder %s9, 3
    %p139 = pnand %p137, %p138
    %p140 = pneg %p139
    // Predicated region
    $region9: #{uconv_forward.3} parent=5 // pred_check
      _
    $region10: #{uconv_forward.3} parent=5 // pred_check_branch
      %142 = sbr.rel (%p139) target = $region12
    $region11: #{uconv_forward.3} parent=5 // pred_region
      %s143 = ssub.s32 %s9, 1
    $region12: #{uconv_forward.3} parent=5 // pred_fallthru
      _
    %p144 = scmp.lt.s32.totalorder %s9, 2
    // Predicated region
    $region13: #{uconv_forward.3} parent=5 // pred_check
      %p145 = pneg %p144
    $region14: #{uconv_forward.3} parent=5 // pred_check_branch
      %147 = sbr.rel (%p145) target = $region16
    $region15: #{uconv_forward.3} parent=5 // pred_region
      // Predicated region
      $region17: #{uconv_forward.3} parent=15 // pred_check
        %p148 = pneg %p43
      $region18: #{uconv_forward.3} parent=15 // pred_check_branch
        %150 = sbr.rel (%p148) target = $region20
      $region19: #{uconv_forward.3} parent=15 // pred_region
        %p151 = scmp.lt.s32.totalorder %s16, 1
        %s152 = scalar_select %p151, %s16, 1
        %p153 = scmp.lt.s32.totalorder %s17, 0
        %s154 = scalar_select %p153, %s17, 0
        %s155 = smul.addr %s154, 128
        %s156 = smul.addr %s152, 128
        %s157 = sadd.s32 %s155, %s156
        %s158 = smul.addr %s157, 4
        %s159 = scalar_lea.vmem %s0, %s158
      $region20: #{uconv_forward.3} parent=15 // pred_fallthru
        _
      // Predicated region
      $region21: #{uconv_forward.3} parent=15 // pred_check
        %p160 = pneg %p69
      $region22: #{uconv_forward.3} parent=15 // pred_check_branch
        %162 = sbr.rel (%p160) target = $region24
      $region23: #{uconv_forward.3} parent=15 // pred_region
        %p163 = scmp.lt.s32.totalorder %s16, 1
        %s164 = scalar_select %p163, %s16, 1
        %s165 = scalar_lea.vmem %s1, %s164
      $region24: #{uconv_forward.3} parent=15 // pred_fallthru
        _
      // Predicated region
      $region25: #{uconv_forward.3} parent=15 // pred_check
        %p166 = pneg %p95
      $region26: #{uconv_forward.3} parent=15 // pred_check_branch
        %168 = sbr.rel (%p166) target = $region28
      $region27: #{uconv_forward.3} parent=15 // pred_region
        %p169 = scmp.lt.s32.totalorder %s16, 1
        %s170 = scalar_select %p169, %s16, 1
        %s171 = scalar_lea.vmem %s2, %s170
      $region28: #{uconv_forward.3} parent=15 // pred_fallthru
        _
    $region16: #{uconv_forward.3} parent=5 // pred_fallthru
      _
    %p172 = scmp.le.s32.totalorder 1, %s9
    %p173 = scmp.lt.s32.totalorder %s9, 3
    %p174 = pnand %p172, %p173
    %p175 = pneg %p174
    // Predicated region
    $region29: #{uconv_forward.3} parent=5 // pred_check
      _
    $region30: #{uconv_forward.3} parent=5 // pred_check_branch
      %177 = sbr.rel (%p174) target = $region32
    $region31: #{uconv_forward.3} parent=5 // pred_region
      %s178 = ssub.s32 %s9, 1
      %p179 = scmp.lt.s32.totalorder %s18, 1
      %s180 = scalar_select %p179, %s18, 1
      %p181 = scmp.lt.s32.totalorder %s19, 0
      %s182 = scalar_select %p181, %s19, 0
      %s183 = smul.addr %s182, 128
      %s184 = smul.addr %s180, 128
      %s185 = sadd.s32 %s183, %s184
      %s186 = smul.addr %s185, 4
      %s187 = scalar_lea.vmem %s0, %s186
      %p188 = pneg %p49
      %p189 = pneg %p46
      %p190 = scmp.lt.s32.totalorder %s18, 1
      %s191 = scalar_select %p190, %s18, 1
      %s192 = scalar_lea.vmem %s1, %s191
      %p193 = pneg %p75
      %p194 = pneg %p72
      %p195 = scmp.lt.s32.totalorder %s18, 1
      %s196 = scalar_select %p195, %s18, 1
      %s197 = scalar_lea.vmem %s2, %s196
      %p198 = pneg %p101
      %p199 = pneg %p98
      %p200 = pneg %p129
      %p201 = pneg %p126
      %p202 = scmp.lt.s32.totalorder %s18, 1
      %s203 = scalar_select %p202, %s18, 1
      %p204 = scmp.lt.s32.totalorder %s19, 0
      %s205 = scalar_select %p204, %s19, 0
      %s206 = smul.addr %s205, 128
      %s207 = smul.addr %s203, 128
      %s208 = sadd.s32 %s206, %s207
      %s209 = smul.addr %s208, 8
      %s210 = scalar_lea.vmem %s3, %s209
      %p211 = scmp.lt.s32.totalorder %s18, 1
      %s212 = scalar_select %p211, %s18, 1
      %p213 = scmp.lt.s32.totalorder %s19, 0
      %s214 = scalar_select %p213, %s19, 0
      %s215 = smul.addr %s214, 128
      %s216 = smul.addr %s212, 128
      %s217 = sadd.s32 %s215, %s216
      %s218 = smul.addr %s217, 4
      %s219 = scalar_lea.vmem %s0, %s218
      %p220 = scmp.lt.s32.totalorder %s18, 1
      %s221 = scalar_select %p220, %s18, 1
      %s222 = scalar_lea.vmem %s1, %s221
      %p223 = scmp.lt.s32.totalorder %s18, 1
      %s224 = scalar_select %p223, %s18, 1
      %s225 = scalar_lea.vmem %s2, %s224
      %p226 = scmp.lt.s32.totalorder %s18, 1
      %s227 = scalar_select %p226, %s18, 1
      %p228 = scmp.lt.s32.totalorder %s19, 0
      %s229 = scalar_select %p228, %s19, 0
      %s230 = smul.addr %s229, 128
      %s231 = smul.addr %s227, 128
      %s232 = sadd.s32 %s230, %s231
      %s233 = smul.addr %s232, 8
      %s234 = scalar_lea.vmem %s3, %s233
      %v235 = vld [vmem:[%s222] sm:$0x1]
      %v236 = vld [vmem:[%s225] sm:$0x1]
      %v237 = vld [vmem:[%s219] sm:$0xf]
      %v238 = vld [vmem:[%s219 + $0x4] sm:$0xf]
      %v239 = vld [vmem:[%s219 + $0x8] sm:$0xf]
      %v240 = vld [vmem:[%s219 + $0xc] sm:$0xf]
      %v241 = vld [vmem:[%s219 + $0x10] sm:$0xf]
      %v242 = vld [vmem:[%s219 + $0x14] sm:$0xf]
      %v243 = vld [vmem:[%s219 + $0x18] sm:$0xf]
      %v244 = vld [vmem:[%s219 + $0x1c] sm:$0xf]
      %v245 = vld [vmem:[%s219 + $0x20] sm:$0xf]
      %v246 = vld [vmem:[%s219 + $0x24] sm:$0xf]
      %v247 = vld [vmem:[%s219 + $0x28] sm:$0xf]
      %v248 = vld [vmem:[%s219 + $0x2c] sm:$0xf]
      %v249 = vld [vmem:[%s219 + $0x30] sm:$0xf]
      %v250 = vld [vmem:[%s219 + $0x34] sm:$0xf]
      %v251 = vld [vmem:[%s219 + $0x38] sm:$0xf]
      %v252 = vld [vmem:[%s219 + $0x3c] sm:$0xf]
      %v253 = vld [vmem:[%s219 + $0x40] sm:$0xf]
      %v254 = vld [vmem:[%s219 + $0x44] sm:$0xf]
      %v255 = vld [vmem:[%s219 + $0x48] sm:$0xf]
      %v256 = vld [vmem:[%s219 + $0x4c] sm:$0xf]
      %v257 = vld [vmem:[%s219 + $0x50] sm:$0xf]
      %v258 = vld [vmem:[%s219 + $0x54] sm:$0xf]
      %v259 = vld [vmem:[%s219 + $0x58] sm:$0xf]
      %v260 = vld [vmem:[%s219 + $0x5c] sm:$0xf]
      %v261 = vld [vmem:[%s219 + $0x60] sm:$0xf]
      %v262 = vld [vmem:[%s219 + $0x64] sm:$0xf]
      %v263 = vld [vmem:[%s219 + $0x68] sm:$0xf]
      %v264 = vld [vmem:[%s219 + $0x6c] sm:$0xf]
      %v265 = vld [vmem:[%s219 + $0x70] sm:$0xf]
      %v266 = vld [vmem:[%s219 + $0x74] sm:$0xf]
      %v267 = vld [vmem:[%s219 + $0x78] sm:$0xf]
      %v268 = vld [vmem:[%s219 + $0x7c] sm:$0xf]
      %v269 = vunpack.c.l.bf16 %v237
      %v270 = vunpack.c.l.bf16 %v238
      %v271 = vunpack.c.l.bf16 %v239
      %v272 = vunpack.c.l.bf16 %v240
      %v273 = vunpack.c.l.bf16 %v241
      %v274 = vunpack.c.l.bf16 %v242
      %v275 = vunpack.c.l.bf16 %v243
      %v276 = vunpack.c.l.bf16 %v244
      %v277 = vunpack.c.l.bf16 %v245
      %v278 = vunpack.c.l.bf16 %v246
      %v279 = vunpack.c.l.bf16 %v247
      %v280 = vunpack.c.l.bf16 %v248
      %v281 = vunpack.c.l.bf16 %v249
      %v282 = vunpack.c.l.bf16 %v250
      %v283 = vunpack.c.l.bf16 %v251
      %v284 = vunpack.c.l.bf16 %v252
      %v285 = vunpack.c.l.bf16 %v253
      %v286 = vunpack.c.l.bf16 %v254
      %v287 = vunpack.c.l.bf16 %v255
      %v288 = vunpack.c.l.bf16 %v256
      %v289 = vunpack.c.l.bf16 %v257
      %v290 = vunpack.c.l.bf16 %v258
      %v291 = vunpack.c.l.bf16 %v259
      %v292 = vunpack.c.l.bf16 %v260
      %v293 = vunpack.c.l.bf16 %v261
      %v294 = vunpack.c.l.bf16 %v262
      %v295 = vunpack.c.l.bf16 %v263
      %v296 = vunpack.c.l.bf16 %v264
      %v297 = vunpack.c.l.bf16 %v265
      %v298 = vunpack.c.l.bf16 %v266
      %v299 = vunpack.c.l.bf16 %v267
      %v300 = vunpack.c.l.bf16 %v268
      %v302 = vlaneseq
      %v303 = vshrl.u32 %v302, 7
      %v304 = vsub.s32 0, %v303
      %v305 = vrot.slane %v235, %v304
      %v307 = vmul.f32 %v269, %v305
      %v308 = vmul.f32 %v270, %v305
      %v309 = vmul.f32 %v271, %v305
      %v310 = vmul.f32 %v272, %v305
      %v311 = vmul.f32 %v273, %v305
      %v312 = vmul.f32 %v274, %v305
      %v313 = vmul.f32 %v275, %v305
      %v314 = vmul.f32 %v276, %v305
      %v315 = vmul.f32 %v277, %v305
      %v316 = vmul.f32 %v278, %v305
      %v317 = vmul.f32 %v279, %v305
      %v318 = vmul.f32 %v280, %v305
      %v319 = vmul.f32 %v281, %v305
      %v320 = vmul.f32 %v282, %v305
      %v321 = vmul.f32 %v283, %v305
      %v322 = vmul.f32 %v284, %v305
      %v323 = vmul.f32 %v285, %v305
      %v324 = vmul.f32 %v286, %v305
      %v325 = vmul.f32 %v287, %v305
      %v326 = vmul.f32 %v288, %v305
      %v327 = vmul.f32 %v289, %v305
      %v328 = vmul.f32 %v290, %v305
      %v329 = vmul.f32 %v291, %v305
      %v330 = vmul.f32 %v292, %v305
      %v331 = vmul.f32 %v293, %v305
      %v332 = vmul.f32 %v294, %v305
      %v333 = vmul.f32 %v295, %v305
      %v334 = vmul.f32 %v296, %v305
      %v335 = vmul.f32 %v297, %v305
      %v336 = vmul.f32 %v298, %v305
      %v337 = vmul.f32 %v299, %v305
      %v338 = vmul.f32 %v300, %v305
      %v340 = vlaneseq
      %v341 = vshrl.u32 %v340, 7
      %v342 = vsub.s32 0, %v341
      %v343 = vrot.slane %v236, %v342
      %v345 = vadd.f32 %v307, %v343
      %v346 = vadd.f32 %v308, %v343
      %v347 = vadd.f32 %v309, %v343
      %v348 = vadd.f32 %v310, %v343
      %v349 = vadd.f32 %v311, %v343
      %v350 = vadd.f32 %v312, %v343
      %v351 = vadd.f32 %v313, %v343
      %v352 = vadd.f32 %v314, %v343
      %v353 = vadd.f32 %v315, %v343
      %v354 = vadd.f32 %v316, %v343
      %v355 = vadd.f32 %v317, %v343
      %v356 = vadd.f32 %v318, %v343
      %v357 = vadd.f32 %v319, %v343
      %v358 = vadd.f32 %v320, %v343
      %v359 = vadd.f32 %v321, %v343
      %v360 = vadd.f32 %v322, %v343
      %v361 = vadd.f32 %v323, %v343
      %v362 = vadd.f32 %v324, %v343
      %v363 = vadd.f32 %v325, %v343
      %v364 = vadd.f32 %v326, %v343
      %v365 = vadd.f32 %v327, %v343
      %v366 = vadd.f32 %v328, %v343
      %v367 = vadd.f32 %v329, %v343
      %v368 = vadd.f32 %v330, %v343
      %v369 = vadd.f32 %v331, %v343
      %v370 = vadd.f32 %v332, %v343
      %v371 = vadd.f32 %v333, %v343
      %v372 = vadd.f32 %v334, %v343
      %v373 = vadd.f32 %v335, %v343
      %v374 = vadd.f32 %v336, %v343
      %v375 = vadd.f32 %v337, %v343
      %v376 = vadd.f32 %v338, %v343
      %v377 = vmax.f32 %v345, 0.0
      %v378 = vmax.f32 %v346, 0.0
      %v379 = vmax.f32 %v347, 0.0
      %v380 = vmax.f32 %v348, 0.0
      %v381 = vmax.f32 %v349, 0.0
      %v382 = vmax.f32 %v350, 0.0
      %v383 = vmax.f32 %v351, 0.0
      %v384 = vmax.f32 %v352, 0.0
      %v385 = vmax.f32 %v353, 0.0
      %v386 = vmax.f32 %v354, 0.0
      %v387 = vmax.f32 %v355, 0.0
      %v388 = vmax.f32 %v356, 0.0
      %v389 = vmax.f32 %v357, 0.0
      %v390 = vmax.f32 %v358, 0.0
      %v391 = vmax.f32 %v359, 0.0
      %v392 = vmax.f32 %v360, 0.0
      %v393 = vmax.f32 %v361, 0.0
      %v394 = vmax.f32 %v362, 0.0
      %v395 = vmax.f32 %v363, 0.0
      %v396 = vmax.f32 %v364, 0.0
      %v397 = vmax.f32 %v365, 0.0
      %v398 = vmax.f32 %v366, 0.0
      %v399 = vmax.f32 %v367, 0.0
      %v400 = vmax.f32 %v368, 0.0
      %v401 = vmax.f32 %v369, 0.0
      %v402 = vmax.f32 %v370, 0.0
      %v403 = vmax.f32 %v371, 0.0
      %v404 = vmax.f32 %v372, 0.0
      %v405 = vmax.f32 %v373, 0.0
      %v406 = vmax.f32 %v374, 0.0
      %v407 = vmax.f32 %v375, 0.0
      %v408 = vmax.f32 %v376, 0.0
      %vm409 = vcmask 64512
      %410 = vst.msk [vmem:[%s234] sm:$0xff] %vm409, %v377
      %411 = vst.msk [vmem:[%s234 + $0x8] sm:$0xff] %vm409, %v378
      %412 = vst.msk [vmem:[%s234 + $0x10] sm:$0xff] %vm409, %v379
      %413 = vst.msk [vmem:[%s234 + $0x18] sm:$0xff] %vm409, %v380
      %414 = vst.msk [vmem:[%s234 + $0x20] sm:$0xff] %vm409, %v381
      %415 = vst.msk [vmem:[%s234 + $0x28] sm:$0xff] %vm409, %v382
      %416 = vst.msk [vmem:[%s234 + $0x30] sm:$0xff] %vm409, %v383
      %417 = vst.msk [vmem:[%s234 + $0x38] sm:$0xff] %vm409, %v384
      %418 = vst.msk [vmem:[%s234 + $0x40] sm:$0xff] %vm409, %v385
      %419 = vst.msk [vmem:[%s234 + $0x48] sm:$0xff] %vm409, %v386
      %420 = vst.msk [vmem:[%s234 + $0x50] sm:$0xff] %vm409, %v387
      %421 = vst.msk [vmem:[%s234 + $0x58] sm:$0xff] %vm409, %v388
      %422 = vst.msk [vmem:[%s234 + $0x60] sm:$0xff] %vm409, %v389
      %423 = vst.msk [vmem:[%s234 + $0x68] sm:$0xff] %vm409, %v390
      %424 = vst.msk [vmem:[%s234 + $0x70] sm:$0xff] %vm409, %v391
      %425 = vst.msk [vmem:[%s234 + $0x78] sm:$0xff] %vm409, %v392
      %426 = vst.msk [vmem:[%s234 + $0x80] sm:$0xff] %vm409, %v393
      %427 = vst.msk [vmem:[%s234 + $0x88] sm:$0xff] %vm409, %v394
      %428 = vst.msk [vmem:[%s234 + $0x90] sm:$0xff] %vm409, %v395
      %429 = vst.msk [vmem:[%s234 + $0x98] sm:$0xff] %vm409, %v396
      %430 = vst.msk [vmem:[%s234 + $0xa0] sm:$0xff] %vm409, %v397
      %431 = vst.msk [vmem:[%s234 + $0xa8] sm:$0xff] %vm409, %v398
      %432 = vst.msk [vmem:[%s234 + $0xb0] sm:$0xff] %vm409, %v399
      %433 = vst.msk [vmem:[%s234 + $0xb8] sm:$0xff] %vm409, %v400
      %434 = vst.msk [vmem:[%s234 + $0xc0] sm:$0xff] %vm409, %v401
      %435 = vst.msk [vmem:[%s234 + $0xc8] sm:$0xff] %vm409, %v402
      %436 = vst.msk [vmem:[%s234 + $0xd0] sm:$0xff] %vm409, %v403
      %437 = vst.msk [vmem:[%s234 + $0xd8] sm:$0xff] %vm409, %v404
      %438 = vst.msk [vmem:[%s234 + $0xe0] sm:$0xff] %vm409, %v405
      %439 = vst.msk [vmem:[%s234 + $0xe8] sm:$0xff] %vm409, %v406
      %440 = vst.msk [vmem:[%s234 + $0xf0] sm:$0xff] %vm409, %v407
      %441 = vst.msk [vmem:[%s234 + $0xf8] sm:$0xff] %vm409, %v408
      %s442 = scalar_lea.vmem %s219, 128
      %v443 = vld [vmem:[%s442] sm:$0xf]
      %v444 = vld [vmem:[%s442 + $0x4] sm:$0xf]
      %v445 = vld [vmem:[%s442 + $0x8] sm:$0xf]
      %v446 = vld [vmem:[%s442 + $0xc] sm:$0xf]
      %v447 = vld [vmem:[%s442 + $0x10] sm:$0xf]
      %v448 = vld [vmem:[%s442 + $0x14] sm:$0xf]
      %v449 = vld [vmem:[%s442 + $0x18] sm:$0xf]
      %v450 = vld [vmem:[%s442 + $0x1c] sm:$0xf]
      %v451 = vld [vmem:[%s442 + $0x20] sm:$0xf]
      %v452 = vld [vmem:[%s442 + $0x24] sm:$0xf]
      %v453 = vld [vmem:[%s442 + $0x28] sm:$0xf]
      %v454 = vld [vmem:[%s442 + $0x2c] sm:$0xf]
      %v455 = vld [vmem:[%s442 + $0x30] sm:$0xf]
      %v456 = vld [vmem:[%s442 + $0x34] sm:$0xf]
      %v457 = vld [vmem:[%s442 + $0x38] sm:$0xf]
      %v458 = vld [vmem:[%s442 + $0x3c] sm:$0xf]
      %v459 = vld [vmem:[%s442 + $0x40] sm:$0xf]
      %v460 = vld [vmem:[%s442 + $0x44] sm:$0xf]
      %v461 = vld [vmem:[%s442 + $0x48] sm:$0xf]
      %v462 = vld [vmem:[%s442 + $0x4c] sm:$0xf]
      %v463 = vld [vmem:[%s442 + $0x50] sm:$0xf]
      %v464 = vld [vmem:[%s442 + $0x54] sm:$0xf]
      %v465 = vld [vmem:[%s442 + $0x58] sm:$0xf]
      %v466 = vld [vmem:[%s442 + $0x5c] sm:$0xf]
      %v467 = vld [vmem:[%s442 + $0x60] sm:$0xf]
      %v468 = vld [vmem:[%s442 + $0x64] sm:$0xf]
      %v469 = vld [vmem:[%s442 + $0x68] sm:$0xf]
      %v470 = vld [vmem:[%s442 + $0x6c] sm:$0xf]
      %v471 = vld [vmem:[%s442 + $0x70] sm:$0xf]
      %v472 = vld [vmem:[%s442 + $0x74] sm:$0xf]
      %v473 = vld [vmem:[%s442 + $0x78] sm:$0xf]
      %v474 = vld [vmem:[%s442 + $0x7c] sm:$0xf]
      %v475 = vunpack.c.l.bf16 %v443
      %v476 = vunpack.c.l.bf16 %v444
      %v477 = vunpack.c.l.bf16 %v445
      %v478 = vunpack.c.l.bf16 %v446
      %v479 = vunpack.c.l.bf16 %v447
      %v480 = vunpack.c.l.bf16 %v448
      %v481 = vunpack.c.l.bf16 %v449
      %v482 = vunpack.c.l.bf16 %v450
      %v483 = vunpack.c.l.bf16 %v451
      %v484 = vunpack.c.l.bf16 %v452
      %v485 = vunpack.c.l.bf16 %v453
      %v486 = vunpack.c.l.bf16 %v454
      %v487 = vunpack.c.l.bf16 %v455
      %v488 = vunpack.c.l.bf16 %v456
      %v489 = vunpack.c.l.bf16 %v457
      %v490 = vunpack.c.l.bf16 %v458
      %v491 = vunpack.c.l.bf16 %v459
      %v492 = vunpack.c.l.bf16 %v460
      %v493 = vunpack.c.l.bf16 %v461
      %v494 = vunpack.c.l.bf16 %v462
      %v495 = vunpack.c.l.bf16 %v463
      %v496 = vunpack.c.l.bf16 %v464
      %v497 = vunpack.c.l.bf16 %v465
      %v498 = vunpack.c.l.bf16 %v466
      %v499 = vunpack.c.l.bf16 %v467
      %v500 = vunpack.c.l.bf16 %v468
      %v501 = vunpack.c.l.bf16 %v469
      %v502 = vunpack.c.l.bf16 %v470
      %v503 = vunpack.c.l.bf16 %v471
      %v504 = vunpack.c.l.bf16 %v472
      %v505 = vunpack.c.l.bf16 %v473
      %v506 = vunpack.c.l.bf16 %v474
      %v507 = vmul.f32 %v475, %v305
      %v508 = vmul.f32 %v476, %v305
      %v509 = vmul.f32 %v477, %v305
      %v510 = vmul.f32 %v478, %v305
      %v511 = vmul.f32 %v479, %v305
      %v512 = vmul.f32 %v480, %v305
      %v513 = vmul.f32 %v481, %v305
      %v514 = vmul.f32 %v482, %v305
      %v515 = vmul.f32 %v483, %v305
      %v516 = vmul.f32 %v484, %v305
      %v517 = vmul.f32 %v485, %v305
      %v518 = vmul.f32 %v486, %v305
      %v519 = vmul.f32 %v487, %v305
      %v520 = vmul.f32 %v488, %v305
      %v521 = vmul.f32 %v489, %v305
      %v522 = vmul.f32 %v490, %v305
      %v523 = vmul.f32 %v491, %v305
      %v524 = vmul.f32 %v492, %v305
      %v525 = vmul.f32 %v493, %v305
      %v526 = vmul.f32 %v494, %v305
      %v527 = vmul.f32 %v495, %v305
      %v528 = vmul.f32 %v496, %v305
      %v529 = vmul.f32 %v497, %v305
      %v530 = vmul.f32 %v498, %v305
      %v531 = vmul.f32 %v499, %v305
      %v532 = vmul.f32 %v500, %v305
      %v533 = vmul.f32 %v501, %v305
      %v534 = vmul.f32 %v502, %v305
      %v535 = vmul.f32 %v503, %v305
      %v536 = vmul.f32 %v504, %v305
      %v537 = vmul.f32 %v505, %v305
      %v538 = vmul.f32 %v506, %v305
      %v539 = vadd.f32 %v507, %v343
      %v540 = vadd.f32 %v508, %v343
      %v541 = vadd.f32 %v509, %v343
      %v542 = vadd.f32 %v510, %v343
      %v543 = vadd.f32 %v511, %v343
      %v544 = vadd.f32 %v512, %v343
      %v545 = vadd.f32 %v513, %v343
      %v546 = vadd.f32 %v514, %v343
      %v547 = vadd.f32 %v515, %v343
      %v548 = vadd.f32 %v516, %v343
      %v549 = vadd.f32 %v517, %v343
      %v550 = vadd.f32 %v518, %v343
      %v551 = vadd.f32 %v519, %v343
      %v552 = vadd.f32 %v520, %v343
      %v553 = vadd.f32 %v521, %v343
      %v554 = vadd.f32 %v522, %v343
      %v555 = vadd.f32 %v523, %v343
      %v556 = vadd.f32 %v524, %v343
      %v557 = vadd.f32 %v525, %v343
      %v558 = vadd.f32 %v526, %v343
      %v559 = vadd.f32 %v527, %v343
      %v560 = vadd.f32 %v528, %v343
      %v561 = vadd.f32 %v529, %v343
      %v562 = vadd.f32 %v530, %v343
      %v563 = vadd.f32 %v531, %v343
      %v564 = vadd.f32 %v532, %v343
      %v565 = vadd.f32 %v533, %v343
      %v566 = vadd.f32 %v534, %v343
      %v567 = vadd.f32 %v535, %v343
      %v568 = vadd.f32 %v536, %v343
      %v569 = vadd.f32 %v537, %v343
      %v570 = vadd.f32 %v538, %v343
      %v571 = vmax.f32 %v539, 0.0
      %v572 = vmax.f32 %v540, 0.0
      %v573 = vmax.f32 %v541, 0.0
      %v574 = vmax.f32 %v542, 0.0
      %v575 = vmax.f32 %v543, 0.0
      %v576 = vmax.f32 %v544, 0.0
      %v577 = vmax.f32 %v545, 0.0
      %v578 = vmax.f32 %v546, 0.0
      %v579 = vmax.f32 %v547, 0.0
      %v580 = vmax.f32 %v548, 0.0
      %v581 = vmax.f32 %v549, 0.0
      %v582 = vmax.f32 %v550, 0.0
      %v583 = vmax.f32 %v551, 0.0
      %v584 = vmax.f32 %v552, 0.0
      %v585 = vmax.f32 %v553, 0.0
      %v586 = vmax.f32 %v554, 0.0
      %v587 = vmax.f32 %v555, 0.0
      %v588 = vmax.f32 %v556, 0.0
      %v589 = vmax.f32 %v557, 0.0
      %v590 = vmax.f32 %v558, 0.0
      %v591 = vmax.f32 %v559, 0.0
      %v592 = vmax.f32 %v560, 0.0
      %v593 = vmax.f32 %v561, 0.0
      %v594 = vmax.f32 %v562, 0.0
      %v595 = vmax.f32 %v563, 0.0
      %v596 = vmax.f32 %v564, 0.0
      %v597 = vmax.f32 %v565, 0.0
      %v598 = vmax.f32 %v566, 0.0
      %v599 = vmax.f32 %v567, 0.0
      %v600 = vmax.f32 %v568, 0.0
      %v601 = vmax.f32 %v569, 0.0
      %v602 = vmax.f32 %v570, 0.0
      %s603 = scalar_lea.vmem %s234, 256
      %604 = vst.msk [vmem:[%s603] sm:$0xff] %vm409, %v571
      %605 = vst.msk [vmem:[%s603 + $0x8] sm:$0xff] %vm409, %v572
      %606 = vst.msk [vmem:[%s603 + $0x10] sm:$0xff] %vm409, %v573
      %607 = vst.msk [vmem:[%s603 + $0x18] sm:$0xff] %vm409, %v574
      %608 = vst.msk [vmem:[%s603 + $0x20] sm:$0xff] %vm409, %v575
      %609 = vst.msk [vmem:[%s603 + $0x28] sm:$0xff] %vm409, %v576
      %610 = vst.msk [vmem:[%s603 + $0x30] sm:$0xff] %vm409, %v577
      %611 = vst.msk [vmem:[%s603 + $0x38] sm:$0xff] %vm409, %v578
      %612 = vst.msk [vmem:[%s603 + $0x40] sm:$0xff] %vm409, %v579
      %613 = vst.msk [vmem:[%s603 + $0x48] sm:$0xff] %vm409, %v580
      %614 = vst.msk [vmem:[%s603 + $0x50] sm:$0xff] %vm409, %v581
      %615 = vst.msk [vmem:[%s603 + $0x58] sm:$0xff] %vm409, %v582
      %616 = vst.msk [vmem:[%s603 + $0x60] sm:$0xff] %vm409, %v583
      %617 = vst.msk [vmem:[%s603 + $0x68] sm:$0xff] %vm409, %v584
      %618 = vst.msk [vmem:[%s603 + $0x70] sm:$0xff] %vm409, %v585
      %619 = vst.msk [vmem:[%s603 + $0x78] sm:$0xff] %vm409, %v586
      %620 = vst.msk [vmem:[%s603 + $0x80] sm:$0xff] %vm409, %v587
      %621 = vst.msk [vmem:[%s603 + $0x88] sm:$0xff] %vm409, %v588
      %622 = vst.msk [vmem:[%s603 + $0x90] sm:$0xff] %vm409, %v589
      %623 = vst.msk [vmem:[%s603 + $0x98] sm:$0xff] %vm409, %v590
      %624 = vst.msk [vmem:[%s603 + $0xa0] sm:$0xff] %vm409, %v591
      %625 = vst.msk [vmem:[%s603 + $0xa8] sm:$0xff] %vm409, %v592
      %626 = vst.msk [vmem:[%s603 + $0xb0] sm:$0xff] %vm409, %v593
      %627 = vst.msk [vmem:[%s603 + $0xb8] sm:$0xff] %vm409, %v594
      %628 = vst.msk [vmem:[%s603 + $0xc0] sm:$0xff] %vm409, %v595
      %629 = vst.msk [vmem:[%s603 + $0xc8] sm:$0xff] %vm409, %v596
      %630 = vst.msk [vmem:[%s603 + $0xd0] sm:$0xff] %vm409, %v597
      %631 = vst.msk [vmem:[%s603 + $0xd8] sm:$0xff] %vm409, %v598
      %632 = vst.msk [vmem:[%s603 + $0xe0] sm:$0xff] %vm409, %v599
      %633 = vst.msk [vmem:[%s603 + $0xe8] sm:$0xff] %vm409, %v600
      %634 = vst.msk [vmem:[%s603 + $0xf0] sm:$0xff] %vm409, %v601
      %635 = vst.msk [vmem:[%s603 + $0xf8] sm:$0xff] %vm409, %v602
      %s636 = scalar_lea.vmem %s219, 256
      %v637 = vld [vmem:[%s636] sm:$0xf]
      %v638 = vld [vmem:[%s636 + $0x4] sm:$0xf]
      %v639 = vld [vmem:[%s636 + $0x8] sm:$0xf]
      %v640 = vld [vmem:[%s636 + $0xc] sm:$0xf]
      %v641 = vld [vmem:[%s636 + $0x10] sm:$0xf]
      %v642 = vld [vmem:[%s636 + $0x14] sm:$0xf]
      %v643 = vld [vmem:[%s636 + $0x18] sm:$0xf]
      %v644 = vld [vmem:[%s636 + $0x1c] sm:$0xf]
      %v645 = vld [vmem:[%s636 + $0x20] sm:$0xf]
      %v646 = vld [vmem:[%s636 + $0x24] sm:$0xf]
      %v647 = vld [vmem:[%s636 + $0x28] sm:$0xf]
      %v648 = vld [vmem:[%s636 + $0x2c] sm:$0xf]
      %v649 = vld [vmem:[%s636 + $0x30] sm:$0xf]
      %v650 = vld [vmem:[%s636 + $0x34] sm:$0xf]
      %v651 = vld [vmem:[%s636 + $0x38] sm:$0xf]
      %v652 = vld [vmem:[%s636 + $0x3c] sm:$0xf]
      %v653 = vld [vmem:[%s636 + $0x40] sm:$0xf]
      %v654 = vld [vmem:[%s636 + $0x44] sm:$0xf]
      %v655 = vld [vmem:[%s636 + $0x48] sm:$0xf]
      %v656 = vld [vmem:[%s636 + $0x4c] sm:$0xf]
      %v657 = vld [vmem:[%s636 + $0x50] sm:$0xf]
      %v658 = vld [vmem:[%s636 + $0x54] sm:$0xf]
      %v659 = vld [vmem:[%s636 + $0x58] sm:$0xf]
      %v660 = vld [vmem:[%s636 + $0x5c] sm:$0xf]
      %v661 = vld [vmem:[%s636 + $0x60] sm:$0xf]
      %v662 = vld [vmem:[%s636 + $0x64] sm:$0xf]
      %v663 = vld [vmem:[%s636 + $0x68] sm:$0xf]
      %v664 = vld [vmem:[%s636 + $0x6c] sm:$0xf]
      %v665 = vld [vmem:[%s636 + $0x70] sm:$0xf]
      %v666 = vld [vmem:[%s636 + $0x74] sm:$0xf]
      %v667 = vld [vmem:[%s636 + $0x78] sm:$0xf]
      %v668 = vld [vmem:[%s636 + $0x7c] sm:$0xf]
      %v669 = vunpack.c.l.bf16 %v637
      %v670 = vunpack.c.l.bf16 %v638
      %v671 = vunpack.c.l.bf16 %v639
      %v672 = vunpack.c.l.bf16 %v640
      %v673 = vunpack.c.l.bf16 %v641
      %v674 = vunpack.c.l.bf16 %v642
      %v675 = vunpack.c.l.bf16 %v643
      %v676 = vunpack.c.l.bf16 %v644
      %v677 = vunpack.c.l.bf16 %v645
      %v678 = vunpack.c.l.bf16 %v646
      %v679 = vunpack.c.l.bf16 %v647
      %v680 = vunpack.c.l.bf16 %v648
      %v681 = vunpack.c.l.bf16 %v649
      %v682 = vunpack.c.l.bf16 %v650
      %v683 = vunpack.c.l.bf16 %v651
      %v684 = vunpack.c.l.bf16 %v652
      %v685 = vunpack.c.l.bf16 %v653
      %v686 = vunpack.c.l.bf16 %v654
      %v687 = vunpack.c.l.bf16 %v655
      %v688 = vunpack.c.l.bf16 %v656
      %v689 = vunpack.c.l.bf16 %v657
      %v690 = vunpack.c.l.bf16 %v658
      %v691 = vunpack.c.l.bf16 %v659
      %v692 = vunpack.c.l.bf16 %v660
      %v693 = vunpack.c.l.bf16 %v661
      %v694 = vunpack.c.l.bf16 %v662
      %v695 = vunpack.c.l.bf16 %v663
      %v696 = vunpack.c.l.bf16 %v664
      %v697 = vunpack.c.l.bf16 %v665
      %v698 = vunpack.c.l.bf16 %v666
      %v699 = vunpack.c.l.bf16 %v667
      %v700 = vunpack.c.l.bf16 %v668
      %v701 = vmul.f32 %v669, %v305
      %v702 = vmul.f32 %v670, %v305
      %v703 = vmul.f32 %v671, %v305
      %v704 = vmul.f32 %v672, %v305
      %v705 = vmul.f32 %v673, %v305
      %v706 = vmul.f32 %v674, %v305
      %v707 = vmul.f32 %v675, %v305
      %v708 = vmul.f32 %v676, %v305
      %v709 = vmul.f32 %v677, %v305
      %v710 = vmul.f32 %v678, %v305
      %v711 = vmul.f32 %v679, %v305
      %v712 = vmul.f32 %v680, %v305
      %v713 = vmul.f32 %v681, %v305
      %v714 = vmul.f32 %v682, %v305
      %v715 = vmul.f32 %v683, %v305
      %v716 = vmul.f32 %v684, %v305
      %v717 = vmul.f32 %v685, %v305
      %v718 = vmul.f32 %v686, %v305
      %v719 = vmul.f32 %v687, %v305
      %v720 = vmul.f32 %v688, %v305
      %v721 = vmul.f32 %v689, %v305
      %v722 = vmul.f32 %v690, %v305
      %v723 = vmul.f32 %v691, %v305
      %v724 = vmul.f32 %v692, %v305
      %v725 = vmul.f32 %v693, %v305
      %v726 = vmul.f32 %v694, %v305
      %v727 = vmul.f32 %v695, %v305
      %v728 = vmul.f32 %v696, %v305
      %v729 = vmul.f32 %v697, %v305
      %v730 = vmul.f32 %v698, %v305
      %v731 = vmul.f32 %v699, %v305
      %v732 = vmul.f32 %v700, %v305
      %v733 = vadd.f32 %v701, %v343
      %v734 = vadd.f32 %v702, %v343
      %v735 = vadd.f32 %v703, %v343
      %v736 = vadd.f32 %v704, %v343
      %v737 = vadd.f32 %v705, %v343
      %v738 = vadd.f32 %v706, %v343
      %v739 = vadd.f32 %v707, %v343
      %v740 = vadd.f32 %v708, %v343
      %v741 = vadd.f32 %v709, %v343
      %v742 = vadd.f32 %v710, %v343
      %v743 = vadd.f32 %v711, %v343
      %v744 = vadd.f32 %v712, %v343
      %v745 = vadd.f32 %v713, %v343
      %v746 = vadd.f32 %v714, %v343
      %v747 = vadd.f32 %v715, %v343
      %v748 = vadd.f32 %v716, %v343
      %v749 = vadd.f32 %v717, %v343
      %v750 = vadd.f32 %v718, %v343
      %v751 = vadd.f32 %v719, %v343
      %v752 = vadd.f32 %v720, %v343
      %v753 = vadd.f32 %v721, %v343
      %v754 = vadd.f32 %v722, %v343
      %v755 = vadd.f32 %v723, %v343
      %v756 = vadd.f32 %v724, %v343
      %v757 = vadd.f32 %v725, %v343
      %v758 = vadd.f32 %v726, %v343
      %v759 = vadd.f32 %v727, %v343
      %v760 = vadd.f32 %v728, %v343
      %v761 = vadd.f32 %v729, %v343
      %v762 = vadd.f32 %v730, %v343
      %v763 = vadd.f32 %v731, %v343
      %v764 = vadd.f32 %v732, %v343
      %v765 = vmax.f32 %v733, 0.0
      %v766 = vmax.f32 %v734, 0.0
      %v767 = vmax.f32 %v735, 0.0
      %v768 = vmax.f32 %v736, 0.0
      %v769 = vmax.f32 %v737, 0.0
      %v770 = vmax.f32 %v738, 0.0
      %v771 = vmax.f32 %v739, 0.0
      %v772 = vmax.f32 %v740, 0.0
      %v773 = vmax.f32 %v741, 0.0
      %v774 = vmax.f32 %v742, 0.0
      %v775 = vmax.f32 %v743, 0.0
      %v776 = vmax.f32 %v744, 0.0
      %v777 = vmax.f32 %v745, 0.0
      %v778 = vmax.f32 %v746, 0.0
      %v779 = vmax.f32 %v747, 0.0
      %v780 = vmax.f32 %v748, 0.0
      %v781 = vmax.f32 %v749, 0.0
      %v782 = vmax.f32 %v750, 0.0
      %v783 = vmax.f32 %v751, 0.0
      %v784 = vmax.f32 %v752, 0.0
      %v785 = vmax.f32 %v753, 0.0
      %v786 = vmax.f32 %v754, 0.0
      %v787 = vmax.f32 %v755, 0.0
      %v788 = vmax.f32 %v756, 0.0
      %v789 = vmax.f32 %v757, 0.0
      %v790 = vmax.f32 %v758, 0.0
      %v791 = vmax.f32 %v759, 0.0
      %v792 = vmax.f32 %v760, 0.0
      %v793 = vmax.f32 %v761, 0.0
      %v794 = vmax.f32 %v762, 0.0
      %v795 = vmax.f32 %v763, 0.0
      %v796 = vmax.f32 %v764, 0.0
      %s797 = scalar_lea.vmem %s234, 512
      %798 = vst.msk [vmem:[%s797] sm:$0xff] %vm409, %v765
      %799 = vst.msk [vmem:[%s797 + $0x8] sm:$0xff] %vm409, %v766
      %800 = vst.msk [vmem:[%s797 + $0x10] sm:$0xff] %vm409, %v767
      %801 = vst.msk [vmem:[%s797 + $0x18] sm:$0xff] %vm409, %v768
      %802 = vst.msk [vmem:[%s797 + $0x20] sm:$0xff] %vm409, %v769
      %803 = vst.msk [vmem:[%s797 + $0x28] sm:$0xff] %vm409, %v770
      %804 = vst.msk [vmem:[%s797 + $0x30] sm:$0xff] %vm409, %v771
      %805 = vst.msk [vmem:[%s797 + $0x38] sm:$0xff] %vm409, %v772
      %806 = vst.msk [vmem:[%s797 + $0x40] sm:$0xff] %vm409, %v773
      %807 = vst.msk [vmem:[%s797 + $0x48] sm:$0xff] %vm409, %v774
      %808 = vst.msk [vmem:[%s797 + $0x50] sm:$0xff] %vm409, %v775
      %809 = vst.msk [vmem:[%s797 + $0x58] sm:$0xff] %vm409, %v776
      %810 = vst.msk [vmem:[%s797 + $0x60] sm:$0xff] %vm409, %v777
      %811 = vst.msk [vmem:[%s797 + $0x68] sm:$0xff] %vm409, %v778
      %812 = vst.msk [vmem:[%s797 + $0x70] sm:$0xff] %vm409, %v779
      %813 = vst.msk [vmem:[%s797 + $0x78] sm:$0xff] %vm409, %v780
      %814 = vst.msk [vmem:[%s797 + $0x80] sm:$0xff] %vm409, %v781
      %815 = vst.msk [vmem:[%s797 + $0x88] sm:$0xff] %vm409, %v782
      %816 = vst.msk [vmem:[%s797 + $0x90] sm:$0xff] %vm409, %v783
      %817 = vst.msk [vmem:[%s797 + $0x98] sm:$0xff] %vm409, %v784
      %818 = vst.msk [vmem:[%s797 + $0xa0] sm:$0xff] %vm409, %v785
      %819 = vst.msk [vmem:[%s797 + $0xa8] sm:$0xff] %vm409, %v786
      %820 = vst.msk [vmem:[%s797 + $0xb0] sm:$0xff] %vm409, %v787
      %821 = vst.msk [vmem:[%s797 + $0xb8] sm:$0xff] %vm409, %v788
      %822 = vst.msk [vmem:[%s797 + $0xc0] sm:$0xff] %vm409, %v789
      %823 = vst.msk [vmem:[%s797 + $0xc8] sm:$0xff] %vm409, %v790
      %824 = vst.msk [vmem:[%s797 + $0xd0] sm:$0xff] %vm409, %v791
      %825 = vst.msk [vmem:[%s797 + $0xd8] sm:$0xff] %vm409, %v792
      %826 = vst.msk [vmem:[%s797 + $0xe0] sm:$0xff] %vm409, %v793
      %827 = vst.msk [vmem:[%s797 + $0xe8] sm:$0xff] %vm409, %v794
      %828 = vst.msk [vmem:[%s797 + $0xf0] sm:$0xff] %vm409, %v795
      %829 = vst.msk [vmem:[%s797 + $0xf8] sm:$0xff] %vm409, %v796
      %s830 = scalar_lea.vmem %s219, 384
      %v831 = vld [vmem:[%s830] sm:$0xf]
      %v832 = vld [vmem:[%s830 + $0x4] sm:$0xf]
      %v833 = vld [vmem:[%s830 + $0x8] sm:$0xf]
      %v834 = vld [vmem:[%s830 + $0xc] sm:$0xf]
      %v835 = vld [vmem:[%s830 + $0x10] sm:$0xf]
      %v836 = vld [vmem:[%s830 + $0x14] sm:$0xf]
      %v837 = vld [vmem:[%s830 + $0x18] sm:$0xf]
      %v838 = vld [vmem:[%s830 + $0x1c] sm:$0xf]
      %v839 = vld [vmem:[%s830 + $0x20] sm:$0xf]
      %v840 = vld [vmem:[%s830 + $0x24] sm:$0xf]
      %v841 = vld [vmem:[%s830 + $0x28] sm:$0xf]
      %v842 = vld [vmem:[%s830 + $0x2c] sm:$0xf]
      %v843 = vld [vmem:[%s830 + $0x30] sm:$0xf]
      %v844 = vld [vmem:[%s830 + $0x34] sm:$0xf]
      %v845 = vld [vmem:[%s830 + $0x38] sm:$0xf]
      %v846 = vld [vmem:[%s830 + $0x3c] sm:$0xf]
      %v847 = vld [vmem:[%s830 + $0x40] sm:$0xf]
      %v848 = vld [vmem:[%s830 + $0x44] sm:$0xf]
      %v849 = vld [vmem:[%s830 + $0x48] sm:$0xf]
      %v850 = vld [vmem:[%s830 + $0x4c] sm:$0xf]
      %v851 = vld [vmem:[%s830 + $0x50] sm:$0xf]
      %v852 = vld [vmem:[%s830 + $0x54] sm:$0xf]
      %v853 = vld [vmem:[%s830 + $0x58] sm:$0xf]
      %v854 = vld [vmem:[%s830 + $0x5c] sm:$0xf]
      %v855 = vld [vmem:[%s830 + $0x60] sm:$0xf]
      %v856 = vld [vmem:[%s830 + $0x64] sm:$0xf]
      %v857 = vld [vmem:[%s830 + $0x68] sm:$0xf]
      %v858 = vld [vmem:[%s830 + $0x6c] sm:$0xf]
      %v859 = vld [vmem:[%s830 + $0x70] sm:$0xf]
      %v860 = vld [vmem:[%s830 + $0x74] sm:$0xf]
      %v861 = vld [vmem:[%s830 + $0x78] sm:$0xf]
      %v862 = vld [vmem:[%s830 + $0x7c] sm:$0xf]
      %v863 = vunpack.c.l.bf16 %v831
      %v864 = vunpack.c.l.bf16 %v832
      %v865 = vunpack.c.l.bf16 %v833
      %v866 = vunpack.c.l.bf16 %v834
      %v867 = vunpack.c.l.bf16 %v835
      %v868 = vunpack.c.l.bf16 %v836
      %v869 = vunpack.c.l.bf16 %v837
      %v870 = vunpack.c.l.bf16 %v838
      %v871 = vunpack.c.l.bf16 %v839
      %v872 = vunpack.c.l.bf16 %v840
      %v873 = vunpack.c.l.bf16 %v841
      %v874 = vunpack.c.l.bf16 %v842
      %v875 = vunpack.c.l.bf16 %v843
      %v876 = vunpack.c.l.bf16 %v844
      %v877 = vunpack.c.l.bf16 %v845
      %v878 = vunpack.c.l.bf16 %v846
      %v879 = vunpack.c.l.bf16 %v847
      %v880 = vunpack.c.l.bf16 %v848
      %v881 = vunpack.c.l.bf16 %v849
      %v882 = vunpack.c.l.bf16 %v850
      %v883 = vunpack.c.l.bf16 %v851
      %v884 = vunpack.c.l.bf16 %v852
      %v885 = vunpack.c.l.bf16 %v853
      %v886 = vunpack.c.l.bf16 %v854
      %v887 = vunpack.c.l.bf16 %v855
      %v888 = vunpack.c.l.bf16 %v856
      %v889 = vunpack.c.l.bf16 %v857
      %v890 = vunpack.c.l.bf16 %v858
      %v891 = vunpack.c.l.bf16 %v859
      %v892 = vunpack.c.l.bf16 %v860
      %v893 = vunpack.c.l.bf16 %v861
      %v894 = vunpack.c.l.bf16 %v862
      %v895 = vmul.f32 %v863, %v305
      %v896 = vmul.f32 %v864, %v305
      %v897 = vmul.f32 %v865, %v305
      %v898 = vmul.f32 %v866, %v305
      %v899 = vmul.f32 %v867, %v305
      %v900 = vmul.f32 %v868, %v305
      %v901 = vmul.f32 %v869, %v305
      %v902 = vmul.f32 %v870, %v305
      %v903 = vmul.f32 %v871, %v305
      %v904 = vmul.f32 %v872, %v305
      %v905 = vmul.f32 %v873, %v305
      %v906 = vmul.f32 %v874, %v305
      %v907 = vmul.f32 %v875, %v305
      %v908 = vmul.f32 %v876, %v305
      %v909 = vmul.f32 %v877, %v305
      %v910 = vmul.f32 %v878, %v305
      %v911 = vmul.f32 %v879, %v305
      %v912 = vmul.f32 %v880, %v305
      %v913 = vmul.f32 %v881, %v305
      %v914 = vmul.f32 %v882, %v305
      %v915 = vmul.f32 %v883, %v305
      %v916 = vmul.f32 %v884, %v305
      %v917 = vmul.f32 %v885, %v305
      %v918 = vmul.f32 %v886, %v305
      %v919 = vmul.f32 %v887, %v305
      %v920 = vmul.f32 %v888, %v305
      %v921 = vmul.f32 %v889, %v305
      %v922 = vmul.f32 %v890, %v305
      %v923 = vmul.f32 %v891, %v305
      %v924 = vmul.f32 %v892, %v305
      %v925 = vmul.f32 %v893, %v305
      %v926 = vmul.f32 %v894, %v305
      %v927 = vadd.f32 %v895, %v343
      %v928 = vadd.f32 %v896, %v343
      %v929 = vadd.f32 %v897, %v343
      %v930 = vadd.f32 %v898, %v343
      %v931 = vadd.f32 %v899, %v343
      %v932 = vadd.f32 %v900, %v343
      %v933 = vadd.f32 %v901, %v343
      %v934 = vadd.f32 %v902, %v343
      %v935 = vadd.f32 %v903, %v343
      %v936 = vadd.f32 %v904, %v343
      %v937 = vadd.f32 %v905, %v343
      %v938 = vadd.f32 %v906, %v343
      %v939 = vadd.f32 %v907, %v343
      %v940 = vadd.f32 %v908, %v343
      %v941 = vadd.f32 %v909, %v343
      %v942 = vadd.f32 %v910, %v343
      %v943 = vadd.f32 %v911, %v343
      %v944 = vadd.f32 %v912, %v343
      %v945 = vadd.f32 %v913, %v343
      %v946 = vadd.f32 %v914, %v343
      %v947 = vadd.f32 %v915, %v343
      %v948 = vadd.f32 %v916, %v343
      %v949 = vadd.f32 %v917, %v343
      %v950 = vadd.f32 %v918, %v343
      %v951 = vadd.f32 %v919, %v343
      %v952 = vadd.f32 %v920, %v343
      %v953 = vadd.f32 %v921, %v343
      %v954 = vadd.f32 %v922, %v343
      %v955 = vadd.f32 %v923, %v343
      %v956 = vadd.f32 %v924, %v343
      %v957 = vadd.f32 %v925, %v343
      %v958 = vadd.f32 %v926, %v343
      %v959 = vmax.f32 %v927, 0.0
      %v960 = vmax.f32 %v928, 0.0
      %v961 = vmax.f32 %v929, 0.0
      %v962 = vmax.f32 %v930, 0.0
      %v963 = vmax.f32 %v931, 0.0
      %v964 = vmax.f32 %v932, 0.0
      %v965 = vmax.f32 %v933, 0.0
      %v966 = vmax.f32 %v934, 0.0
      %v967 = vmax.f32 %v935, 0.0
      %v968 = vmax.f32 %v936, 0.0
      %v969 = vmax.f32 %v937, 0.0
      %v970 = vmax.f32 %v938, 0.0
      %v971 = vmax.f32 %v939, 0.0
      %v972 = vmax.f32 %v940, 0.0
      %v973 = vmax.f32 %v941, 0.0
      %v974 = vmax.f32 %v942, 0.0
      %v975 = vmax.f32 %v943, 0.0
      %v976 = vmax.f32 %v944, 0.0
      %v977 = vmax.f32 %v945, 0.0
      %v978 = vmax.f32 %v946, 0.0
      %v979 = vmax.f32 %v947, 0.0
      %v980 = vmax.f32 %v948, 0.0
      %v981 = vmax.f32 %v949, 0.0
      %v982 = vmax.f32 %v950, 0.0
      %v983 = vmax.f32 %v951, 0.0
      %v984 = vmax.f32 %v952, 0.0
      %v985 = vmax.f32 %v953, 0.0
      %v986 = vmax.f32 %v954, 0.0
      %v987 = vmax.f32 %v955, 0.0
      %v988 = vmax.f32 %v956, 0.0
      %v989 = vmax.f32 %v957, 0.0
      %v990 = vmax.f32 %v958, 0.0
      %s991 = scalar_lea.vmem %s234, 768
      %992 = vst.msk [vmem:[%s991] sm:$0xff] %vm409, %v959
      %993 = vst.msk [vmem:[%s991 + $0x8] sm:$0xff] %vm409, %v960
      %994 = vst.msk [vmem:[%s991 + $0x10] sm:$0xff] %vm409, %v961
      %995 = vst.msk [vmem:[%s991 + $0x18] sm:$0xff] %vm409, %v962
      %996 = vst.msk [vmem:[%s991 + $0x20] sm:$0xff] %vm409, %v963
      %997 = vst.msk [vmem:[%s991 + $0x28] sm:$0xff] %vm409, %v964
      %998 = vst.msk [vmem:[%s991 + $0x30] sm:$0xff] %vm409, %v965
      %999 = vst.msk [vmem:[%s991 + $0x38] sm:$0xff] %vm409, %v966
      %1000 = vst.msk [vmem:[%s991 + $0x40] sm:$0xff] %vm409, %v967
      %1001 = vst.msk [vmem:[%s991 + $0x48] sm:$0xff] %vm409, %v968
      %1002 = vst.msk [vmem:[%s991 + $0x50] sm:$0xff] %vm409, %v969
      %1003 = vst.msk [vmem:[%s991 + $0x58] sm:$0xff] %vm409, %v970
      %1004 = vst.msk [vmem:[%s991 + $0x60] sm:$0xff] %vm409, %v971
      %1005 = vst.msk [vmem:[%s991 + $0x68] sm:$0xff] %vm409, %v972
      %1006 = vst.msk [vmem:[%s991 + $0x70] sm:$0xff] %vm409, %v973
      %1007 = vst.msk [vmem:[%s991 + $0x78] sm:$0xff] %vm409, %v974
      %1008 = vst.msk [vmem:[%s991 + $0x80] sm:$0xff] %vm409, %v975
      %1009 = vst.msk [vmem:[%s991 + $0x88] sm:$0xff] %vm409, %v976
      %1010 = vst.msk [vmem:[%s991 + $0x90] sm:$0xff] %vm409, %v977
      %1011 = vst.msk [vmem:[%s991 + $0x98] sm:$0xff] %vm409, %v978
      %1012 = vst.msk [vmem:[%s991 + $0xa0] sm:$0xff] %vm409, %v979
      %1013 = vst.msk [vmem:[%s991 + $0xa8] sm:$0xff] %vm409, %v980
      %1014 = vst.msk [vmem:[%s991 + $0xb0] sm:$0xff] %vm409, %v981
      %1015 = vst.msk [vmem:[%s991 + $0xb8] sm:$0xff] %vm409, %v982
      %1016 = vst.msk [vmem:[%s991 + $0xc0] sm:$0xff] %vm409, %v983
      %1017 = vst.msk [vmem:[%s991 + $0xc8] sm:$0xff] %vm409, %v984
      %1018 = vst.msk [vmem:[%s991 + $0xd0] sm:$0xff] %vm409, %v985
      %1019 = vst.msk [vmem:[%s991 + $0xd8] sm:$0xff] %vm409, %v986
      %1020 = vst.msk [vmem:[%s991 + $0xe0] sm:$0xff] %vm409, %v987
      %1021 = vst.msk [vmem:[%s991 + $0xe8] sm:$0xff] %vm409, %v988
      %1022 = vst.msk [vmem:[%s991 + $0xf0] sm:$0xff] %vm409, %v989
      %1023 = vst.msk [vmem:[%s991 + $0xf8] sm:$0xff] %vm409, %v990
      %p1024 = scmp.lt.s32.totalorder %s18, 1
      %s1025 = scalar_select %p1024, %s18, 1
      %p1026 = scmp.lt.s32.totalorder %s19, 0
      %s1027 = scalar_select %p1026, %s19, 0
      %s1028 = smul.addr %s1027, 128
      %s1029 = smul.addr %s1025, 128
      %s1030 = sadd.s32 %s1028, %s1029
      %s1031 = smul.addr %s1030, 8
      %s1032 = scalar_lea.vmem %s3, %s1031
      // Predicated region
      $region33: #{uconv_forward.3} parent=31 // pred_check
        %p1033 = pneg %p126
      $region34: #{uconv_forward.3} parent=31 // pred_check_branch
        %1035 = sbr.rel (%p1033) target = $region36
      $region35: #{uconv_forward.3} parent=31 // pred_region
        _
      $region36: #{uconv_forward.3} parent=31 // pred_fallthru
        _
    $region32: #{uconv_forward.3} parent=5 // pred_fallthru
      _
    %p1036 = scmp.le.s32.totalorder 2, %s9
    // Predicated region
    $region37: #{uconv_forward.3} parent=5 // pred_check
      %p1037 = pneg %p1036
    $region38: #{uconv_forward.3} parent=5 // pred_check_branch
      %1039 = sbr.rel (%p1037) target = $region40
    $region39: #{uconv_forward.3} parent=5 // pred_region
      %s1040 = ssub.s32 %s9, 2
      // Predicated region
      $region41: #{uconv_forward.3} parent=39 // pred_check
        %p1041 = pneg %p132
      $region42: #{uconv_forward.3} parent=39 // pred_check_branch
        %1043 = sbr.rel (%p1041) target = $region44
      $region43: #{uconv_forward.3} parent=39 // pred_region
        %p1044 = scmp.lt.s32.totalorder %s20, 1
        %s1045 = scalar_select %p1044, %s20, 1
        %p1046 = scmp.lt.s32.totalorder %s21, 0
        %s1047 = scalar_select %p1046, %s21, 0
        %s1048 = smul.addr %s1047, 128
        %s1049 = smul.addr %s1045, 128
        %s1050 = sadd.s32 %s1048, %s1049
        %s1051 = smul.addr %s1050, 8
        %s1052 = scalar_lea.vmem %s3, %s1051
      $region44: #{uconv_forward.3} parent=39 // pred_fallthru
        _
    $region40: #{uconv_forward.3} parent=5 // pred_fallthru
      _
  $region6: #{uconv_forward.3} parent=0 // loop_footer
    %s13 = sadd.s32 1, %s9
  $region7: #{uconv_forward.3} parent=0 // loop_footer_branch
    %8 = sbr.rel target = $region3
  $region8: #{uconv_forward.3} parent=0 // loop_exit
    _

// kernel: uconv_forward.2
$region0: #{uconv_forward.2}
  #allocation0 [shape = 'u32[]', space=smem, size = 0x4, offset = 0x4, fixed_abs, tag = 'smem constant byte address 0x4 - core index']
  #allocation1 [shape = 'u32[144,128]{1,0:T(1,128)}', space=vmem, size = 0x12000, scoped, tag = 'internal scratch']
  %s0 = inlined_call_operand.vmem [shape: bf16[2,1,18,18,32], index: 0, kind: input, shape index: {}]
  %s1 = inlined_call_operand.vmem [shape: bf16[4,128,128], index: 1, kind: input, shape index: {}]
  %s2 = inlined_call_operand.vmem [shape: bf16[2,1,2,2,16,16,8], index: 2, kind: output, shape index: {0}]
  %s3 = inlined_call_operand.vmem [shape: f32[2,1,2,128], index: 3, kind: output, shape index: {1}]
  %4 = xla_tuple %s2, %s3
  %s5 = sld [smem:[#allocation0]]
  $region49: #{uconv_forward.2} parent=0
    _
  %s7 = ssub.s32 1, %s5
  %s8 = scalar_select 0, %s7, %s5
  loop: start=0, step=1, limit=4
  $region2: #{uconv_forward.2} parent=0 // loop_pre_header
    _
  $region3: #{uconv_forward.2} parent=0 // loop_header
    %s10 = sphi 0, %s14
    %p11 = scmp.ge.s32.totalorder %s10, 4
    %s17 = sphi 0, %s29
    %s18 = sphi 0, %s25
    %s19 = sphi 0, %s17
    %s20 = sphi 0, %s18
    %s21 = sphi 0, %s19
    %s22 = sphi 0, %s20
    %s34 = sphi 0, %s36
    %s37 = sphi 0, %s34
    %s38 = sphi 0, %s37
    %s54 = sphi 0, %s38
    %s58 = sphi 0, %s58
    %s60 = sphi 0, %s58
    %s61 = sphi 0, %s60
    %s75 = sphi 0, %s61
    %s83 = sphi 0, %s85
    %s86 = sphi 0, %s83
    %s87 = sphi 0, %s86
    %s103 = sphi 0, %s87
    %s111 = sphi 0, %s113
    %s114 = sphi 0, %s111
    %s115 = sphi 0, %s114
    %s131 = sphi 0, %s115
  $region4: #{uconv_forward.2} parent=0 // loop_header_branch
    %13 = sbr.rel (%p11) target = $region8
  $region5: #{uconv_forward.2} parent=0 // loop_body
    %s15 = ssub.s32 %s10, 1
    %s16 = ssub.s32 %s10, 2
    %s23 = sadd.s32 1, %s18
    %p24 = scmp.ge.s32.totalorder %s23, 1
    %s25 = scalar_select %p24, 0, %s23
    %s26 = sadd.s32 1, %s17
    %s27 = scalar_select %p24, %s26, %s17
    %p28 = scmp.ge.s32.totalorder %s27, 2
    %s29 = scalar_select %p28, 0, %s27
    %s30 = ssub.s32 %s17, %s29
    %s31 = ssub.s32 %s18, %s25
    %s32 = sor.u32 %s30, %s31
    %p33 = scmp.eq.s32.totalorder %s32, 0
    %s35 = sadd.s32 %s34, 1
    %s36 = scalar_select %p33, %s34, %s35
    %p39 = pneg %p33
    %p40 = scmp.eq.s32.totalorder %s10, 1
    %p41 = por %p39, %p40
    %p42 = scmp.ne.s32.totalorder %s34, %s37
    %p43 = scmp.eq.s32.totalorder %s10, 0
    %p44 = por %p42, %p43
    %p45 = scmp.ne.s32.totalorder %s34, %s37
    %p46 = scmp.eq.s32.totalorder %s15, 1
    %p47 = por %p45, %p46
    %p48 = scmp.ne.s32.totalorder %s37, %s38
    %p49 = scmp.eq.s32.totalorder %s15, 0
    %p50 = por %p48, %p49
    %p51 = scmp.ne.s32.totalorder %s37, %s38
    %p52 = scmp.eq.s32.totalorder %s16, 1
    %p53 = por %p51, %p52
    %p55 = scmp.ne.s32.totalorder %s38, %s54
    %p56 = scmp.eq.s32.totalorder %s16, 0
    %p57 = por %p55, %p56
    %s59 = sadd.s32 %s58, 1
    %p62 = scmp.eq.s32.totalorder %s10, 1
    %p63 = scmp.ne.s32.totalorder %s58, %s60
    %p64 = scmp.eq.s32.totalorder %s10, 0
    %p65 = por %p63, %p64
    %p66 = scmp.ne.s32.totalorder %s58, %s60
    %p67 = scmp.eq.s32.totalorder %s15, 1
    %p68 = por %p66, %p67
    %p69 = scmp.ne.s32.totalorder %s60, %s61
    %p70 = scmp.eq.s32.totalorder %s15, 0
    %p71 = por %p69, %p70
    %p72 = scmp.ne.s32.totalorder %s60, %s61
    %p73 = scmp.eq.s32.totalorder %s16, 1
    %p74 = por %p72, %p73
    %p76 = scmp.ne.s32.totalorder %s61, %s75
    %p77 = scmp.eq.s32.totalorder %s16, 0
    %p78 = por %p76, %p77
    %s79 = ssub.s32 %s17, %s29
    %s80 = ssub.s32 %s18, %s25
    %s81 = sor.u32 %s79, %s80
    %p82 = scmp.eq.s32.totalorder %s81, 0
    %s84 = sadd.s32 %s83, 1
    %s85 = scalar_select %p82, %s83, %s84
    %p88 = pneg %p82
    %p89 = scmp.eq.s32.totalorder %s10, 1
    %p90 = por %p88, %p89
    %p91 = scmp.ne.s32.totalorder %s83, %s86
    %p92 = scmp.eq.s32.totalorder %s10, 0
    %p93 = por %p91, %p92
    %p94 = scmp.ne.s32.totalorder %s83, %s86
    %p95 = scmp.eq.s32.totalorder %s15, 1
    %p96 = por %p94, %p95
    %p97 = scmp.ne.s32.totalorder %s86, %s87
    %p98 = scmp.eq.s32.totalorder %s15, 0
    %p99 = por %p97, %p98
    %p100 = scmp.ne.s32.totalorder %s86, %s87
    %p101 = scmp.eq.s32.totalorder %s16, 1
    %p102 = por %p100, %p101
    %p104 = scmp.ne.s32.totalorder %s87, %s103
    %p105 = scmp.eq.s32.totalorder %s16, 0
    %p106 = por %p104, %p105
    %s107 = ssub.s32 %s17, %s29
    %s108 = ssub.s32 %s18, %s25
    %s109 = sor.u32 %s107, %s108
    %p110 = scmp.eq.s32.totalorder %s109, 0
    %s112 = sadd.s32 %s111, 1
    %s113 = scalar_select %p110, %s111, %s112
    %p116 = pneg %p110
    %p117 = scmp.eq.s32.totalorder %s10, 1
    %p118 = por %p116, %p117
    %p119 = scmp.ne.s32.totalorder %s111, %s114
    %p120 = scmp.eq.s32.totalorder %s10, 0
    %p121 = por %p119, %p120
    %p122 = scmp.ne.s32.totalorder %s111, %s114
    %p123 = scmp.eq.s32.totalorder %s15, 1
    %p124 = por %p122, %p123
    %p125 = scmp.ne.s32.totalorder %s114, %s115
    %p126 = scmp.eq.s32.totalorder %s15, 0
    %p127 = por %p125, %p126
    %p128 = scmp.ne.s32.totalorder %s114, %s115
    %p129 = scmp.eq.s32.totalorder %s16, 1
    %p130 = por %p128, %p129
    %p132 = scmp.ne.s32.totalorder %s115, %s131
    %p133 = scmp.eq.s32.totalorder %s16, 0
    %p134 = por %p132, %p133
    %p135 = scmp.le.s32.totalorder 1, %s10
    %p136 = scmp.lt.s32.totalorder %s10, 3
    %p137 = pnand %p135, %p136
    %p138 = pneg %p137
    // Predicated region
    $region9: #{uconv_forward.2} parent=5 // pred_check
      _
    $region10: #{uconv_forward.2} parent=5 // pred_check_branch
      %140 = sbr.rel (%p137) target = $region12
    $region11: #{uconv_forward.2} parent=5 // pred_region
      %s141 = ssub.s32 %s10, 1
      // Predicated region
      $region13: #{uconv_forward.2} parent=11 // pred_check
        %p142 = pneg %p71
      $region14: #{uconv_forward.2} parent=11 // pred_check_branch
        %144 = sbr.rel (%p142) target = $region16
      $region15: #{uconv_forward.2} parent=11 // pred_region
        _
      $region16: #{uconv_forward.2} parent=11 // pred_fallthru
        _
    $region12: #{uconv_forward.2} parent=5 // pred_fallthru
      _
    %p145 = scmp.lt.s32.totalorder %s10, 2
    // Predicated region
    $region17: #{uconv_forward.2} parent=5 // pred_check
      %p146 = pneg %p145
    $region18: #{uconv_forward.2} parent=5 // pred_check_branch
      %148 = sbr.rel (%p146) target = $region20
    $region19: #{uconv_forward.2} parent=5 // pred_region
      // Predicated region
      $region21: #{uconv_forward.2} parent=19 // pred_check
        %p149 = pneg %p44
      $region22: #{uconv_forward.2} parent=19 // pred_check_branch
        %151 = sbr.rel (%p149) target = $region24
      $region23: #{uconv_forward.2} parent=19 // pred_region
        %p152 = scmp.lt.s32.totalorder %s17, 1
        %s153 = scalar_select %p152, %s17, 1
        %p154 = scmp.lt.s32.totalorder %s18, 0
        %s155 = scalar_select %p154, %s18, 0
        %s156 = smul.addr %s155, 54
        %s157 = smul.addr %s153, 54
        %s158 = sadd.s32 %s156, %s157
        %s159 = smul.addr %s158, 4
        %s160 = scalar_lea.vmem %s0, %s159
      $region24: #{uconv_forward.2} parent=19 // pred_fallthru
        _
    $region20: #{uconv_forward.2} parent=5 // pred_fallthru
      _
    %p161 = scmp.le.s32.totalorder 1, %s10
    %p162 = scmp.lt.s32.totalorder %s10, 3
    %p163 = pnand %p161, %p162
    %p164 = pneg %p163
    // Predicated region
    $region25: #{uconv_forward.2} parent=5 // pred_check
      _
    $region26: #{uconv_forward.2} parent=5 // pred_check_branch
      %166 = sbr.rel (%p163) target = $region28
    $region27: #{uconv_forward.2} parent=5 // pred_region
      %s167 = ssub.s32 %s10, 1
      %p168 = scmp.lt.s32.totalorder %s19, 1
      %s169 = scalar_select %p168, %s19, 1
      %p170 = scmp.lt.s32.totalorder %s20, 0
      %s171 = scalar_select %p170, %s20, 0
      %s172 = smul.addr %s171, 54
      %s173 = smul.addr %s169, 54
      %s174 = sadd.s32 %s172, %s173
      %s175 = smul.addr %s174, 4
      %s176 = scalar_lea.vmem %s0, %s175
      %p177 = pneg %p50
      %p178 = pneg %p47
      %p179 = pneg %p71
      %p180 = pneg %p68
      %p181 = pneg %p99
      %p182 = pneg %p96
      %p183 = scmp.lt.s32.totalorder %s19, 1
      %s184 = scalar_select %p183, %s19, 1
      %p185 = scmp.lt.s32.totalorder %s20, 0
      %s186 = scalar_select %p185, %s20, 0
      %s187 = smul.addr %s186, 128
      %s188 = smul.addr %s184, 128
      %s189 = sadd.s32 %s187, %s188
      %s190 = smul.addr %s189, 4
      %s191 = scalar_lea.vmem %s2, %s190
      %p192 = pneg %p127
      %p193 = pneg %p124
      %p194 = scmp.lt.s32.totalorder %s19, 1
      %s195 = scalar_select %p194, %s19, 1
      %p196 = scmp.lt.s32.totalorder %s20, 0
      %s197 = scalar_select %p196, %s20, 0
      %s198 = sadd.s32 %s197, %s195
      %s199 = smul.addr %s198, 2
      %s200 = scalar_lea.vmem %s3, %s199
      %p201 = scmp.lt.s32.totalorder %s19, 1
      %s202 = scalar_select %p201, %s19, 1
      %p203 = scmp.lt.s32.totalorder %s20, 0
      %s204 = scalar_select %p203, %s20, 0
      %s205 = smul.addr %s204, 54
      %s206 = smul.addr %s202, 54
      %s207 = sadd.s32 %s205, %s206
      %s208 = smul.addr %s207, 4
      %s209 = scalar_lea.vmem %s0, %s208
      %p210 = scmp.lt.s32.totalorder %s19, 1
      %s211 = scalar_select %p210, %s19, 1
      %p212 = scmp.lt.s32.totalorder %s20, 0
      %s213 = scalar_select %p212, %s20, 0
      %s214 = smul.addr %s213, 128
      %s215 = smul.addr %s211, 128
      %s216 = sadd.s32 %s214, %s215
      %s217 = smul.addr %s216, 4
      %s218 = scalar_lea.vmem %s2, %s217
      %p219 = scmp.lt.s32.totalorder %s19, 1
      %s220 = scalar_select %p219, %s19, 1
      %p221 = scmp.lt.s32.totalorder %s20, 0
      %s222 = scalar_select %p221, %s20, 0
      %s223 = sadd.s32 %s222, %s220
      %s224 = smul.addr %s223, 2
      %s225 = scalar_lea.vmem %s3, %s224
      %v227 = vld [vmem:[%s209] sm:$0xf]
      %v228 = vld [vmem:[%s209 + $0x4] sm:$0xf]
      %v229 = vld [vmem:[%s209 + $0x8] sm:$0x1]
      %v230 = vld [vmem:[%s209 + $0xc] sm:$0xf]
      %v231 = vld [vmem:[%s209 + $0x10] sm:$0xf]
      %v232 = vld [vmem:[%s209 + $0x14] sm:$0x1]
      %v233 = vld [vmem:[%s209 + $0x18] sm:$0xf]
      %v234 = vld [vmem:[%s209 + $0x1c] sm:$0xf]
      %v235 = vld [vmem:[%s209 + $0x20] sm:$0x1]
      %v236 = vld [vmem:[%s209 + $0x24] sm:$0xf]
      %v237 = vld [vmem:[%s209 + $0x28] sm:$0xf]
      %v238 = vld [vmem:[%s209 + $0x2c] sm:$0x1]
      %v239 = vld [vmem:[%s209 + $0x30] sm:$0xf]
      %v240 = vld [vmem:[%s209 + $0x34] sm:$0xf]
      %v241 = vld [vmem:[%s209 + $0x38] sm:$0x1]
      %v242 = vld [vmem:[%s209 + $0x3c] sm:$0xf]
      %v243 = vld [vmem:[%s209 + $0x40] sm:$0xf]
      %v244 = vld [vmem:[%s209 + $0x44] sm:$0x1]
      %v245 = vld [vmem:[%s209 + $0x48] sm:$0xf]
      %v246 = vld [vmem:[%s209 + $0x4c] sm:$0xf]
      %v247 = vld [vmem:[%s209 + $0x50] sm:$0x1]
      %v248 = vld [vmem:[%s209 + $0x54] sm:$0xf]
      %v249 = vld [vmem:[%s209 + $0x58] sm:$0xf]
      %v250 = vld [vmem:[%s209 + $0x5c] sm:$0x1]
      %v251 = vld [vmem:[%s209 + $0x60] sm:$0xf]
      %v252 = vld [vmem:[%s209 + $0x64] sm:$0xf]
      %v253 = vld [vmem:[%s209 + $0x68] sm:$0x1]
      %v254 = vld [vmem:[%s209 + $0x6c] sm:$0xf]
      %v255 = vld [vmem:[%s209 + $0x70] sm:$0xf]
      %v256 = vld [vmem:[%s209 + $0x74] sm:$0x1]
      %v257 = vld [vmem:[%s209 + $0x78] sm:$0xf]
      %v258 = vld [vmem:[%s209 + $0x7c] sm:$0xf]
      %v259 = vld [vmem:[%s209 + $0x80] sm:$0x1]
      %v260 = vld [vmem:[%s209 + $0x84] sm:$0xf]
      %v261 = vld [vmem:[%s209 + $0x88] sm:$0xf]
      %v262 = vld [vmem:[%s209 + $0x8c] sm:$0x1]
      %v263 = vld [vmem:[%s209 + $0x90] sm:$0xf]
      %v264 = vld [vmem:[%s209 + $0x94] sm:$0xf]
      %v265 = vld [vmem:[%s209 + $0x98] sm:$0x1]
      %v266 = vld [vmem:[%s209 + $0x9c] sm:$0xf]
      %v267 = vld [vmem:[%s209 + $0xa0] sm:$0xf]
      %v268 = vld [vmem:[%s209 + $0xa4] sm:$0x1]
      %v269 = vld [vmem:[%s209 + $0xa8] sm:$0xf]
      %v270 = vld [vmem:[%s209 + $0xac] sm:$0xf]
      %v271 = vld [vmem:[%s209 + $0xb0] sm:$0x1]
      %v272 = vld [vmem:[%s209 + $0xb4] sm:$0xf]
      %v273 = vld [vmem:[%s209 + $0xb8] sm:$0xf]
      %v274 = vld [vmem:[%s209 + $0xbc] sm:$0x1]
      %v275 = vld [vmem:[%s209 + $0xc0] sm:$0xf]
      %v276 = vld [vmem:[%s209 + $0xc4] sm:$0xf]
      %v277 = vld [vmem:[%s209 + $0xc8] sm:$0x1]
      %v278 = vld [vmem:[%s209 + $0xcc] sm:$0xf]
      %v279 = vld [vmem:[%s209 + $0xd0] sm:$0xf]
      %v280 = vld [vmem:[%s209 + $0xd4] sm:$0x1]
      %v313 = vunpack.c.l.b16 %v227
      %v314 = vunpack.c.l.b16 %v228
      %v315 = vunpack.c.l.b16 %v230
      %v316 = vunpack.c.l.b16 %v231
      %v317 = vunpack.c.l.b16 %v233
      %v318 = vunpack.c.l.b16 %v234
      %v319 = vunpack.c.l.b16 %v236
      %v320 = vunpack.c.l.b16 %v237
      %v321 = vunpack.c.l.b16 %v239
      %v322 = vunpack.c.l.b16 %v240
      %v323 = vunpack.c.l.b16 %v242
      %v324 = vunpack.c.l.b16 %v243
      %v325 = vunpack.c.l.b16 %v245
      %v326 = vunpack.c.l.b16 %v246
      %v327 = vunpack.c.l.b16 %v248
      %v328 = vunpack.c.l.b16 %v249
      %v329 = vunpack.c.l.b16 %v251
      %v330 = vunpack.c.l.b16 %v252
      %v331 = vunpack.c.l.b16 %v254
      %v332 = vunpack.c.l.b16 %v255
      %v333 = vunpack.c.l.b16 %v257
      %v334 = vunpack.c.l.b16 %v258
      %v335 = vunpack.c.l.b16 %v260
      %v336 = vunpack.c.l.b16 %v261
      %v337 = vunpack.c.l.b16 %v263
      %v338 = vunpack.c.l.b16 %v264
      %v339 = vunpack.c.l.b16 %v266
      %v340 = vunpack.c.l.b16 %v267
      %v341 = vunpack.c.l.b16 %v269
      %v342 = vunpack.c.l.b16 %v270
      %v343 = vunpack.c.l.b16 %v272
      %v344 = vunpack.c.l.b16 %v273
      %v345 = vpack.c.b16 %v314, %v313
      %v346 = vpack.c.b16 %v316, %v315
      %v347 = vpack.c.b16 %v318, %v317
      %v348 = vpack.c.b16 %v320, %v319
      %v349 = vpack.c.b16 %v322, %v321
      %v350 = vpack.c.b16 %v324, %v323
      %v351 = vpack.c.b16 %v326, %v325
      %v352 = vpack.c.b16 %v328, %v327
      %v353 = vpack.c.b16 %v330, %v329
      %v354 = vpack.c.b16 %v332, %v331
      %v355 = vpack.c.b16 %v334, %v333
      %v356 = vpack.c.b16 %v336, %v335
      %v357 = vpack.c.b16 %v338, %v337
      %v358 = vpack.c.b16 %v340, %v339
      %v359 = vpack.c.b16 %v342, %v341
      %v360 = vpack.c.b16 %v344, %v343
      %v377 = vunpack.c.l.b16 %v229
      %v378 = vunpack.c.l.b16 %v232
      %v379 = vunpack.c.l.b16 %v235
      %v380 = vunpack.c.l.b16 %v238
      %v381 = vunpack.c.l.b16 %v241
      %v382 = vunpack.c.l.b16 %v244
      %v383 = vunpack.c.l.b16 %v247
      %v384 = vunpack.c.l.b16 %v250
      %v385 = vunpack.c.l.b16 %v253
      %v386 = vunpack.c.l.b16 %v256
      %v387 = vunpack.c.l.b16 %v259
      %v388 = vunpack.c.l.b16 %v262
      %v389 = vunpack.c.l.b16 %v265
      %v390 = vunpack.c.l.b16 %v268
      %v391 = vunpack.c.l.b16 %v271
      %v392 = vunpack.c.l.b16 %v274
      %v393 = vpack.c.b16 %v377, %v377
      %v394 = vpack.c.b16 %v378, %v378
      %v395 = vpack.c.b16 %v379, %v379
      %v396 = vpack.c.b16 %v380, %v380
      %v397 = vpack.c.b16 %v381, %v381
      %v398 = vpack.c.b16 %v382, %v382
      %v399 = vpack.c.b16 %v383, %v383
      %v400 = vpack.c.b16 %v384, %v384
      %v401 = vpack.c.b16 %v385, %v385
      %v402 = vpack.c.b16 %v386, %v386
      %v403 = vpack.c.b16 %v387, %v387
      %v404 = vpack.c.b16 %v388, %v388
      %v405 = vpack.c.b16 %v389, %v389
      %v406 = vpack.c.b16 %v390, %v390
      %v407 = vpack.c.b16 %v391, %v391
      %v408 = vpack.c.b16 %v392, %v392
      %vm409 = vsmask.f32 7424
      %v411 = vshrl.u32 %v345, 16
      %v413 = vshll.u32 %v345, 16
      %v415 = vrot.slane %v413, 1
      %v416 = vor.u32 %v411, %v415
      %v418 = vshll.u32 %v393, 16
      %v420 = vrot.slane %v418, 1
      %v421 = vsel %vm409, %v416, %v420
      %v423 = vshrl.u32 %v346, 16
      %v425 = vshll.u32 %v346, 16
      %v427 = vrot.slane %v425, 1
      %v428 = vor.u32 %v423, %v427
      %v430 = vshll.u32 %v394, 16
      %v432 = vrot.slane %v430, 1
      %v433 = vsel %vm409, %v428, %v432
      %v435 = vshrl.u32 %v347, 16
      %v437 = vshll.u32 %v347, 16
      %v439 = vrot.slane %v437, 1
      %v440 = vor.u32 %v435, %v439
      %v442 = vshll.u32 %v395, 16
      %v444 = vrot.slane %v442, 1
      %v445 = vsel %vm409, %v440, %v444
      %v447 = vshrl.u32 %v348, 16
      %v449 = vshll.u32 %v348, 16
      %v451 = vrot.slane %v449, 1
      %v452 = vor.u32 %v447, %v451
      %v454 = vshll.u32 %v396, 16
      %v456 = vrot.slane %v454, 1
      %v457 = vsel %vm409, %v452, %v456
      %v459 = vshrl.u32 %v349, 16
      %v461 = vshll.u32 %v349, 16
      %v463 = vrot.slane %v461, 1
      %v464 = vor.u32 %v459, %v463
      %v466 = vshll.u32 %v397, 16
      %v468 = vrot.slane %v466, 1
      %v469 = vsel %vm409, %v464, %v468
      %v471 = vshrl.u32 %v350, 16
      %v473 = vshll.u32 %v350, 16
      %v475 = vrot.slane %v473, 1
      %v476 = vor.u32 %v471, %v475
      %v478 = vshll.u32 %v398, 16
      %v480 = vrot.slane %v478, 1
      %v481 = vsel %vm409, %v476, %v480
      %v483 = vshrl.u32 %v351, 16
      %v485 = vshll.u32 %v351, 16
      %v487 = vrot.slane %v485, 1
      %v488 = vor.u32 %v483, %v487
      %v490 = vshll.u32 %v399, 16
      %v492 = vrot.slane %v490, 1
      %v493 = vsel %vm409, %v488, %v492
      %v495 = vshrl.u32 %v352, 16
      %v497 = vshll.u32 %v352, 16
      %v499 = vrot.slane %v497, 1
      %v500 = vor.u32 %v495, %v499
      %v502 = vshll.u32 %v400, 16
      %v504 = vrot.slane %v502, 1
      %v505 = vsel %vm409, %v500, %v504
      %v507 = vshrl.u32 %v353, 16
      %v509 = vshll.u32 %v353, 16
      %v511 = vrot.slane %v509, 1
      %v512 = vor.u32 %v507, %v511
      %v514 = vshll.u32 %v401, 16
      %v516 = vrot.slane %v514, 1
      %v517 = vsel %vm409, %v512, %v516
      %v519 = vshrl.u32 %v354, 16
      %v521 = vshll.u32 %v354, 16
      %v523 = vrot.slane %v521, 1
      %v524 = vor.u32 %v519, %v523
      %v526 = vshll.u32 %v402, 16
      %v528 = vrot.slane %v526, 1
      %v529 = vsel %vm409, %v524, %v528
      %v531 = vshrl.u32 %v355, 16
      %v533 = vshll.u32 %v355, 16
      %v535 = vrot.slane %v533, 1
      %v536 = vor.u32 %v531, %v535
      %v538 = vshll.u32 %v403, 16
      %v540 = vrot.slane %v538, 1
      %v541 = vsel %vm409, %v536, %v540
      %v543 = vshrl.u32 %v356, 16
      %v545 = vshll.u32 %v356, 16
      %v547 = vrot.slane %v545, 1
      %v548 = vor.u32 %v543, %v547
      %v550 = vshll.u32 %v404, 16
      %v552 = vrot.slane %v550, 1
      %v553 = vsel %vm409, %v548, %v552
      %v555 = vshrl.u32 %v357, 16
      %v557 = vshll.u32 %v357, 16
      %v559 = vrot.slane %v557, 1
      %v560 = vor.u32 %v555, %v559
      %v562 = vshll.u32 %v405, 16
      %v564 = vrot.slane %v562, 1
      %v565 = vsel %vm409, %v560, %v564
      %v567 = vshrl.u32 %v358, 16
      %v569 = vshll.u32 %v358, 16
      %v571 = vrot.slane %v569, 1
      %v572 = vor.u32 %v567, %v571
      %v574 = vshll.u32 %v406, 16
      %v576 = vrot.slane %v574, 1
      %v577 = vsel %vm409, %v572, %v576
      %v579 = vshrl.u32 %v359, 16
      %v581 = vshll.u32 %v359, 16
      %v583 = vrot.slane %v581, 1
      %v584 = vor.u32 %v579, %v583
      %v586 = vshll.u32 %v407, 16
      %v588 = vrot.slane %v586, 1
      %v589 = vsel %vm409, %v584, %v588
      %v591 = vshrl.u32 %v360, 16
      %v593 = vshll.u32 %v360, 16
      %v595 = vrot.slane %v593, 1
      %v596 = vor.u32 %v591, %v595
      %v598 = vshll.u32 %v408, 16
      %v600 = vrot.slane %v598, 1
      %v601 = vsel %vm409, %v596, %v600
      %602 = vrot.lane.b32.xlu0 %v421, 32
      %v603 = vpop.permute.xlu0 %602
      %604 = vrot.lane.b32.xlu0 %v433, 32
      %v605 = vpop.permute.xlu0 %604
      %606 = vrot.lane.b32.xlu0 %v445, 32
      %v607 = vpop.permute.xlu0 %606
      %608 = vrot.lane.b32.xlu0 %v457, 32
      %v609 = vpop.permute.xlu0 %608
      %610 = vrot.lane.b32.xlu0 %v469, 32
      %v611 = vpop.permute.xlu0 %610
      %612 = vrot.lane.b32.xlu0 %v481, 32
      %v613 = vpop.permute.xlu0 %612
      %614 = vrot.lane.b32.xlu0 %v493, 32
      %v615 = vpop.permute.xlu0 %614
      %616 = vrot.lane.b32.xlu0 %v505, 32
      %v617 = vpop.permute.xlu0 %616
      %618 = vrot.lane.b32.xlu0 %v517, 32
      %v619 = vpop.permute.xlu0 %618
      %620 = vrot.lane.b32.xlu0 %v529, 32
      %v621 = vpop.permute.xlu0 %620
      %622 = vrot.lane.b32.xlu0 %v541, 32
      %v623 = vpop.permute.xlu0 %622
      %624 = vrot.lane.b32.xlu0 %v553, 32
      %v625 = vpop.permute.xlu0 %624
      %626 = vrot.lane.b32.xlu0 %v565, 32
      %v627 = vpop.permute.xlu0 %626
      %628 = vrot.lane.b32.xlu0 %v577, 32
      %v629 = vpop.permute.xlu0 %628
      %630 = vrot.lane.b32.xlu0 %v589, 32
      %v631 = vpop.permute.xlu0 %630
      %632 = vrot.lane.b32.xlu0 %v601, 32
      %v633 = vpop.permute.xlu0 %632
      %v636 = vunpack.c.l.b16 %v275
      %v637 = vunpack.c.l.b16 %v276
      %v638 = vpack.c.b16 %v637, %v636
      %639 = vrot.lane.b32.xlu0 %v346, 64
      %v640 = vpop.permute.xlu0 %639
      %641 = vrot.lane.b32.xlu0 %v347, 64
      %v642 = vpop.permute.xlu0 %641
      %643 = vrot.lane.b32.xlu0 %v348, 64
      %v644 = vpop.permute.xlu0 %643
      %645 = vrot.lane.b32.xlu0 %v349, 64
      %v646 = vpop.permute.xlu0 %645
      %647 = vrot.lane.b32.xlu0 %v350, 64
      %v648 = vpop.permute.xlu0 %647
      %649 = vrot.lane.b32.xlu0 %v351, 64
      %v650 = vpop.permute.xlu0 %649
      %651 = vrot.lane.b32.xlu0 %v352, 64
      %v652 = vpop.permute.xlu0 %651
      %653 = vrot.lane.b32.xlu0 %v353, 64
      %v654 = vpop.permute.xlu0 %653
      %655 = vrot.lane.b32.xlu0 %v354, 64
      %v656 = vpop.permute.xlu0 %655
      %657 = vrot.lane.b32.xlu0 %v355, 64
      %v658 = vpop.permute.xlu0 %657
      %659 = vrot.lane.b32.xlu0 %v356, 64
      %v660 = vpop.permute.xlu0 %659
      %661 = vrot.lane.b32.xlu0 %v357, 64
      %v662 = vpop.permute.xlu0 %661
      %663 = vrot.lane.b32.xlu0 %v358, 64
      %v664 = vpop.permute.xlu0 %663
      %665 = vrot.lane.b32.xlu0 %v359, 64
      %v666 = vpop.permute.xlu0 %665
      %667 = vrot.lane.b32.xlu0 %v360, 64
      %v668 = vpop.permute.xlu0 %667
      %669 = vrot.lane.b32.xlu0 %v638, 64
      %v670 = vpop.permute.xlu0 %669
      %v672 = vunpack.c.l.b16 %v277
      %v673 = vpack.c.b16 %v672, %v672
      %v675 = vshrl.u32 %v638, 16
      %v677 = vshll.u32 %v638, 16
      %v679 = vrot.slane %v677, 1
      %v680 = vor.u32 %v675, %v679
      %v682 = vshll.u32 %v673, 16
      %v684 = vrot.slane %v682, 1
      %v685 = vsel %vm409, %v680, %v684
      %686 = vrot.lane.b32.xlu0 %v433, 96
      %v687 = vpop.permute.xlu0 %686
      %688 = vrot.lane.b32.xlu0 %v445, 96
      %v689 = vpop.permute.xlu0 %688
      %690 = vrot.lane.b32.xlu0 %v457, 96
      %v691 = vpop.permute.xlu0 %690
      %692 = vrot.lane.b32.xlu0 %v469, 96
      %v693 = vpop.permute.xlu0 %692
      %694 = vrot.lane.b32.xlu0 %v481, 96
      %v695 = vpop.permute.xlu0 %694
      %696 = vrot.lane.b32.xlu0 %v493, 96
      %v697 = vpop.permute.xlu0 %696
      %698 = vrot.lane.b32.xlu0 %v505, 96
      %v699 = vpop.permute.xlu0 %698
      %700 = vrot.lane.b32.xlu0 %v517, 96
      %v701 = vpop.permute.xlu0 %700
      %702 = vrot.lane.b32.xlu0 %v529, 96
      %v703 = vpop.permute.xlu0 %702
      %704 = vrot.lane.b32.xlu0 %v541, 96
      %v705 = vpop.permute.xlu0 %704
      %706 = vrot.lane.b32.xlu0 %v553, 96
      %v707 = vpop.permute.xlu0 %706
      %708 = vrot.lane.b32.xlu0 %v565, 96
      %v709 = vpop.permute.xlu0 %708
      %710 = vrot.lane.b32.xlu0 %v577, 96
      %v711 = vpop.permute.xlu0 %710
      %712 = vrot.lane.b32.xlu0 %v589, 96
      %v713 = vpop.permute.xlu0 %712
      %714 = vrot.lane.b32.xlu0 %v601, 96
      %v715 = vpop.permute.xlu0 %714
      %716 = vrot.lane.b32.xlu0 %v685, 96
      %v717 = vpop.permute.xlu0 %716
      %vm718 = vcmask 261120
      %v720 = vsel %vm718, %v345, %v603
      %v722 = vsel %vm718, %v346, %v605
      %v724 = vsel %vm718, %v347, %v607
      %v726 = vsel %vm718, %v348, %v609
      %v728 = vsel %vm718, %v349, %v611
      %v730 = vsel %vm718, %v350, %v613
      %v732 = vsel %vm718, %v351, %v615
      %v734 = vsel %vm718, %v352, %v617
      %v736 = vsel %vm718, %v353, %v619
      %v738 = vsel %vm718, %v354, %v621
      %v740 = vsel %vm718, %v355, %v623
      %v742 = vsel %vm718, %v356, %v625
      %v744 = vsel %vm718, %v357, %v627
      %v746 = vsel %vm718, %v358, %v629
      %v748 = vsel %vm718, %v359, %v631
      %v750 = vsel %vm718, %v360, %v633
      %vm751 = vcmask 523264
      %v753 = vsel %vm751, %v720, %v640
      %v755 = vsel %vm751, %v722, %v642
      %v757 = vsel %vm751, %v724, %v644
      %v759 = vsel %vm751, %v726, %v646
      %v761 = vsel %vm751, %v728, %v648
      %v763 = vsel %vm751, %v730, %v650
      %v765 = vsel %vm751, %v732, %v652
      %v767 = vsel %vm751, %v734, %v654
      %v769 = vsel %vm751, %v736, %v656
      %v771 = vsel %vm751, %v738, %v658
      %v773 = vsel %vm751, %v740, %v660
      %v775 = vsel %vm751, %v742, %v662
      %v777 = vsel %vm751, %v744, %v664
      %v779 = vsel %vm751, %v746, %v666
      %v781 = vsel %vm751, %v748, %v668
      %v783 = vsel %vm751, %v750, %v670
      %vm784 = vcmask 785408
      %v786 = vsel %vm784, %v753, %v687
      %v789 = vsel %vm784, %v755, %v689
      %v792 = vsel %vm784, %v757, %v691
      %v795 = vsel %vm784, %v759, %v693
      %v798 = vsel %vm784, %v761, %v695
      %v801 = vsel %vm784, %v763, %v697
      %v804 = vsel %vm784, %v765, %v699
      %v807 = vsel %vm784, %v767, %v701
      %v810 = vsel %vm784, %v769, %v703
      %v813 = vsel %vm784, %v771, %v705
      %v816 = vsel %vm784, %v773, %v707
      %v819 = vsel %vm784, %v775, %v709
      %v822 = vsel %vm784, %v777, %v711
      %v825 = vsel %vm784, %v779, %v713
      %v828 = vsel %vm784, %v781, %v715
      %v831 = vsel %vm784, %v783, %v717
      %v833 = vld [vmem:[%s1] sm:$0xf]
      %v834 = vld [vmem:[%s1 + $0x4] sm:$0xf]
      %v835 = vld [vmem:[%s1 + $0x8] sm:$0xf]
      %v836 = vld [vmem:[%s1 + $0xc] sm:$0xf]
      %v837 = vld [vmem:[%s1 + $0x10] sm:$0xf]
      %v838 = vld [vmem:[%s1 + $0x14] sm:$0xf]
      %v839 = vld [vmem:[%s1 + $0x18] sm:$0xf]
      %v840 = vld [vmem:[%s1 + $0x1c] sm:$0xf]
      %v841 = vld [vmem:[%s1 + $0x20] sm:$0xf]
      %v842 = vld [vmem:[%s1 + $0x24] sm:$0xf]
      %v843 = vld [vmem:[%s1 + $0x28] sm:$0xf]
      %v844 = vld [vmem:[%s1 + $0x2c] sm:$0xf]
      %v845 = vld [vmem:[%s1 + $0x30] sm:$0xf]
      %v846 = vld [vmem:[%s1 + $0x34] sm:$0xf]
      %v847 = vld [vmem:[%s1 + $0x38] sm:$0xf]
      %v848 = vld [vmem:[%s1 + $0x3c] sm:$0xf]
      %v865 = vunpack.c.l.b16 %v833
      %v866 = vunpack.c.l.b16 %v834
      %v867 = vunpack.c.l.b16 %v835
      %v868 = vunpack.c.l.b16 %v836
      %v869 = vunpack.c.l.b16 %v837
      %v870 = vunpack.c.l.b16 %v838
      %v871 = vunpack.c.l.b16 %v839
      %v872 = vunpack.c.l.b16 %v840
      %v873 = vunpack.c.l.b16 %v841
      %v874 = vunpack.c.l.b16 %v842
      %v875 = vunpack.c.l.b16 %v843
      %v876 = vunpack.c.l.b16 %v844
      %v877 = vunpack.c.l.b16 %v845
      %v878 = vunpack.c.l.b16 %v846
      %v879 = vunpack.c.l.b16 %v847
      %v880 = vunpack.c.l.b16 %v848
      %v881 = vpack.c.b16 %v866, %v865
      %v882 = vpack.c.b16 %v868, %v867
      %v883 = vpack.c.b16 %v870, %v869
      %v884 = vpack.c.b16 %v872, %v871
      %v885 = vpack.c.b16 %v874, %v873
      %v886 = vpack.c.b16 %v876, %v875
      %v887 = vpack.c.b16 %v878, %v877
      %v888 = vpack.c.b16 %v880, %v879
      %897 = vmatprep.subr.bf16.mxu0 0
      %898 = vmatpush1.bf16.msra.mxu0 %v881
      %899 = vmatprep.subr.bf16.mxu0 0
      %900 = vmatpush1.bf16.msra.mxu0 %v882
      %901 = vmatprep.subr.bf16.mxu0 0
      %902 = vmatpush1.bf16.msra.mxu0 %v883
      %903 = vmatprep.subr.bf16.mxu0 0
      %904 = vmatpush1.bf16.msra.mxu0 %v884
      %905 = vmatprep.subr.bf16.mxu0 0
      %906 = vmatpush1.bf16.msra.mxu0 %v885
      %907 = vmatprep.subr.bf16.mxu0 0
      %908 = vmatpush1.bf16.msra.mxu0 %v886
      %909 = vmatprep.subr.bf16.mxu0 0
      %910 = vmatpush1.bf16.msra.mxu0 %v887
      %911 = vmatprep.subr.bf16.mxu0 0
      %912 = vmatpush1.bf16.msra.mxu0 %v888
      %913 = vmatprep.subr.bf16.mxu0 0
      %914 = vmatpush1.bf16.msra.mxu0 0
      %915 = vmatprep.subr.bf16.mxu0 0
      %916 = vmatpush1.bf16.msra.mxu0 0
      %917 = vmatprep.subr.bf16.mxu0 0
      %918 = vmatpush1.bf16.msra.mxu0 0
      %919 = vmatprep.subr.bf16.mxu0 0
      %920 = vmatpush1.bf16.msra.mxu0 0
      %921 = vmatprep.subr.bf16.mxu0 0
      %922 = vmatpush1.bf16.msra.mxu0 0
      %923 = vmatprep.subr.bf16.mxu0 0
      %924 = vmatpush1.bf16.msra.mxu0 0
      %925 = vmatprep.subr.bf16.mxu0 0
      %926 = vmatpush1.bf16.msra.mxu0 0
      %927 = vmatprep.subr.bf16.mxu0 0
      %928 = vmatpush1.bf16.msra.mxu0 0
      %929 = vmatprep.mubr.bf16.mxu0 0
      %930 = vmatmul.mubr.bf16.gmra.mrb[0].mxu0 %v786
      %v931 = vpop.f32.mrb[0].mxu0
      %v932 = vadd.f32 0.0, %v931
      %v933 = vpop.f32.mrb[0].mxu0
      %v934 = vpop.f32.mrb[0].mxu0
      %v935 = vadd.f32 0.0, %v934
      %v936 = vpop.f32.mrb[0].mxu0
      %937 = vmatprep.mubr.bf16.mxu0 0
      %938 = vmatmul.mubr.bf16.gmra.mrb[0].mxu0 %v789
      %v939 = vpop.f32.mrb[0].mxu0
      %v940 = vadd.f32 0.0, %v939
      %v941 = vpop.f32.mrb[0].mxu0
      %v942 = vpop.f32.mrb[0].mxu0
      %v943 = vadd.f32 0.0, %v942
      %v944 = vpop.f32.mrb[0].mxu0
      %945 = vmatprep.mubr.bf16.mxu0 0
      %946 = vmatmul.mubr.bf16.gmra.mrb[0].mxu0 %v792
      %v947 = vpop.f32.mrb[0].mxu0
      %v948 = vadd.f32 0.0, %v947
      %v949 = vpop.f32.mrb[0].mxu0
      %v950 = vpop.f32.mrb[0].mxu0
      %v951 = vadd.f32 0.0, %v950
      %v952 = vpop.f32.mrb[0].mxu0
      %953 = vmatprep.mubr.bf16.mxu0 0
      %954 = vmatmul.mubr.bf16.gmra.mrb[0].mxu0 %v795
      %v955 = vpop.f32.mrb[0].mxu0
      %v956 = vadd.f32 0.0, %v955
      %v957 = vpop.f32.mrb[0].mxu0
      %v958 = vpop.f32.mrb[0].mxu0
      %v959 = vadd.f32 0.0, %v958
      %v960 = vpop.f32.mrb[0].mxu0
      %961 = vmatprep.mubr.bf16.mxu0 0
      %962 = vmatmul.mubr.bf16.gmra.mrb[0].mxu0 %v798
      %v963 = vpop.f32.mrb[0].mxu0
      %v964 = vadd.f32 0.0, %v963
      %v965 = vpop.f32.mrb[0].mxu0
      %v966 = vpop.f32.mrb[0].mxu0
      %v967 = vadd.f32 0.0, %v966
      %v968 = vpop.f32.mrb[0].mxu0
      %969 = vmatprep.mubr.bf16.mxu0 0
      %970 = vmatmul.mubr.bf16.gmra.mrb[0].mxu0 %v801
      %v971 = vpop.f32.mrb[0].mxu0
      %v972 = vadd.f32 0.0, %v971
      %v973 = vpop.f32.mrb[0].mxu0
      %v974 = vpop.f32.mrb[0].mxu0
      %v975 = vadd.f32 0.0, %v974
      %v976 = vpop.f32.mrb[0].mxu0
      %977 = vmatprep.mubr.bf16.mxu0 0
      %978 = vmatmul.mubr.bf16.gmra.mrb[0].mxu0 %v804
      %v979 = vpop.f32.mrb[0].mxu0
      %v980 = vadd.f32 0.0, %v979
      %v981 = vpop.f32.mrb[0].mxu0
      %v982 = vpop.f32.mrb[0].mxu0
      %v983 = vadd.f32 0.0, %v982
      %v984 = vpop.f32.mrb[0].mxu0
      %985 = vmatprep.mubr.bf16.mxu0 0
      %986 = vmatmul.mubr.bf16.gmra.mrb[0].mxu0 %v807
      %v987 = vpop.f32.mrb[0].mxu0
      %v988 = vadd.f32 0.0, %v987
      %v989 = vpop.f32.mrb[0].mxu0
      %v990 = vpop.f32.mrb[0].mxu0
      %v991 = vadd.f32 0.0, %v990
      %v992 = vpop.f32.mrb[0].mxu0
      %993 = vmatprep.mubr.bf16.mxu0 0
      %994 = vmatmul.mubr.bf16.gmra.mrb[0].mxu0 %v810
      %v995 = vpop.f32.mrb[0].mxu0
      %v996 = vadd.f32 0.0, %v995
      %v997 = vpop.f32.mrb[0].mxu0
      %v998 = vpop.f32.mrb[0].mxu0
      %v999 = vadd.f32 0.0, %v998
      %v1000 = vpop.f32.mrb[0].mxu0
      %1001 = vmatprep.mubr.bf16.mxu0 0
      %1002 = vmatmul.mubr.bf16.gmra.mrb[0].mxu0 %v813
      %v1003 = vpop.f32.mrb[0].mxu0
      %v1004 = vadd.f32 0.0, %v1003
      %v1005 = vpop.f32.mrb[0].mxu0
      %v1006 = vpop.f32.mrb[0].mxu0
      %v1007 = vadd.f32 0.0, %v1006
      %v1008 = vpop.f32.mrb[0].mxu0
      %1009 = vmatprep.mubr.bf16.mxu0 0
      %1010 = vmatmul.mubr.bf16.gmra.mrb[0].mxu0 %v816
      %v1011 = vpop.f32.mrb[0].mxu0
      %v1012 = vadd.f32 0.0, %v1011
      %v1013 = vpop.f32.mrb[0].mxu0
      %v1014 = vpop.f32.mrb[0].mxu0
      %v1015 = vadd.f32 0.0, %v1014
      %v1016 = vpop.f32.mrb[0].mxu0
      %1017 = vmatprep.mubr.bf16.mxu0 0
      %1018 = vmatmul.mubr.bf16.gmra.mrb[0].mxu0 %v819
      %v1019 = vpop.f32.mrb[0].mxu0
      %v1020 = vadd.f32 0.0, %v1019
      %v1021 = vpop.f32.mrb[0].mxu0
      %v1022 = vpop.f32.mrb[0].mxu0
      %v1023 = vadd.f32 0.0, %v1022
      %v1024 = vpop.f32.mrb[0].mxu0
      %1025 = vmatprep.mubr.bf16.mxu0 0
      %1026 = vmatmul.mubr.bf16.gmra.mrb[0].mxu0 %v822
      %v1027 = vpop.f32.mrb[0].mxu0
      %v1028 = vadd.f32 0.0, %v1027
      %v1029 = vpop.f32.mrb[0].mxu0
      %v1030 = vpop.f32.mrb[0].mxu0
      %v1031 = vadd.f32 0.0, %v1030
      %v1032 = vpop.f32.mrb[0].mxu0
      %1033 = vmatprep.mubr.bf16.mxu0 0
      %1034 = vmatmul.mubr.bf16.gmra.mrb[0].mxu0 %v825
      %v1035 = vpop.f32.mrb[0].mxu0
      %v1036 = vadd.f32 0.0, %v1035
      %v1037 = vpop.f32.mrb[0].mxu0
      %v1038 = vpop.f32.mrb[0].mxu0
      %v1039 = vadd.f32 0.0, %v1038
      %v1040 = vpop.f32.mrb[0].mxu0
      %1041 = vmatprep.mubr.bf16.mxu0 0
      %1042 = vmatmul.mubr.bf16.gmra.mrb[0].mxu0 %v828
      %v1043 = vpop.f32.mrb[0].mxu0
      %v1044 = vadd.f32 0.0, %v1043
      %v1045 = vpop.f32.mrb[0].mxu0
      %v1046 = vpop.f32.mrb[0].mxu0
      %v1047 = vadd.f32 0.0, %v1046
      %v1048 = vpop.f32.mrb[0].mxu0
      %1049 = vmatprep.mubr.bf16.mxu0 0
      %1050 = vmatmul.mubr.bf16.gmra.mrb[0].mxu0 %v831
      %v1051 = vpop.f32.mrb[0].mxu0
      %v1052 = vadd.f32 0.0, %v1051
      %v1053 = vpop.f32.mrb[0].mxu0
      %v1054 = vpop.f32.mrb[0].mxu0
      %v1055 = vadd.f32 0.0, %v1054
      %v1056 = vpop.f32.mrb[0].mxu0
      %1057 = vdwg.mxu0
      %v1058 = vpack.c.bf16 %v935, %v932
      %v1059 = vpack.c.bf16 %v943, %v940
      %v1060 = vpack.c.bf16 %v951, %v948
      %v1061 = vpack.c.bf16 %v959, %v956
      %v1062 = vpack.c.bf16 %v967, %v964
      %v1063 = vpack.c.bf16 %v975, %v972
      %v1064 = vpack.c.bf16 %v983, %v980
      %v1065 = vpack.c.bf16 %v991, %v988
      %v1066 = vpack.c.bf16 %v999, %v996
      %v1067 = vpack.c.bf16 %v1007, %v1004
      %v1068 = vpack.c.bf16 %v1015, %v1012
      %v1069 = vpack.c.bf16 %v1023, %v1020
      %v1070 = vpack.c.bf16 %v1031, %v1028
      %v1071 = vpack.c.bf16 %v1039, %v1036
      %v1072 = vpack.c.bf16 %v1047, %v1044
      %v1073 = vpack.c.bf16 %v1055, %v1052
      %v1090 = vunpack.c.l.b16 %v1058
      %v1091 = vunpack.c.h.b16 %v1058
      %v1092 = vunpack.c.l.b16 %v1059
      %v1093 = vunpack.c.h.b16 %v1059
      %v1094 = vunpack.c.l.b16 %v1060
      %v1095 = vunpack.c.h.b16 %v1060
      %v1096 = vunpack.c.l.b16 %v1061
      %v1097 = vunpack.c.h.b16 %v1061
      %v1098 = vunpack.c.l.b16 %v1062
      %v1099 = vunpack.c.h.b16 %v1062
      %v1100 = vunpack.c.l.b16 %v1063
      %v1101 = vunpack.c.h.b16 %v1063
      %v1102 = vunpack.c.l.b16 %v1064
      %v1103 = vunpack.c.h.b16 %v1064
      %v1104 = vunpack.c.l.b16 %v1065
      %v1105 = vunpack.c.h.b16 %v1065
      %v1106 = vunpack.c.l.b16 %v1066
      %v1107 = vunpack.c.h.b16 %v1066
      %v1108 = vunpack.c.l.b16 %v1067
      %v1109 = vunpack.c.h.b16 %v1067
      %v1110 = vunpack.c.l.b16 %v1068
      %v1111 = vunpack.c.h.b16 %v1068
      %v1112 = vunpack.c.l.b16 %v1069
      %v1113 = vunpack.c.h.b16 %v1069
      %v1114 = vunpack.c.l.b16 %v1070
      %v1115 = vunpack.c.h.b16 %v1070
      %v1116 = vunpack.c.l.b16 %v1071
      %v1117 = vunpack.c.h.b16 %v1071
      %v1118 = vunpack.c.l.b16 %v1072
      %v1119 = vunpack.c.h.b16 %v1072
      %v1120 = vunpack.c.l.b16 %v1073
      %v1121 = vunpack.c.h.b16 %v1073
      %v1122 = vpack.c.b16 %v1090, %v1090
      %v1123 = vpack.c.b16 %v1091, %v1091
      %v1124 = vpack.c.b16 %v1092, %v1092
      %v1125 = vpack.c.b16 %v1093, %v1093
      %v1126 = vpack.c.b16 %v1094, %v1094
      %v1127 = vpack.c.b16 %v1095, %v1095
      %v1128 = vpack.c.b16 %v1096, %v1096
      %v1129 = vpack.c.b16 %v1097, %v1097
      %v1130 = vpack.c.b16 %v1098, %v1098
      %v1131 = vpack.c.b16 %v1099, %v1099
      %v1132 = vpack.c.b16 %v1100, %v1100
      %v1133 = vpack.c.b16 %v1101, %v1101
      %v1134 = vpack.c.b16 %v1102, %v1102
      %v1135 = vpack.c.b16 %v1103, %v1103
      %v1136 = vpack.c.b16 %v1104, %v1104
      %v1137 = vpack.c.b16 %v1105, %v1105
      %v1138 = vpack.c.b16 %v1106, %v1106
      %v1139 = vpack.c.b16 %v1107, %v1107
      %v1140 = vpack.c.b16 %v1108, %v1108
      %v1141 = vpack.c.b16 %v1109, %v1109
      %v1142 = vpack.c.b16 %v1110, %v1110
      %v1143 = vpack.c.b16 %v1111, %v1111
      %v1144 = vpack.c.b16 %v1112, %v1112
      %v1145 = vpack.c.b16 %v1113, %v1113
      %v1146 = vpack.c.b16 %v1114, %v1114
      %v1147 = vpack.c.b16 %v1115, %v1115
      %v1148 = vpack.c.b16 %v1116, %v1116
      %v1149 = vpack.c.b16 %v1117, %v1117
      %v1150 = vpack.c.b16 %v1118, %v1118
      %v1151 = vpack.c.b16 %v1119, %v1119
      %v1152 = vpack.c.b16 %v1120, %v1120
      %v1153 = vpack.c.b16 %v1121, %v1121
      %vm1186 = vcmask 60416
      %1187 = vst.msk [vmem:[%s218] sm:$0xf] %vm1186, %v1122
      %1188 = vst.msk [vmem:[%s218 + $0x4] sm:$0xf] %vm1186, %v1123
      %1189 = vst.msk [vmem:[%s218 + $0x8] sm:$0xf] %vm1186, %v1124
      %1190 = vst.msk [vmem:[%s218 + $0xc] sm:$0xf] %vm1186, %v1125
      %1191 = vst.msk [vmem:[%s218 + $0x10] sm:$0xf] %vm1186, %v1126
      %1192 = vst.msk [vmem:[%s218 + $0x14] sm:$0xf] %vm1186, %v1127
      %1193 = vst.msk [vmem:[%s218 + $0x18] sm:$0xf] %vm1186, %v1128
      %1194 = vst.msk [vmem:[%s218 + $0x1c] sm:$0xf] %vm1186, %v1129
      %1195 = vst.msk [vmem:[%s218 + $0x20] sm:$0xf] %vm1186, %v1130
      %1196 = vst.msk [vmem:[%s218 + $0x24] sm:$0xf] %vm1186, %v1131
      %1197 = vst.msk [vmem:[%s218 + $0x28] sm:$0xf] %vm1186, %v1132
      %1198 = vst.msk [vmem:[%s218 + $0x2c] sm:$0xf] %vm1186, %v1133
      %1199 = vst.msk [vmem:[%s218 + $0x30] sm:$0xf] %vm1186, %v1134
      %1200 = vst.msk [vmem:[%s218 + $0x34] sm:$0xf] %vm1186, %v1135
      %1201 = vst.msk [vmem:[%s218 + $0x38] sm:$0xf] %vm1186, %v1136
      %1202 = vst.msk [vmem:[%s218 + $0x3c] sm:$0xf] %vm1186, %v1137
      %1203 = vst.msk [vmem:[%s218 + $0x40] sm:$0xf] %vm1186, %v1138
      %1204 = vst.msk [vmem:[%s218 + $0x44] sm:$0xf] %vm1186, %v1139
      %1205 = vst.msk [vmem:[%s218 + $0x48] sm:$0xf] %vm1186, %v1140
      %1206 = vst.msk [vmem:[%s218 + $0x4c] sm:$0xf] %vm1186, %v1141
      %1207 = vst.msk [vmem:[%s218 + $0x50] sm:$0xf] %vm1186, %v1142
      %1208 = vst.msk [vmem:[%s218 + $0x54] sm:$0xf] %vm1186, %v1143
      %1209 = vst.msk [vmem:[%s218 + $0x58] sm:$0xf] %vm1186, %v1144
      %1210 = vst.msk [vmem:[%s218 + $0x5c] sm:$0xf] %vm1186, %v1145
      %1211 = vst.msk [vmem:[%s218 + $0x60] sm:$0xf] %vm1186, %v1146
      %1212 = vst.msk [vmem:[%s218 + $0x64] sm:$0xf] %vm1186, %v1147
      %1213 = vst.msk [vmem:[%s218 + $0x68] sm:$0xf] %vm1186, %v1148
      %1214 = vst.msk [vmem:[%s218 + $0x6c] sm:$0xf] %vm1186, %v1149
      %1215 = vst.msk [vmem:[%s218 + $0x70] sm:$0xf] %vm1186, %v1150
      %1216 = vst.msk [vmem:[%s218 + $0x74] sm:$0xf] %vm1186, %v1151
      %1217 = vst.msk [vmem:[%s218 + $0x78] sm:$0xf] %vm1186, %v1152
      %1218 = vst.msk [vmem:[%s218 + $0x7c] sm:$0xf] %vm1186, %v1153
      %v1219 = vadd.f32 %v932, %v935
      %v1220 = vadd.f32 %v1219, %v940
      %v1221 = vadd.f32 %v1220, %v943
      %v1222 = vadd.f32 %v1221, %v948
      %v1223 = vadd.f32 %v1222, %v951
      %v1224 = vadd.f32 %v1223, %v956
      %v1225 = vadd.f32 %v1224, %v959
      %v1226 = vadd.f32 %v1225, %v964
      %v1227 = vadd.f32 %v1226, %v967
      %v1228 = vadd.f32 %v1227, %v972
      %v1229 = vadd.f32 %v1228, %v975
      %v1230 = vadd.f32 %v1229, %v980
      %v1231 = vadd.f32 %v1230, %v983
      %v1232 = vadd.f32 %v1231, %v988
      %v1233 = vadd.f32 %v1232, %v991
      %v1234 = vadd.f32 %v1233, %v996
      %v1235 = vadd.f32 %v1234, %v999
      %v1236 = vadd.f32 %v1235, %v1004
      %v1237 = vadd.f32 %v1236, %v1007
      %v1238 = vadd.f32 %v1237, %v1012
      %v1239 = vadd.f32 %v1238, %v1015
      %v1240 = vadd.f32 %v1239, %v1020
      %v1241 = vadd.f32 %v1240, %v1023
      %v1242 = vadd.f32 %v1241, %v1028
      %v1243 = vadd.f32 %v1242, %v1031
      %v1244 = vadd.f32 %v1243, %v1036
      %v1245 = vadd.f32 %v1244, %v1039
      %v1246 = vadd.f32 %v1245, %v1044
      %v1247 = vadd.f32 %v1246, %v1047
      %v1248 = vadd.f32 %v1247, %v1052
      %v1249 = vadd.f32 %v1248, %v1055
      %v1250 = vrot.slane %v1249, 4
      %v1251 = vadd.f32 %v1249, %v1250
      %v1252 = vrot.slane %v1251, 2
      %v1253 = vadd.f32 %v1251, %v1252
      %v1254 = vrot.slane %v1253, 1
      %v1255 = vadd.f32 %v1253, %v1254
      %v1256 = vadd.f32 %v1255, 0.0
      %v1257 = vshrl.u32 %v393, 16
      %v1259 = vshrl.u32 %v394, 16
      %v1261 = vshrl.u32 %v395, 16
      %v1263 = vshrl.u32 %v396, 16
      %v1265 = vshrl.u32 %v397, 16
      %v1267 = vshrl.u32 %v398, 16
      %v1269 = vshrl.u32 %v399, 16
      %v1271 = vshrl.u32 %v400, 16
      %v1273 = vshrl.u32 %v401, 16
      %v1275 = vshrl.u32 %v402, 16
      %v1277 = vshrl.u32 %v403, 16
      %v1279 = vshrl.u32 %v404, 16
      %v1281 = vshrl.u32 %v405, 16
      %v1283 = vshrl.u32 %v406, 16
      %v1285 = vshrl.u32 %v407, 16
      %v1287 = vshrl.u32 %v408, 16
      %1289 = vrot.lane.b32.xlu0 %v1257, 32
      %v1290 = vpop.permute.xlu0 %1289
      %1291 = vrot.lane.b32.xlu0 %v1259, 32
      %v1292 = vpop.permute.xlu0 %1291
      %1293 = vrot.lane.b32.xlu0 %v1261, 32
      %v1294 = vpop.permute.xlu0 %1293
      %1295 = vrot.lane.b32.xlu0 %v1263, 32
      %v1296 = vpop.permute.xlu0 %1295
      %1297 = vrot.lane.b32.xlu0 %v1265, 32
      %v1298 = vpop.permute.xlu0 %1297
      %1299 = vrot.lane.b32.xlu0 %v1267, 32
      %v1300 = vpop.permute.xlu0 %1299
      %1301 = vrot.lane.b32.xlu0 %v1269, 32
      %v1302 = vpop.permute.xlu0 %1301
      %1303 = vrot.lane.b32.xlu0 %v1271, 32
      %v1304 = vpop.permute.xlu0 %1303
      %1305 = vrot.lane.b32.xlu0 %v1273, 32
      %v1306 = vpop.permute.xlu0 %1305
      %1307 = vrot.lane.b32.xlu0 %v1275, 32
      %v1308 = vpop.permute.xlu0 %1307
      %1309 = vrot.lane.b32.xlu0 %v1277, 32
      %v1310 = vpop.permute.xlu0 %1309
      %1311 = vrot.lane.b32.xlu0 %v1279, 32
      %v1312 = vpop.permute.xlu0 %1311
      %1313 = vrot.lane.b32.xlu0 %v1281, 32
      %v1314 = vpop.permute.xlu0 %1313
      %1315 = vrot.lane.b32.xlu0 %v1283, 32
      %v1316 = vpop.permute.xlu0 %1315
      %1317 = vrot.lane.b32.xlu0 %v1285, 32
      %v1318 = vpop.permute.xlu0 %1317
      %1319 = vrot.lane.b32.xlu0 %v1287, 32
      %v1320 = vpop.permute.xlu0 %1319
      %1321 = vrot.lane.b32.xlu0 %v394, 64
      %v1322 = vpop.permute.xlu0 %1321
      %1323 = vrot.lane.b32.xlu0 %v395, 64
      %v1324 = vpop.permute.xlu0 %1323
      %1325 = vrot.lane.b32.xlu0 %v396, 64
      %v1326 = vpop.permute.xlu0 %1325
      %1327 = vrot.lane.b32.xlu0 %v397, 64
      %v1328 = vpop.permute.xlu0 %1327
      %1329 = vrot.lane.b32.xlu0 %v398, 64
      %v1330 = vpop.permute.xlu0 %1329
      %1331 = vrot.lane.b32.xlu0 %v399, 64
      %v1332 = vpop.permute.xlu0 %1331
      %1333 = vrot.lane.b32.xlu0 %v400, 64
      %v1334 = vpop.permute.xlu0 %1333
      %1335 = vrot.lane.b32.xlu0 %v401, 64
      %v1336 = vpop.permute.xlu0 %1335
      %1337 = vrot.lane.b32.xlu0 %v402, 64
      %v1338 = vpop.permute.xlu0 %1337
      %1339 = vrot.lane.b32.xlu0 %v403, 64
      %v1340 = vpop.permute.xlu0 %1339
      %1341 = vrot.lane.b32.xlu0 %v404, 64
      %v1342 = vpop.permute.xlu0 %1341
      %1343 = vrot.lane.b32.xlu0 %v405, 64
      %v1344 = vpop.permute.xlu0 %1343
      %1345 = vrot.lane.b32.xlu0 %v406, 64
      %v1346 = vpop.permute.xlu0 %1345
      %1347 = vrot.lane.b32.xlu0 %v407, 64
      %v1348 = vpop.permute.xlu0 %1347
      %1349 = vrot.lane.b32.xlu0 %v408, 64
      %v1350 = vpop.permute.xlu0 %1349
      %1351 = vrot.lane.b32.xlu0 %v673, 64
      %v1352 = vpop.permute.xlu0 %1351
      %v1353 = vshrl.u32 %v673, 16
      %1355 = vrot.lane.b32.xlu0 %v1259, 96
      %v1356 = vpop.permute.xlu0 %1355
      %1357 = vrot.lane.b32.xlu0 %v1261, 96
      %v1358 = vpop.permute.xlu0 %1357
      %1359 = vrot.lane.b32.xlu0 %v1263, 96
      %v1360 = vpop.permute.xlu0 %1359
      %1361 = vrot.lane.b32.xlu0 %v1265, 96
      %v1362 = vpop.permute.xlu0 %1361
      %1363 = vrot.lane.b32.xlu0 %v1267, 96
      %v1364 = vpop.permute.xlu0 %1363
      %1365 = vrot.lane.b32.xlu0 %v1269, 96
      %v1366 = vpop.permute.xlu0 %1365
      %1367 = vrot.lane.b32.xlu0 %v1271, 96
      %v1368 = vpop.permute.xlu0 %1367
      %1369 = vrot.lane.b32.xlu0 %v1273, 96
      %v1370 = vpop.permute.xlu0 %1369
      %1371 = vrot.lane.b32.xlu0 %v1275, 96
      %v1372 = vpop.permute.xlu0 %1371
      %1373 = vrot.lane.b32.xlu0 %v1277, 96
      %v1374 = vpop.permute.xlu0 %1373
      %1375 = vrot.lane.b32.xlu0 %v1279, 96
      %v1376 = vpop.permute.xlu0 %1375
      %1377 = vrot.lane.b32.xlu0 %v1281, 96
      %v1378 = vpop.permute.xlu0 %1377
      %1379 = vrot.lane.b32.xlu0 %v1283, 96
      %v1380 = vpop.permute.xlu0 %1379
      %1381 = vrot.lane.b32.xlu0 %v1285, 96
      %v1382 = vpop.permute.xlu0 %1381
      %1383 = vrot.lane.b32.xlu0 %v1287, 96
      %v1384 = vpop.permute.xlu0 %1383
      %1385 = vrot.lane.b32.xlu0 %v1353, 96
      %v1386 = vpop.permute.xlu0 %1385
      %v1388 = vsel %vm718, %v393, %v1290
      %v1390 = vsel %vm718, %v394, %v1292
      %v1392 = vsel %vm718, %v395, %v1294
      %v1394 = vsel %vm718, %v396, %v1296
      %v1396 = vsel %vm718, %v397, %v1298
      %v1398 = vsel %vm718, %v398, %v1300
      %v1400 = vsel %vm718, %v399, %v1302
      %v1402 = vsel %vm718, %v400, %v1304
      %v1404 = vsel %vm718, %v401, %v1306
      %v1406 = vsel %vm718, %v402, %v1308
      %v1408 = vsel %vm718, %v403, %v1310
      %v1410 = vsel %vm718, %v404, %v1312
      %v1412 = vsel %vm718, %v405, %v1314
      %v1414 = vsel %vm718, %v406, %v1316
      %v1416 = vsel %vm718, %v407, %v1318
      %v1418 = vsel %vm718, %v408, %v1320
      %v1420 = vsel %vm751, %v1388, %v1322
      %v1422 = vsel %vm751, %v1390, %v1324
      %v1424 = vsel %vm751, %v1392, %v1326
      %v1426 = vsel %vm751, %v1394, %v1328
      %v1428 = vsel %vm751, %v1396, %v1330
      %v1430 = vsel %vm751, %v1398, %v1332
      %v1432 = vsel %vm751, %v1400, %v1334
      %v1434 = vsel %vm751, %v1402, %v1336
      %v1436 = vsel %vm751, %v1404, %v1338
      %v1438 = vsel %vm751, %v1406, %v1340
      %v1440 = vsel %vm751, %v1408, %v1342
      %v1442 = vsel %vm751, %v1410, %v1344
      %v1444 = vsel %vm751, %v1412, %v1346
      %v1446 = vsel %vm751, %v1414, %v1348
      %v1448 = vsel %vm751, %v1416, %v1350
      %v1450 = vsel %vm751, %v1418, %v1352
      %v1452 = vsel %vm784, %v1420, %v1356
      %v1454 = vsel %vm784, %v1422, %v1358
      %v1456 = vsel %vm784, %v1424, %v1360
      %v1458 = vsel %vm784, %v1426, %v1362
      %v1460 = vsel %vm784, %v1428, %v1364
      %v1462 = vsel %vm784, %v1430, %v1366
      %v1464 = vsel %vm784, %v1432, %v1368
      %v1466 = vsel %vm784, %v1434, %v1370
      %v1468 = vsel %vm784, %v1436, %v1372
      %v1470 = vsel %vm784, %v1438, %v1374
      %v1472 = vsel %vm784, %v1440, %v1376
      %v1474 = vsel %vm784, %v1442, %v1378
      %v1476 = vsel %vm784, %v1444, %v1380
      %v1478 = vsel %vm784, %v1446, %v1382
      %v1480 = vsel %vm784, %v1448, %v1384
      %v1482 = vsel %vm784, %v1450, %v1386
      %v1483 = vshrl.u32 %v786, 16
      %v1485 = vshll.u32 %v786, 16
      %v1487 = vrot.slane %v1485, 1
      %v1488 = vor.u32 %v1483, %v1487
      %v1489 = vshll.u32 %v1452, 16
      %v1491 = vrot.slane %v1489, 1
      %v1492 = vsel %vm409, %v1488, %v1491
      %v1493 = vshrl.u32 %v789, 16
      %v1495 = vshll.u32 %v789, 16
      %v1497 = vrot.slane %v1495, 1
      %v1498 = vor.u32 %v1493, %v1497
      %v1499 = vshll.u32 %v1454, 16
      %v1501 = vrot.slane %v1499, 1
      %v1502 = vsel %vm409, %v1498, %v1501
      %v1503 = vshrl.u32 %v792, 16
      %v1505 = vshll.u32 %v792, 16
      %v1507 = vrot.slane %v1505, 1
      %v1508 = vor.u32 %v1503, %v1507
      %v1509 = vshll.u32 %v1456, 16
      %v1511 = vrot.slane %v1509, 1
      %v1512 = vsel %vm409, %v1508, %v1511
      %v1513 = vshrl.u32 %v795, 16
      %v1515 = vshll.u32 %v795, 16
      %v1517 = vrot.slane %v1515, 1
      %v1518 = vor.u32 %v1513, %v1517
      %v1519 = vshll.u32 %v1458, 16
      %v1521 = vrot.slane %v1519, 1
      %v1522 = vsel %vm409, %v1518, %v1521
      %v1523 = vshrl.u32 %v798, 16
      %v1525 = vshll.u32 %v798, 16
      %v1527 = vrot.slane %v1525, 1
      %v1528 = vor.u32 %v1523, %v1527
      %v1529 = vshll.u32 %v1460, 16
      %v1531 = vrot.slane %v1529, 1
      %v1532 = vsel %vm409, %v1528, %v1531
      %v1533 = vshrl.u32 %v801, 16
      %v1535 = vshll.u32 %v801, 16
      %v1537 = vrot.slane %v1535, 1
      %v1538 = vor.u32 %v1533, %v1537
      %v1539 = vshll.u32 %v1462, 16
      %v1541 = vrot.slane %v1539, 1
      %v1542 = vsel %vm409, %v1538, %v1541
      %v1543 = vshrl.u32 %v804, 16
      %v1545 = vshll.u32 %v804, 16
      %v1547 = vrot.slane %v1545, 1
      %v1548 = vor.u32 %v1543, %v1547
      %v1549 = vshll.u32 %v1464, 16
      %v1551 = vrot.slane %v1549, 1
      %v1552 = vsel %vm409, %v1548, %v1551
      %v1553 = vshrl.u32 %v807, 16
      %v1555 = vshll.u32 %v807, 16
      %v1557 = vrot.slane %v1555, 1
      %v1558 = vor.u32 %v1553, %v1557
      %v1559 = vshll.u32 %v1466, 16
      %v1561 = vrot.slane %v1559, 1
      %v1562 = vsel %vm409, %v1558, %v1561
      %v1563 = vshrl.u32 %v810, 16
      %v1565 = vshll.u32 %v810, 16
      %v1567 = vrot.slane %v1565, 1
      %v1568 = vor.u32 %v1563, %v1567
      %v1569 = vshll.u32 %v1468, 16
      %v1571 = vrot.slane %v1569, 1
      %v1572 = vsel %vm409, %v1568, %v1571
      %v1573 = vshrl.u32 %v813, 16
      %v1575 = vshll.u32 %v813, 16
      %v1577 = vrot.slane %v1575, 1
      %v1578 = vor.u32 %v1573, %v1577
      %v1579 = vshll.u32 %v1470, 16
      %v1581 = vrot.slane %v1579, 1
      %v1582 = vsel %vm409, %v1578, %v1581
      %v1583 = vshrl.u32 %v816, 16
      %v1585 = vshll.u32 %v816, 16
      %v1587 = vrot.slane %v1585, 1
      %v1588 = vor.u32 %v1583, %v1587
      %v1589 = vshll.u32 %v1472, 16
      %v1591 = vrot.slane %v1589, 1
      %v1592 = vsel %vm409, %v1588, %v1591
      %v1593 = vshrl.u32 %v819, 16
      %v1595 = vshll.u32 %v819, 16
      %v1597 = vrot.slane %v1595, 1
      %v1598 = vor.u32 %v1593, %v1597
      %v1599 = vshll.u32 %v1474, 16
      %v1601 = vrot.slane %v1599, 1
      %v1602 = vsel %vm409, %v1598, %v1601
      %v1603 = vshrl.u32 %v822, 16
      %v1605 = vshll.u32 %v822, 16
      %v1607 = vrot.slane %v1605, 1
      %v1608 = vor.u32 %v1603, %v1607
      %v1609 = vshll.u32 %v1476, 16
      %v1611 = vrot.slane %v1609, 1
      %v1612 = vsel %vm409, %v1608, %v1611
      %v1613 = vshrl.u32 %v825, 16
      %v1615 = vshll.u32 %v825, 16
      %v1617 = vrot.slane %v1615, 1
      %v1618 = vor.u32 %v1613, %v1617
      %v1619 = vshll.u32 %v1478, 16
      %v1621 = vrot.slane %v1619, 1
      %v1622 = vsel %vm409, %v1618, %v1621
      %v1623 = vshrl.u32 %v828, 16
      %v1625 = vshll.u32 %v828, 16
      %v1627 = vrot.slane %v1625, 1
      %v1628 = vor.u32 %v1623, %v1627
      %v1629 = vshll.u32 %v1480, 16
      %v1631 = vrot.slane %v1629, 1
      %v1632 = vsel %vm409, %v1628, %v1631
      %v1633 = vshrl.u32 %v831, 16
      %v1635 = vshll.u32 %v831, 16
      %v1637 = vrot.slane %v1635, 1
      %v1638 = vor.u32 %v1633, %v1637
      %v1639 = vshll.u32 %v1482, 16
      %v1641 = vrot.slane %v1639, 1
      %v1642 = vsel %vm409, %v1638, %v1641
      %s1659 = scalar_lea.vmem %s1, 64
      %v1660 = vld [vmem:[%s1659] sm:$0xf]
      %v1661 = vld [vmem:[%s1659 + $0x4] sm:$0xf]
      %v1662 = vld [vmem:[%s1659 + $0x8] sm:$0xf]
      %v1663 = vld [vmem:[%s1659 + $0xc] sm:$0xf]
      %v1664 = vld [vmem:[%s1659 + $0x10] sm:$0xf]
      %v1665 = vld [vmem:[%s1659 + $0x14] sm:$0xf]
      %v1666 = vld [vmem:[%s1659 + $0x18] sm:$0xf]
      %v1667 = vld [vmem:[%s1659 + $0x1c] sm:$0xf]
      %v1668 = vld [vmem:[%s1659 + $0x20] sm:$0xf]
      %v1669 = vld [vmem:[%s1659 + $0x24] sm:$0xf]
      %v1670 = vld [vmem:[%s1659 + $0x28] sm:$0xf]
      %v1671 = vld [vmem:[%s1659 + $0x2c] sm:$0xf]
      %v1672 = vld [vmem:[%s1659 + $0x30] sm:$0xf]
      %v1673 = vld [vmem:[%s1659 + $0x34] sm:$0xf]
      %v1674 = vld [vmem:[%s1659 + $0x38] sm:$0xf]
      %v1675 = vld [vmem:[%s1659 + $0x3c] sm:$0xf]
      %v1692 = vunpack.c.l.b16 %v1660
      %v1693 = vunpack.c.l.b16 %v1661
      %v1694 = vunpack.c.l.b16 %v1662
      %v1695 = vunpack.c.l.b16 %v1663
      %v1696 = vunpack.c.l.b16 %v1664
      %v1697 = vunpack.c.l.b16 %v1665
      %v1698 = vunpack.c.l.b16 %v1666
      %v1699 = vunpack.c.l.b16 %v1667
      %v1700 = vunpack.c.l.b16 %v1668
      %v1701 = vunpack.c.l.b16 %v1669
      %v1702 = vunpack.c.l.b16 %v1670
      %v1703 = vunpack.c.l.b16 %v1671
      %v1704 = vunpack.c.l.b16 %v1672
      %v1705 = vunpack.c.l.b16 %v1673
      %v1706 = vunpack.c.l.b16 %v1674
      %v1707 = vunpack.c.l.b16 %v1675
      %v1708 = vpack.c.b16 %v1693, %v1692
      %v1709 = vpack.c.b16 %v1695, %v1694
      %v1710 = vpack.c.b16 %v1697, %v1696
      %v1711 = vpack.c.b16 %v1699, %v1698
      %v1712 = vpack.c.b16 %v1701, %v1700
      %v1713 = vpack.c.b16 %v1703, %v1702
      %v1714 = vpack.c.b16 %v1705, %v1704
      %v1715 = vpack.c.b16 %v1707, %v1706
      %1724 = vmatprep.subr.bf16.mxu0 0
      %1725 = vmatpush1.bf16.msra.mxu0 %v1708
      %1726 = vmatprep.subr.bf16.mxu0 0
      %1727 = vmatpush1.bf16.msra.mxu0 %v1709
      %1728 = vmatprep.subr.bf16.mxu0 0
      %1729 = vmatpush1.bf16.msra.mxu0 %v1710
      %1730 = vmatprep.subr.bf16.mxu0 0
      %1731 = vmatpush1.bf16.msra.mxu0 %v1711
      %1732 = vmatprep.subr.bf16.mxu0 0
      %1733 = vmatpush1.bf16.msra.mxu0 %v1712
      %1734 = vmatprep.subr.bf16.mxu0 0
      %1735 = vmatpush1.bf16.msra.mxu0 %v1713
      %1736 = vmatprep.subr.bf16.mxu0 0
      %1737 = vmatpush1.bf16.msra.mxu0 %v1714
      %1738 = vmatprep.subr.bf16.mxu0 0
      %1739 = vmatpush1.bf16.msra.mxu0 %v1715
      %1740 = vmatprep.subr.bf16.mxu0 0
      %1741 = vmatpush1.bf16.msra.mxu0 0
      %1742 = vmatprep.subr.bf16.mxu0 0
      %1743 = vmatpush1.bf16.msra.mxu0 0
      %1744 = vmatprep.subr.bf16.mxu0 0
      %1745 = vmatpush1.bf16.msra.mxu0 0
      %1746 = vmatprep.subr.bf16.mxu0 0
      %1747 = vmatpush1.bf16.msra.mxu0 0
      %1748 = vmatprep.subr.bf16.mxu0 0
      %1749 = vmatpush1.bf16.msra.mxu0 0
      %1750 = vmatprep.subr.bf16.mxu0 0
      %1751 = vmatpush1.bf16.msra.mxu0 0
      %1752 = vmatprep.subr.bf16.mxu0 0
      %1753 = vmatpush1.bf16.msra.mxu0 0
      %1754 = vmatprep.subr.bf16.mxu0 0
      %1755 = vmatpush1.bf16.msra.mxu0 0
      %1756 = vmatprep.mubr.bf16.mxu0 0
      %1757 = vmatmul.mubr.bf16.gmra.mrb[0].mxu0 %v1492
      %v1758 = vpop.f32.mrb[0].mxu0
      %v1759 = vadd.f32 0.0, %v1758
      %v1760 = vpop.f32.mrb[0].mxu0
      %v1761 = vpop.f32.mrb[0].mxu0
      %v1762 = vadd.f32 0.0, %v1761
      %v1763 = vpop.f32.mrb[0].mxu0
      %1764 = vmatprep.mubr.bf16.mxu0 0
      %1765 = vmatmul.mubr.bf16.gmra.mrb[0].mxu0 %v1502
      %v1766 = vpop.f32.mrb[0].mxu0
      %v1767 = vadd.f32 0.0, %v1766
      %v1768 = vpop.f32.mrb[0].mxu0
      %v1769 = vpop.f32.mrb[0].mxu0
      %v1770 = vadd.f32 0.0, %v1769
      %v1771 = vpop.f32.mrb[0].mxu0
      %1772 = vmatprep.mubr.bf16.mxu0 0
      %1773 = vmatmul.mubr.bf16.gmra.mrb[0].mxu0 %v1512
      %v1774 = vpop.f32.mrb[0].mxu0
      %v1775 = vadd.f32 0.0, %v1774
      %v1776 = vpop.f32.mrb[0].mxu0
      %v1777 = vpop.f32.mrb[0].mxu0
      %v1778 = vadd.f32 0.0, %v1777
      %v1779 = vpop.f32.mrb[0].mxu0
      %1780 = vmatprep.mubr.bf16.mxu0 0
      %1781 = vmatmul.mubr.bf16.gmra.mrb[0].mxu0 %v1522
      %v1782 = vpop.f32.mrb[0].mxu0
      %v1783 = vadd.f32 0.0, %v1782
      %v1784 = vpop.f32.mrb[0].mxu0
      %v1785 = vpop.f32.mrb[0].mxu0
      %v1786 = vadd.f32 0.0, %v1785
      %v1787 = vpop.f32.mrb[0].mxu0
      %1788 = vmatprep.mubr.bf16.mxu0 0
      %1789 = vmatmul.mubr.bf16.gmra.mrb[0].mxu0 %v1532
      %v1790 = vpop.f32.mrb[0].mxu0
      %v1791 = vadd.f32 0.0, %v1790
      %v1792 = vpop.f32.mrb[0].mxu0
      %v1793 = vpop.f32.mrb[0].mxu0
      %v1794 = vadd.f32 0.0, %v1793
      %v1795 = vpop.f32.mrb[0].mxu0
      %1796 = vmatprep.mubr.bf16.mxu0 0
      %1797 = vmatmul.mubr.bf16.gmra.mrb[0].mxu0 %v1542
      %v1798 = vpop.f32.mrb[0].mxu0
      %v1799 = vadd.f32 0.0, %v1798
      %v1800 = vpop.f32.mrb[0].mxu0
      %v1801 = vpop.f32.mrb[0].mxu0
      %v1802 = vadd.f32 0.0, %v1801
      %v1803 = vpop.f32.mrb[0].mxu0
      %1804 = vmatprep.mubr.bf16.mxu0 0
      %1805 = vmatmul.mubr.bf16.gmra.mrb[0].mxu0 %v1552
      %v1806 = vpop.f32.mrb[0].mxu0
      %v1807 = vadd.f32 0.0, %v1806
      %v1808 = vpop.f32.mrb[0].mxu0
      %v1809 = vpop.f32.mrb[0].mxu0
      %v1810 = vadd.f32 0.0, %v1809
      %v1811 = vpop.f32.mrb[0].mxu0
      %1812 = vmatprep.mubr.bf16.mxu0 0
      %1813 = vmatmul.mubr.bf16.gmra.mrb[0].mxu0 %v1562
      %v1814 = vpop.f32.mrb[0].mxu0
      %v1815 = vadd.f32 0.0, %v1814
      %v1816 = vpop.f32.mrb[0].mxu0
      %v1817 = vpop.f32.mrb[0].mxu0
      %v1818 = vadd.f32 0.0, %v1817
      %v1819 = vpop.f32.mrb[0].mxu0
      %1820 = vmatprep.mubr.bf16.mxu0 0
      %1821 = vmatmul.mubr.bf16.gmra.mrb[0].mxu0 %v1572
      %v1822 = vpop.f32.mrb[0].mxu0
      %v1823 = vadd.f32 0.0, %v1822
      %v1824 = vpop.f32.mrb[0].mxu0
      %v1825 = vpop.f32.mrb[0].mxu0
      %v1826 = vadd.f32 0.0, %v1825
      %v1827 = vpop.f32.mrb[0].mxu0
      %1828 = vmatprep.mubr.bf16.mxu0 0
      %1829 = vmatmul.mubr.bf16.gmra.mrb[0].mxu0 %v1582
      %v1830 = vpop.f32.mrb[0].mxu0
      %v1831 = vadd.f32 0.0, %v1830
      %v1832 = vpop.f32.mrb[0].mxu0
      %v1833 = vpop.f32.mrb[0].mxu0
      %v1834 = vadd.f32 0.0, %v1833
      %v1835 = vpop.f32.mrb[0].mxu0
      %1836 = vmatprep.mubr.bf16.mxu0 0
      %1837 = vmatmul.mubr.bf16.gmra.mrb[0].mxu0 %v1592
      %v1838 = vpop.f32.mrb[0].mxu0
      %v1839 = vadd.f32 0.0, %v1838
      %v1840 = vpop.f32.mrb[0].mxu0
      %v1841 = vpop.f32.mrb[0].mxu0
      %v1842 = vadd.f32 0.0, %v1841
      %v1843 = vpop.f32.mrb[0].mxu0
      %1844 = vmatprep.mubr.bf16.mxu0 0
      %1845 = vmatmul.mubr.bf16.gmra.mrb[0].mxu0 %v1602
      %v1846 = vpop.f32.mrb[0].mxu0
      %v1847 = vadd.f32 0.0, %v1846
      %v1848 = vpop.f32.mrb[0].mxu0
      %v1849 = vpop.f32.mrb[0].mxu0
      %v1850 = vadd.f32 0.0, %v1849
      %v1851 = vpop.f32.mrb[0].mxu0
      %1852 = vmatprep.mubr.bf16.mxu0 0
      %1853 = vmatmul.mubr.bf16.gmra.mrb[0].mxu0 %v1612
      %v1854 = vpop.f32.mrb[0].mxu0
      %v1855 = vadd.f32 0.0, %v1854
      %v1856 = vpop.f32.mrb[0].mxu0
      %v1857 = vpop.f32.mrb[0].mxu0
      %v1858 = vadd.f32 0.0, %v1857
      %v1859 = vpop.f32.mrb[0].mxu0
      %1860 = vmatprep.mubr.bf16.mxu0 0
      %1861 = vmatmul.mubr.bf16.gmra.mrb[0].mxu0 %v1622
      %v1862 = vpop.f32.mrb[0].mxu0
      %v1863 = vadd.f32 0.0, %v1862
      %v1864 = vpop.f32.mrb[0].mxu0
      %v1865 = vpop.f32.mrb[0].mxu0
      %v1866 = vadd.f32 0.0, %v1865
      %v1867 = vpop.f32.mrb[0].mxu0
      %1868 = vmatprep.mubr.bf16.mxu0 0
      %1869 = vmatmul.mubr.bf16.gmra.mrb[0].mxu0 %v1632
      %v1870 = vpop.f32.mrb[0].mxu0
      %v1871 = vadd.f32 0.0, %v1870
      %v1872 = vpop.f32.mrb[0].mxu0
      %v1873 = vpop.f32.mrb[0].mxu0
      %v1874 = vadd.f32 0.0, %v1873
      %v1875 = vpop.f32.mrb[0].mxu0
      %1876 = vmatprep.mubr.bf16.mxu0 0
      %1877 = vmatmul.mubr.bf16.gmra.mrb[0].mxu0 %v1642
      %v1878 = vpop.f32.mrb[0].mxu0
      %v1879 = vadd.f32 0.0, %v1878
      %v1880 = vpop.f32.mrb[0].mxu0
      %v1881 = vpop.f32.mrb[0].mxu0
      %v1882 = vadd.f32 0.0, %v1881
      %v1883 = vpop.f32.mrb[0].mxu0
      %1884 = vdwg.mxu0
      %v1885 = vpack.c.bf16 %v1762, %v1759
      %v1886 = vpack.c.bf16 %v1770, %v1767
      %v1887 = vpack.c.bf16 %v1778, %v1775
      %v1888 = vpack.c.bf16 %v1786, %v1783
      %v1889 = vpack.c.bf16 %v1794, %v1791
      %v1890 = vpack.c.bf16 %v1802, %v1799
      %v1891 = vpack.c.bf16 %v1810, %v1807
      %v1892 = vpack.c.bf16 %v1818, %v1815
      %v1893 = vpack.c.bf16 %v1826, %v1823
      %v1894 = vpack.c.bf16 %v1834, %v1831
      %v1895 = vpack.c.bf16 %v1842, %v1839
      %v1896 = vpack.c.bf16 %v1850, %v1847
      %v1897 = vpack.c.bf16 %v1858, %v1855
      %v1898 = vpack.c.bf16 %v1866, %v1863
      %v1899 = vpack.c.bf16 %v1874, %v1871
      %v1900 = vpack.c.bf16 %v1882, %v1879
      %v1917 = vunpack.c.l.b16 %v1885
      %v1918 = vunpack.c.h.b16 %v1885
      %v1919 = vunpack.c.l.b16 %v1886
      %v1920 = vunpack.c.h.b16 %v1886
      %v1921 = vunpack.c.l.b16 %v1887
      %v1922 = vunpack.c.h.b16 %v1887
      %v1923 = vunpack.c.l.b16 %v1888
      %v1924 = vunpack.c.h.b16 %v1888
      %v1925 = vunpack.c.l.b16 %v1889
      %v1926 = vunpack.c.h.b16 %v1889
      %v1927 = vunpack.c.l.b16 %v1890
      %v1928 = vunpack.c.h.b16 %v1890
      %v1929 = vunpack.c.l.b16 %v1891
      %v1930 = vunpack.c.h.b16 %v1891
      %v1931 = vunpack.c.l.b16 %v1892
      %v1932 = vunpack.c.h.b16 %v1892
      %v1933 = vunpack.c.l.b16 %v1893
      %v1934 = vunpack.c.h.b16 %v1893
      %v1935 = vunpack.c.l.b16 %v1894
      %v1936 = vunpack.c.h.b16 %v1894
      %v1937 = vunpack.c.l.b16 %v1895
      %v1938 = vunpack.c.h.b16 %v1895
      %v1939 = vunpack.c.l.b16 %v1896
      %v1940 = vunpack.c.h.b16 %v1896
      %v1941 = vunpack.c.l.b16 %v1897
      %v1942 = vunpack.c.h.b16 %v1897
      %v1943 = vunpack.c.l.b16 %v1898
      %v1944 = vunpack.c.h.b16 %v1898
      %v1945 = vunpack.c.l.b16 %v1899
      %v1946 = vunpack.c.h.b16 %v1899
      %v1947 = vunpack.c.l.b16 %v1900
      %v1948 = vunpack.c.h.b16 %v1900
      %v1949 = vpack.c.b16 %v1917, %v1917
      %v1950 = vpack.c.b16 %v1918, %v1918
      %v1951 = vpack.c.b16 %v1919, %v1919
      %v1952 = vpack.c.b16 %v1920, %v1920
      %v1953 = vpack.c.b16 %v1921, %v1921
      %v1954 = vpack.c.b16 %v1922, %v1922
      %v1955 = vpack.c.b16 %v1923, %v1923
      %v1956 = vpack.c.b16 %v1924, %v1924
      %v1957 = vpack.c.b16 %v1925, %v1925
      %v1958 = vpack.c.b16 %v1926, %v1926
      %v1959 = vpack.c.b16 %v1927, %v1927
      %v1960 = vpack.c.b16 %v1928, %v1928
      %v1961 = vpack.c.b16 %v1929, %v1929
      %v1962 = vpack.c.b16 %v1930, %v1930
      %v1963 = vpack.c.b16 %v1931, %v1931
      %v1964 = vpack.c.b16 %v1932, %v1932
      %v1965 = vpack.c.b16 %v1933, %v1933
      %v1966 = vpack.c.b16 %v1934, %v1934
      %v1967 = vpack.c.b16 %v1935, %v1935
      %v1968 = vpack.c.b16 %v1936, %v1936
      %v1969 = vpack.c.b16 %v1937, %v1937
      %v1970 = vpack.c.b16 %v1938, %v1938
      %v1971 = vpack.c.b16 %v1939, %v1939
      %v1972 = vpack.c.b16 %v1940, %v1940
      %v1973 = vpack.c.b16 %v1941, %v1941
      %v1974 = vpack.c.b16 %v1942, %v1942
      %v1975 = vpack.c.b16 %v1943, %v1943
      %v1976 = vpack.c.b16 %v1944, %v1944
      %v1977 = vpack.c.b16 %v1945, %v1945
      %v1978 = vpack.c.b16 %v1946, %v1946
      %v1979 = vpack.c.b16 %v1947, %v1947
      %v1980 = vpack.c.b16 %v1948, %v1948
      %s2013 = scalar_lea.vmem %s218, 128
      %2014 = vst.msk [vmem:[%s2013] sm:$0xf] %vm1186, %v1949
      %2015 = vst.msk [vmem:[%s2013 + $0x4] sm:$0xf] %vm1186, %v1950
      %2016 = vst.msk [vmem:[%s2013 + $0x8] sm:$0xf] %vm1186, %v1951
      %2017 = vst.msk [vmem:[%s2013 + $0xc] sm:$0xf] %vm1186, %v1952
      %2018 = vst.msk [vmem:[%s2013 + $0x10] sm:$0xf] %vm1186, %v1953
      %2019 = vst.msk [vmem:[%s2013 + $0x14] sm:$0xf] %vm1186, %v1954
      %2020 = vst.msk [vmem:[%s2013 + $0x18] sm:$0xf] %vm1186, %v1955
      %2021 = vst.msk [vmem:[%s2013 + $0x1c] sm:$0xf] %vm1186, %v1956
      %2022 = vst.msk [vmem:[%s2013 + $0x20] sm:$0xf] %vm1186, %v1957
      %2023 = vst.msk [vmem:[%s2013 + $0x24] sm:$0xf] %vm1186, %v1958
      %2024 = vst.msk [vmem:[%s2013 + $0x28] sm:$0xf] %vm1186, %v1959
      %2025 = vst.msk [vmem:[%s2013 + $0x2c] sm:$0xf] %vm1186, %v1960
      %2026 = vst.msk [vmem:[%s2013 + $0x30] sm:$0xf] %vm1186, %v1961
      %2027 = vst.msk [vmem:[%s2013 + $0x34] sm:$0xf] %vm1186, %v1962
      %2028 = vst.msk [vmem:[%s2013 + $0x38] sm:$0xf] %vm1186, %v1963
      %2029 = vst.msk [vmem:[%s2013 + $0x3c] sm:$0xf] %vm1186, %v1964
      %2030 = vst.msk [vmem:[%s2013 + $0x40] sm:$0xf] %vm1186, %v1965
      %2031 = vst.msk [vmem:[%s2013 + $0x44] sm:$0xf] %vm1186, %v1966
      %2032 = vst.msk [vmem:[%s2013 + $0x48] sm:$0xf] %vm1186, %v1967
      %2033 = vst.msk [vmem:[%s2013 + $0x4c] sm:$0xf] %vm1186, %v1968
      %2034 = vst.msk [vmem:[%s2013 + $0x50] sm:$0xf] %vm1186, %v1969
      %2035 = vst.msk [vmem:[%s2013 + $0x54] sm:$0xf] %vm1186, %v1970
      %2036 = vst.msk [vmem:[%s2013 + $0x58] sm:$0xf] %vm1186, %v1971
      %2037 = vst.msk [vmem:[%s2013 + $0x5c] sm:$0xf] %vm1186, %v1972
      %2038 = vst.msk [vmem:[%s2013 + $0x60] sm:$0xf] %vm1186, %v1973
      %2039 = vst.msk [vmem:[%s2013 + $0x64] sm:$0xf] %vm1186, %v1974
      %2040 = vst.msk [vmem:[%s2013 + $0x68] sm:$0xf] %vm1186, %v1975
      %2041 = vst.msk [vmem:[%s2013 + $0x6c] sm:$0xf] %vm1186, %v1976
      %2042 = vst.msk [vmem:[%s2013 + $0x70] sm:$0xf] %vm1186, %v1977
      %2043 = vst.msk [vmem:[%s2013 + $0x74] sm:$0xf] %vm1186, %v1978
      %2044 = vst.msk [vmem:[%s2013 + $0x78] sm:$0xf] %vm1186, %v1979
      %2045 = vst.msk [vmem:[%s2013 + $0x7c] sm:$0xf] %vm1186, %v1980
      %v2046 = vadd.f32 %v1759, %v1762
      %v2047 = vadd.f32 %v2046, %v1767
      %v2048 = vadd.f32 %v2047, %v1770
      %v2049 = vadd.f32 %v2048, %v1775
      %v2050 = vadd.f32 %v2049, %v1778
      %v2051 = vadd.f32 %v2050, %v1783
      %v2052 = vadd.f32 %v2051, %v1786
      %v2053 = vadd.f32 %v2052, %v1791
      %v2054 = vadd.f32 %v2053, %v1794
      %v2055 = vadd.f32 %v2054, %v1799
      %v2056 = vadd.f32 %v2055, %v1802
      %v2057 = vadd.f32 %v2056, %v1807
      %v2058 = vadd.f32 %v2057, %v1810
      %v2059 = vadd.f32 %v2058, %v1815
      %v2060 = vadd.f32 %v2059, %v1818
      %v2061 = vadd.f32 %v2060, %v1823
      %v2062 = vadd.f32 %v2061, %v1826
      %v2063 = vadd.f32 %v2062, %v1831
      %v2064 = vadd.f32 %v2063, %v1834
      %v2065 = vadd.f32 %v2064, %v1839
      %v2066 = vadd.f32 %v2065, %v1842
      %v2067 = vadd.f32 %v2066, %v1847
      %v2068 = vadd.f32 %v2067, %v1850
      %v2069 = vadd.f32 %v2068, %v1855
      %v2070 = vadd.f32 %v2069, %v1858
      %v2071 = vadd.f32 %v2070, %v1863
      %v2072 = vadd.f32 %v2071, %v1866
      %v2073 = vadd.f32 %v2072, %v1871
      %v2074 = vadd.f32 %v2073, %v1874
      %v2075 = vadd.f32 %v2074, %v1879
      %v2076 = vadd.f32 %v2075, %v1882
      %v2077 = vrot.slane %v2076, 4
      %v2078 = vadd.f32 %v2076, %v2077
      %v2079 = vrot.slane %v2078, 2
      %v2080 = vadd.f32 %v2078, %v2079
      %v2081 = vrot.slane %v2080, 1
      %v2082 = vadd.f32 %v2080, %v2081
      %v2083 = vadd.f32 %v1256, %v2082
      %2084 = vrot.lane.b32.xlu0 %v685, 32
      %v2085 = vpop.permute.xlu0 %2084
      %v2088 = vunpack.c.l.b16 %v278
      %v2089 = vunpack.c.l.b16 %v279
      %v2090 = vpack.c.b16 %v2089, %v2088
      %2091 = vrot.lane.b32.xlu0 %v2090, 64
      %v2092 = vpop.permute.xlu0 %2091
      %v2094 = vunpack.c.l.b16 %v280
      %v2095 = vpack.c.b16 %v2094, %v2094
      %v2097 = vshrl.u32 %v2090, 16
      %v2099 = vshll.u32 %v2090, 16
      %v2101 = vrot.slane %v2099, 1
      %v2102 = vor.u32 %v2097, %v2101
      %v2104 = vshll.u32 %v2095, 16
      %v2106 = vrot.slane %v2104, 1
      %v2107 = vsel %vm409, %v2102, %v2106
      %2108 = vrot.lane.b32.xlu0 %v2107, 96
      %v2109 = vpop.permute.xlu0 %2108
      %v2111 = vsel %vm718, %v638, %v2085
      %v2113 = vsel %vm751, %v2111, %v2092
      %v2115 = vsel %vm784, %v2113, %v2109
      %s2117 = scalar_lea.vmem %s1, 128
      %v2118 = vld [vmem:[%s2117] sm:$0xf]
      %v2119 = vld [vmem:[%s2117 + $0x4] sm:$0xf]
      %v2120 = vld [vmem:[%s2117 + $0x8] sm:$0xf]
      %v2121 = vld [vmem:[%s2117 + $0xc] sm:$0xf]
      %v2122 = vld [vmem:[%s2117 + $0x10] sm:$0xf]
      %v2123 = vld [vmem:[%s2117 + $0x14] sm:$0xf]
      %v2124 = vld [vmem:[%s2117 + $0x18] sm:$0xf]
      %v2125 = vld [vmem:[%s2117 + $0x1c] sm:$0xf]
      %v2126 = vld [vmem:[%s2117 + $0x20] sm:$0xf]
      %v2127 = vld [vmem:[%s2117 + $0x24] sm:$0xf]
      %v2128 = vld [vmem:[%s2117 + $0x28] sm:$0xf]
      %v2129 = vld [vmem:[%s2117 + $0x2c] sm:$0xf]
      %v2130 = vld [vmem:[%s2117 + $0x30] sm:$0xf]
      %v2131 = vld [vmem:[%s2117 + $0x34] sm:$0xf]
      %v2132 = vld [vmem:[%s2117 + $0x38] sm:$0xf]
      %v2133 = vld [vmem:[%s2117 + $0x3c] sm:$0xf]
      %v2150 = vunpack.c.l.b16 %v2118
      %v2151 = vunpack.c.l.b16 %v2119
      %v2152 = vunpack.c.l.b16 %v2120
      %v2153 = vunpack.c.l.b16 %v2121
      %v2154 = vunpack.c.l.b16 %v2122
      %v2155 = vunpack.c.l.b16 %v2123
      %v2156 = vunpack.c.l.b16 %v2124
      %v2157 = vunpack.c.l.b16 %v2125
      %v2158 = vunpack.c.l.b16 %v2126
      %v2159 = vunpack.c.l.b16 %v2127
      %v2160 = vunpack.c.l.b16 %v2128
      %v2161 = vunpack.c.l.b16 %v2129
      %v2162 = vunpack.c.l.b16 %v2130
      %v2163 = vunpack.c.l.b16 %v2131
      %v2164 = vunpack.c.l.b16 %v2132
      %v2165 = vunpack.c.l.b16 %v2133
      %v2166 = vpack.c.b16 %v2151, %v2150
      %v2167 = vpack.c.b16 %v2153, %v2152
      %v2168 = vpack.c.b16 %v2155, %v2154
      %v2169 = vpack.c.b16 %v2157, %v2156
      %v2170 = vpack.c.b16 %v2159, %v2158
      %v2171 = vpack.c.b16 %v2161, %v2160
      %v2172 = vpack.c.b16 %v2163, %v2162
      %v2173 = vpack.c.b16 %v2165, %v2164
      %2182 = vmatprep.subr.bf16.mxu0 0
      %2183 = vmatpush1.bf16.msra.mxu0 %v2166
      %2184 = vmatprep.subr.bf16.mxu0 0
      %2185 = vmatpush1.bf16.msra.mxu0 %v2167
      %2186 = vmatprep.subr.bf16.mxu0 0
      %2187 = vmatpush1.bf16.msra.mxu0 %v2168
      %2188 = vmatprep.subr.bf16.mxu0 0
      %2189 = vmatpush1.bf16.msra.mxu0 %v2169
      %2190 = vmatprep.subr.bf16.mxu0 0
      %2191 = vmatpush1.bf16.msra.mxu0 %v2170
      %2192 = vmatprep.subr.bf16.mxu0 0
      %2193 = vmatpush1.bf16.msra.mxu0 %v2171
      %2194 = vmatprep.subr.bf16.mxu0 0
      %2195 = vmatpush1.bf16.msra.mxu0 %v2172
      %2196 = vmatprep.subr.bf16.mxu0 0
      %2197 = vmatpush1.bf16.msra.mxu0 %v2173
      %2198 = vmatprep.subr.bf16.mxu0 0
      %2199 = vmatpush1.bf16.msra.mxu0 0
      %2200 = vmatprep.subr.bf16.mxu0 0
      %2201 = vmatpush1.bf16.msra.mxu0 0
      %2202 = vmatprep.subr.bf16.mxu0 0
      %2203 = vmatpush1.bf16.msra.mxu0 0
      %2204 = vmatprep.subr.bf16.mxu0 0
      %2205 = vmatpush1.bf16.msra.mxu0 0
      %2206 = vmatprep.subr.bf16.mxu0 0
      %2207 = vmatpush1.bf16.msra.mxu0 0
      %2208 = vmatprep.subr.bf16.mxu0 0
      %2209 = vmatpush1.bf16.msra.mxu0 0
      %2210 = vmatprep.subr.bf16.mxu0 0
      %2211 = vmatpush1.bf16.msra.mxu0 0
      %2212 = vmatprep.subr.bf16.mxu0 0
      %2213 = vmatpush1.bf16.msra.mxu0 0
      %2214 = vmatprep.mubr.bf16.mxu0 0
      %2215 = vmatmul.mubr.bf16.gmra.mrb[0].mxu0 %v789
      %v2216 = vpop.f32.mrb[0].mxu0
      %v2217 = vadd.f32 0.0, %v2216
      %v2218 = vpop.f32.mrb[0].mxu0
      %v2219 = vpop.f32.mrb[0].mxu0
      %v2220 = vadd.f32 0.0, %v2219
      %v2221 = vpop.f32.mrb[0].mxu0
      %2222 = vmatprep.mubr.bf16.mxu0 0
      %2223 = vmatmul.mubr.bf16.gmra.mrb[0].mxu0 %v792
      %v2224 = vpop.f32.mrb[0].mxu0
      %v2225 = vadd.f32 0.0, %v2224
      %v2226 = vpop.f32.mrb[0].mxu0
      %v2227 = vpop.f32.mrb[0].mxu0
      %v2228 = vadd.f32 0.0, %v2227
      %v2229 = vpop.f32.mrb[0].mxu0
      %2230 = vmatprep.mubr.bf16.mxu0 0
      %2231 = vmatmul.mubr.bf16.gmra.mrb[0].mxu0 %v795
      %v2232 = vpop.f32.mrb[0].mxu0
      %v2233 = vadd.f32 0.0, %v2232
      %v2234 = vpop.f32.mrb[0].mxu0
      %v2235 = vpop.f32.mrb[0].mxu0
      %v2236 = vadd.f32 0.0, %v2235
      %v2237 = vpop.f32.mrb[0].mxu0
      %2238 = vmatprep.mubr.bf16.mxu0 0
      %2239 = vmatmul.mubr.bf16.gmra.mrb[0].mxu0 %v798
      %v2240 = vpop.f32.mrb[0].mxu0
      %v2241 = vadd.f32 0.0, %v2240
      %v2242 = vpop.f32.mrb[0].mxu0
      %v2243 = vpop.f32.mrb[0].mxu0
      %v2244 = vadd.f32 0.0, %v2243
      %v2245 = vpop.f32.mrb[0].mxu0
      %2246 = vmatprep.mubr.bf16.mxu0 0
      %2247 = vmatmul.mubr.bf16.gmra.mrb[0].mxu0 %v801
      %v2248 = vpop.f32.mrb[0].mxu0
      %v2249 = vadd.f32 0.0, %v2248
      %v2250 = vpop.f32.mrb[0].mxu0
      %v2251 = vpop.f32.mrb[0].mxu0
      %v2252 = vadd.f32 0.0, %v2251
      %v2253 = vpop.f32.mrb[0].mxu0
      %2254 = vmatprep.mubr.bf16.mxu0 0
      %2255 = vmatmul.mubr.bf16.gmra.mrb[0].mxu0 %v804
      %v2256 = vpop.f32.mrb[0].mxu0
      %v2257 = vadd.f32 0.0, %v2256
      %v2258 = vpop.f32.mrb[0].mxu0
      %v2259 = vpop.f32.mrb[0].mxu0
      %v2260 = vadd.f32 0.0, %v2259
      %v2261 = vpop.f32.mrb[0].mxu0
      %2262 = vmatprep.mubr.bf16.mxu0 0
      %2263 = vmatmul.mubr.bf16.gmra.mrb[0].mxu0 %v807
      %v2264 = vpop.f32.mrb[0].mxu0
      %v2265 = vadd.f32 0.0, %v2264
      %v2266 = vpop.f32.mrb[0].mxu0
      %v2267 = vpop.f32.mrb[0].mxu0
      %v2268 = vadd.f32 0.0, %v2267
      %v2269 = vpop.f32.mrb[0].mxu0
      %2270 = vmatprep.mubr.bf16.mxu0 0
      %2271 = vmatmul.mubr.bf16.gmra.mrb[0].mxu0 %v810
      %v2272 = vpop.f32.mrb[0].mxu0
      %v2273 = vadd.f32 0.0, %v2272
      %v2274 = vpop.f32.mrb[0].mxu0
      %v2275 = vpop.f32.mrb[0].mxu0
      %v2276 = vadd.f32 0.0, %v2275
      %v2277 = vpop.f32.mrb[0].mxu0
      %2278 = vmatprep.mubr.bf16.mxu0 0
      %2279 = vmatmul.mubr.bf16.gmra.mrb[0].mxu0 %v813
      %v2280 = vpop.f32.mrb[0].mxu0
      %v2281 = vadd.f32 0.0, %v2280
      %v2282 = vpop.f32.mrb[0].mxu0
      %v2283 = vpop.f32.mrb[0].mxu0
      %v2284 = vadd.f32 0.0, %v2283
      %v2285 = vpop.f32.mrb[0].mxu0
      %2286 = vmatprep.mubr.bf16.mxu0 0
      %2287 = vmatmul.mubr.bf16.gmra.mrb[0].mxu0 %v816
      %v2288 = vpop.f32.mrb[0].mxu0
      %v2289 = vadd.f32 0.0, %v2288
      %v2290 = vpop.f32.mrb[0].mxu0
      %v2291 = vpop.f32.mrb[0].mxu0
      %v2292 = vadd.f32 0.0, %v2291
      %v2293 = vpop.f32.mrb[0].mxu0
      %2294 = vmatprep.mubr.bf16.mxu0 0
      %2295 = vmatmul.mubr.bf16.gmra.mrb[0].mxu0 %v819
      %v2296 = vpop.f32.mrb[0].mxu0
      %v2297 = vadd.f32 0.0, %v2296
      %v2298 = vpop.f32.mrb[0].mxu0
      %v2299 = vpop.f32.mrb[0].mxu0
      %v2300 = vadd.f32 0.0, %v2299
      %v2301 = vpop.f32.mrb[0].mxu0
      %2302 = vmatprep.mubr.bf16.mxu0 0
      %2303 = vmatmul.mubr.bf16.gmra.mrb[0].mxu0 %v822
      %v2304 = vpop.f32.mrb[0].mxu0
      %v2305 = vadd.f32 0.0, %v2304
      %v2306 = vpop.f32.mrb[0].mxu0
      %v2307 = vpop.f32.mrb[0].mxu0
      %v2308 = vadd.f32 0.0, %v2307
      %v2309 = vpop.f32.mrb[0].mxu0
      %2310 = vmatprep.mubr.bf16.mxu0 0
      %2311 = vmatmul.mubr.bf16.gmra.mrb[0].mxu0 %v825
      %v2312 = vpop.f32.mrb[0].mxu0
      %v2313 = vadd.f32 0.0, %v2312
      %v2314 = vpop.f32.mrb[0].mxu0
      %v2315 = vpop.f32.mrb[0].mxu0
      %v2316 = vadd.f32 0.0, %v2315
      %v2317 = vpop.f32.mrb[0].mxu0
      %2318 = vmatprep.mubr.bf16.mxu0 0
      %2319 = vmatmul.mubr.bf16.gmra.mrb[0].mxu0 %v828
      %v2320 = vpop.f32.mrb[0].mxu0
      %v2321 = vadd.f32 0.0, %v2320
      %v2322 = vpop.f32.mrb[0].mxu0
      %v2323 = vpop.f32.mrb[0].mxu0
      %v2324 = vadd.f32 0.0, %v2323
      %v2325 = vpop.f32.mrb[0].mxu0
      %2326 = vmatprep.mubr.bf16.mxu0 0
      %2327 = vmatmul.mubr.bf16.gmra.mrb[0].mxu0 %v831
      %v2328 = vpop.f32.mrb[0].mxu0
      %v2329 = vadd.f32 0.0, %v2328
      %v2330 = vpop.f32.mrb[0].mxu0
      %v2331 = vpop.f32.mrb[0].mxu0
      %v2332 = vadd.f32 0.0, %v2331
      %v2333 = vpop.f32.mrb[0].mxu0
      %2334 = vmatprep.mubr.bf16.mxu0 0
      %2335 = vmatmul.mubr.bf16.gmra.mrb[0].mxu0 %v2115
      %v2336 = vpop.f32.mrb[0].mxu0
      %v2337 = vadd.f32 0.0, %v2336
      %v2338 = vpop.f32.mrb[0].mxu0
      %v2339 = vpop.f32.mrb[0].mxu0
      %v2340 = vadd.f32 0.0, %v2339
      %v2341 = vpop.f32.mrb[0].mxu0
      %2342 = vdwg.mxu0
      %v2343 = vpack.c.bf16 %v2220, %v2217
      %v2344 = vpack.c.bf16 %v2228, %v2225
      %v2345 = vpack.c.bf16 %v2236, %v2233
      %v2346 = vpack.c.bf16 %v2244, %v2241
      %v2347 = vpack.c.bf16 %v2252, %v2249
      %v2348 = vpack.c.bf16 %v2260, %v2257
      %v2349 = vpack.c.bf16 %v2268, %v2265
      %v2350 = vpack.c.bf16 %v2276, %v2273
      %v2351 = vpack.c.bf16 %v2284, %v2281
      %v2352 = vpack.c.bf16 %v2292, %v2289
      %v2353 = vpack.c.bf16 %v2300, %v2297
      %v2354 = vpack.c.bf16 %v2308, %v2305
      %v2355 = vpack.c.bf16 %v2316, %v2313
      %v2356 = vpack.c.bf16 %v2324, %v2321
      %v2357 = vpack.c.bf16 %v2332, %v2329
      %v2358 = vpack.c.bf16 %v2340, %v2337
      %v2375 = vunpack.c.l.b16 %v2343
      %v2376 = vunpack.c.h.b16 %v2343
      %v2377 = vunpack.c.l.b16 %v2344
      %v2378 = vunpack.c.h.b16 %v2344
      %v2379 = vunpack.c.l.b16 %v2345
      %v2380 = vunpack.c.h.b16 %v2345
      %v2381 = vunpack.c.l.b16 %v2346
      %v2382 = vunpack.c.h.b16 %v2346
      %v2383 = vunpack.c.l.b16 %v2347
      %v2384 = vunpack.c.h.b16 %v2347
      %v2385 = vunpack.c.l.b16 %v2348
      %v2386 = vunpack.c.h.b16 %v2348
      %v2387 = vunpack.c.l.b16 %v2349
      %v2388 = vunpack.c.h.b16 %v2349
      %v2389 = vunpack.c.l.b16 %v2350
      %v2390 = vunpack.c.h.b16 %v2350
      %v2391 = vunpack.c.l.b16 %v2351
      %v2392 = vunpack.c.h.b16 %v2351
      %v2393 = vunpack.c.l.b16 %v2352
      %v2394 = vunpack.c.h.b16 %v2352
      %v2395 = vunpack.c.l.b16 %v2353
      %v2396 = vunpack.c.h.b16 %v2353
      %v2397 = vunpack.c.l.b16 %v2354
      %v2398 = vunpack.c.h.b16 %v2354
      %v2399 = vunpack.c.l.b16 %v2355
      %v2400 = vunpack.c.h.b16 %v2355
      %v2401 = vunpack.c.l.b16 %v2356
      %v2402 = vunpack.c.h.b16 %v2356
      %v2403 = vunpack.c.l.b16 %v2357
      %v2404 = vunpack.c.h.b16 %v2357
      %v2405 = vunpack.c.l.b16 %v2358
      %v2406 = vunpack.c.h.b16 %v2358
      %v2407 = vpack.c.b16 %v2375, %v2375
      %v2408 = vpack.c.b16 %v2376, %v2376
      %v2409 = vpack.c.b16 %v2377, %v2377
      %v2410 = vpack.c.b16 %v2378, %v2378
      %v2411 = vpack.c.b16 %v2379, %v2379
      %v2412 = vpack.c.b16 %v2380, %v2380
      %v2413 = vpack.c.b16 %v2381, %v2381
      %v2414 = vpack.c.b16 %v2382, %v2382
      %v2415 = vpack.c.b16 %v2383, %v2383
      %v2416 = vpack.c.b16 %v2384, %v2384
      %v2417 = vpack.c.b16 %v2385, %v2385
      %v2418 = vpack.c.b16 %v2386, %v2386
      %v2419 = vpack.c.b16 %v2387, %v2387
      %v2420 = vpack.c.b16 %v2388, %v2388
      %v2421 = vpack.c.b16 %v2389, %v2389
      %v2422 = vpack.c.b16 %v2390, %v2390
      %v2423 = vpack.c.b16 %v2391, %v2391
      %v2424 = vpack.c.b16 %v2392, %v2392
      %v2425 = vpack.c.b16 %v2393, %v2393
      %v2426 = vpack.c.b16 %v2394, %v2394
      %v2427 = vpack.c.b16 %v2395, %v2395
      %v2428 = vpack.c.b16 %v2396, %v2396
      %v2429 = vpack.c.b16 %v2397, %v2397
      %v2430 = vpack.c.b16 %v2398, %v2398
      %v2431 = vpack.c.b16 %v2399, %v2399
      %v2432 = vpack.c.b16 %v2400, %v2400
      %v2433 = vpack.c.b16 %v2401, %v2401
      %v2434 = vpack.c.b16 %v2402, %v2402
      %v2435 = vpack.c.b16 %v2403, %v2403
      %v2436 = vpack.c.b16 %v2404, %v2404
      %v2437 = vpack.c.b16 %v2405, %v2405
      %v2438 = vpack.c.b16 %v2406, %v2406
      %s2471 = scalar_lea.vmem %s218, 256
      %2472 = vst.msk [vmem:[%s2471] sm:$0xf] %vm1186, %v2407
      %2473 = vst.msk [vmem:[%s2471 + $0x4] sm:$0xf] %vm1186, %v2408
      %2474 = vst.msk [vmem:[%s2471 + $0x8] sm:$0xf] %vm1186, %v2409
      %2475 = vst.msk [vmem:[%s2471 + $0xc] sm:$0xf] %vm1186, %v2410
      %2476 = vst.msk [vmem:[%s2471 + $0x10] sm:$0xf] %vm1186, %v2411
      %2477 = vst.msk [vmem:[%s2471 + $0x14] sm:$0xf] %vm1186, %v2412
      %2478 = vst.msk [vmem:[%s2471 + $0x18] sm:$0xf] %vm1186, %v2413
      %2479 = vst.msk [vmem:[%s2471 + $0x1c] sm:$0xf] %vm1186, %v2414
      %2480 = vst.msk [vmem:[%s2471 + $0x20] sm:$0xf] %vm1186, %v2415
      %2481 = vst.msk [vmem:[%s2471 + $0x24] sm:$0xf] %vm1186, %v2416
      %2482 = vst.msk [vmem:[%s2471 + $0x28] sm:$0xf] %vm1186, %v2417
      %2483 = vst.msk [vmem:[%s2471 + $0x2c] sm:$0xf] %vm1186, %v2418
      %2484 = vst.msk [vmem:[%s2471 + $0x30] sm:$0xf] %vm1186, %v2419
      %2485 = vst.msk [vmem:[%s2471 + $0x34] sm:$0xf] %vm1186, %v2420
      %2486 = vst.msk [vmem:[%s2471 + $0x38] sm:$0xf] %vm1186, %v2421
      %2487 = vst.msk [vmem:[%s2471 + $0x3c] sm:$0xf] %vm1186, %v2422
      %2488 = vst.msk [vmem:[%s2471 + $0x40] sm:$0xf] %vm1186, %v2423
      %2489 = vst.msk [vmem:[%s2471 + $0x44] sm:$0xf] %vm1186, %v2424
      %2490 = vst.msk [vmem:[%s2471 + $0x48] sm:$0xf] %vm1186, %v2425
      %2491 = vst.msk [vmem:[%s2471 + $0x4c] sm:$0xf] %vm1186, %v2426
      %2492 = vst.msk [vmem:[%s2471 + $0x50] sm:$0xf] %vm1186, %v2427
      %2493 = vst.msk [vmem:[%s2471 + $0x54] sm:$0xf] %vm1186, %v2428
      %2494 = vst.msk [vmem:[%s2471 + $0x58] sm:$0xf] %vm1186, %v2429
      %2495 = vst.msk [vmem:[%s2471 + $0x5c] sm:$0xf] %vm1186, %v2430
      %2496 = vst.msk [vmem:[%s2471 + $0x60] sm:$0xf] %vm1186, %v2431
      %2497 = vst.msk [vmem:[%s2471 + $0x64] sm:$0xf] %vm1186, %v2432
      %2498 = vst.msk [vmem:[%s2471 + $0x68] sm:$0xf] %vm1186, %v2433
      %2499 = vst.msk [vmem:[%s2471 + $0x6c] sm:$0xf] %vm1186, %v2434
      %2500 = vst.msk [vmem:[%s2471 + $0x70] sm:$0xf] %vm1186, %v2435
      %2501 = vst.msk [vmem:[%s2471 + $0x74] sm:$0xf] %vm1186, %v2436
      %2502 = vst.msk [vmem:[%s2471 + $0x78] sm:$0xf] %vm1186, %v2437
      %2503 = vst.msk [vmem:[%s2471 + $0x7c] sm:$0xf] %vm1186, %v2438
      %v2504 = vadd.f32 %v2217, %v2220
      %v2505 = vadd.f32 %v2504, %v2225
      %v2506 = vadd.f32 %v2505, %v2228
      %v2507 = vadd.f32 %v2506, %v2233
      %v2508 = vadd.f32 %v2507, %v2236
      %v2509 = vadd.f32 %v2508, %v2241
      %v2510 = vadd.f32 %v2509, %v2244
      %v2511 = vadd.f32 %v2510, %v2249
      %v2512 = vadd.f32 %v2511, %v2252
      %v2513 = vadd.f32 %v2512, %v2257
      %v2514 = vadd.f32 %v2513, %v2260
      %v2515 = vadd.f32 %v2514, %v2265
      %v2516 = vadd.f32 %v2515, %v2268
      %v2517 = vadd.f32 %v2516, %v2273
      %v2518 = vadd.f32 %v2517, %v2276
      %v2519 = vadd.f32 %v2518, %v2281
      %v2520 = vadd.f32 %v2519, %v2284
      %v2521 = vadd.f32 %v2520, %v2289
      %v2522 = vadd.f32 %v2521, %v2292
      %v2523 = vadd.f32 %v2522, %v2297
      %v2524 = vadd.f32 %v2523, %v2300
      %v2525 = vadd.f32 %v2524, %v2305
      %v2526 = vadd.f32 %v2525, %v2308
      %v2527 = vadd.f32 %v2526, %v2313
      %v2528 = vadd.f32 %v2527, %v2316
      %v2529 = vadd.f32 %v2528, %v2321
      %v2530 = vadd.f32 %v2529, %v2324
      %v2531 = vadd.f32 %v2530, %v2329
      %v2532 = vadd.f32 %v2531, %v2332
      %v2533 = vadd.f32 %v2532, %v2337
      %v2534 = vadd.f32 %v2533, %v2340
      %v2535 = vrot.slane %v2534, 4
      %v2536 = vadd.f32 %v2534, %v2535
      %v2537 = vrot.slane %v2536, 2
      %v2538 = vadd.f32 %v2536, %v2537
      %v2539 = vrot.slane %v2538, 1
      %v2540 = vadd.f32 %v2538, %v2539
      %v2541 = vadd.f32 %v2083, %v2540
      %2542 = vrot.lane.b32.xlu0 %v1353, 32
      %v2543 = vpop.permute.xlu0 %2542
      %2544 = vrot.lane.b32.xlu0 %v2095, 64
      %v2545 = vpop.permute.xlu0 %2544
      %v2546 = vshrl.u32 %v2095, 16
      %2548 = vrot.lane.b32.xlu0 %v2546, 96
      %v2549 = vpop.permute.xlu0 %2548
      %v2551 = vsel %vm718, %v673, %v2543
      %v2553 = vsel %vm751, %v2551, %v2545
      %v2555 = vsel %vm784, %v2553, %v2549
      %v2556 = vshrl.u32 %v2115, 16
      %v2558 = vshll.u32 %v2115, 16
      %v2560 = vrot.slane %v2558, 1
      %v2561 = vor.u32 %v2556, %v2560
      %v2562 = vshll.u32 %v2555, 16
      %v2564 = vrot.slane %v2562, 1
      %v2565 = vsel %vm409, %v2561, %v2564
      %s2567 = scalar_lea.vmem %s1, 192
      %v2568 = vld [vmem:[%s2567] sm:$0xf]
      %v2569 = vld [vmem:[%s2567 + $0x4] sm:$0xf]
      %v2570 = vld [vmem:[%s2567 + $0x8] sm:$0xf]
      %v2571 = vld [vmem:[%s2567 + $0xc] sm:$0xf]
      %v2572 = vld [vmem:[%s2567 + $0x10] sm:$0xf]
      %v2573 = vld [vmem:[%s2567 + $0x14] sm:$0xf]
      %v2574 = vld [vmem:[%s2567 + $0x18] sm:$0xf]
      %v2575 = vld [vmem:[%s2567 + $0x1c] sm:$0xf]
      %v2576 = vld [vmem:[%s2567 + $0x20] sm:$0xf]
      %v2577 = vld [vmem:[%s2567 + $0x24] sm:$0xf]
      %v2578 = vld [vmem:[%s2567 + $0x28] sm:$0xf]
      %v2579 = vld [vmem:[%s2567 + $0x2c] sm:$0xf]
      %v2580 = vld [vmem:[%s2567 + $0x30] sm:$0xf]
      %v2581 = vld [vmem:[%s2567 + $0x34] sm:$0xf]
      %v2582 = vld [vmem:[%s2567 + $0x38] sm:$0xf]
      %v2583 = vld [vmem:[%s2567 + $0x3c] sm:$0xf]
      %v2600 = vunpack.c.l.b16 %v2568
      %v2601 = vunpack.c.l.b16 %v2569
      %v2602 = vunpack.c.l.b16 %v2570
      %v2603 = vunpack.c.l.b16 %v2571
      %v2604 = vunpack.c.l.b16 %v2572
      %v2605 = vunpack.c.l.b16 %v2573
      %v2606 = vunpack.c.l.b16 %v2574
      %v2607 = vunpack.c.l.b16 %v2575
      %v2608 = vunpack.c.l.b16 %v2576
      %v2609 = vunpack.c.l.b16 %v2577
      %v2610 = vunpack.c.l.b16 %v2578
      %v2611 = vunpack.c.l.b16 %v2579
      %v2612 = vunpack.c.l.b16 %v2580
      %v2613 = vunpack.c.l.b16 %v2581
      %v2614 = vunpack.c.l.b16 %v2582
      %v2615 = vunpack.c.l.b16 %v2583
      %v2616 = vpack.c.b16 %v2601, %v2600
      %v2617 = vpack.c.b16 %v2603, %v2602
      %v2618 = vpack.c.b16 %v2605, %v2604
      %v2619 = vpack.c.b16 %v2607, %v2606
      %v2620 = vpack.c.b16 %v2609, %v2608
      %v2621 = vpack.c.b16 %v2611, %v2610
      %v2622 = vpack.c.b16 %v2613, %v2612
      %v2623 = vpack.c.b16 %v2615, %v2614
      %2632 = vmatprep.subr.bf16.mxu0 0
      %2633 = vmatpush1.bf16.msra.mxu0 %v2616
      %2634 = vmatprep.subr.bf16.mxu0 0
      %2635 = vmatpush1.bf16.msra.mxu0 %v2617
      %2636 = vmatprep.subr.bf16.mxu0 0
      %2637 = vmatpush1.bf16.msra.mxu0 %v2618
      %2638 = vmatprep.subr.bf16.mxu0 0
      %2639 = vmatpush1.bf16.msra.mxu0 %v2619
      %2640 = vmatprep.subr.bf16.mxu0 0
      %2641 = vmatpush1.bf16.msra.mxu0 %v2620
      %2642 = vmatprep.subr.bf16.mxu0 0
      %2643 = vmatpush1.bf16.msra.mxu0 %v2621
      %2644 = vmatprep.subr.bf16.mxu0 0
      %2645 = vmatpush1.bf16.msra.mxu0 %v2622
      %2646 = vmatprep.subr.bf16.mxu0 0
      %2647 = vmatpush1.bf16.msra.mxu0 %v2623
      %2648 = vmatprep.subr.bf16.mxu0 0
      %2649 = vmatpush1.bf16.msra.mxu0 0
      %2650 = vmatprep.subr.bf16.mxu0 0
      %2651 = vmatpush1.bf16.msra.mxu0 0
      %2652 = vmatprep.subr.bf16.mxu0 0
      %2653 = vmatpush1.bf16.msra.mxu0 0
      %2654 = vmatprep.subr.bf16.mxu0 0
      %2655 = vmatpush1.bf16.msra.mxu0 0
      %2656 = vmatprep.subr.bf16.mxu0 0
      %2657 = vmatpush1.bf16.msra.mxu0 0
      %2658 = vmatprep.subr.bf16.mxu0 0
      %2659 = vmatpush1.bf16.msra.mxu0 0
      %2660 = vmatprep.subr.bf16.mxu0 0
      %2661 = vmatpush1.bf16.msra.mxu0 0
      %2662 = vmatprep.subr.bf16.mxu0 0
      %2663 = vmatpush1.bf16.msra.mxu0 0
      %2664 = vmatprep.mubr.bf16.mxu0 0
      %2665 = vmatmul.mubr.bf16.gmra.mrb[0].mxu0 %v1502
      %v2666 = vpop.f32.mrb[0].mxu0
      %v2667 = vadd.f32 0.0, %v2666
      %v2668 = vpop.f32.mrb[0].mxu0
      %v2669 = vpop.f32.mrb[0].mxu0
      %v2670 = vadd.f32 0.0, %v2669
      %v2671 = vpop.f32.mrb[0].mxu0
      %2672 = vmatprep.mubr.bf16.mxu0 0
      %2673 = vmatmul.mubr.bf16.gmra.mrb[0].mxu0 %v1512
      %v2674 = vpop.f32.mrb[0].mxu0
      %v2675 = vadd.f32 0.0, %v2674
      %v2676 = vpop.f32.mrb[0].mxu0
      %v2677 = vpop.f32.mrb[0].mxu0
      %v2678 = vadd.f32 0.0, %v2677
      %v2679 = vpop.f32.mrb[0].mxu0
      %2680 = vmatprep.mubr.bf16.mxu0 0
      %2681 = vmatmul.mubr.bf16.gmra.mrb[0].mxu0 %v1522
      %v2682 = vpop.f32.mrb[0].mxu0
      %v2683 = vadd.f32 0.0, %v2682
      %v2684 = vpop.f32.mrb[0].mxu0
      %v2685 = vpop.f32.mrb[0].mxu0
      %v2686 = vadd.f32 0.0, %v2685
      %v2687 = vpop.f32.mrb[0].mxu0
      %2688 = vmatprep.mubr.bf16.mxu0 0
      %2689 = vmatmul.mubr.bf16.gmra.mrb[0].mxu0 %v1532
      %v2690 = vpop.f32.mrb[0].mxu0
      %v2691 = vadd.f32 0.0, %v2690
      %v2692 = vpop.f32.mrb[0].mxu0
      %v2693 = vpop.f32.mrb[0].mxu0
      %v2694 = vadd.f32 0.0, %v2693
      %v2695 = vpop.f32.mrb[0].mxu0
      %2696 = vmatprep.mubr.bf16.mxu0 0
      %2697 = vmatmul.mubr.bf16.gmra.mrb[0].mxu0 %v1542
      %v2698 = vpop.f32.mrb[0].mxu0
      %v2699 = vadd.f32 0.0, %v2698
      %v2700 = vpop.f32.mrb[0].mxu0
      %v2701 = vpop.f32.mrb[0].mxu0
      %v2702 = vadd.f32 0.0, %v2701
      %v2703 = vpop.f32.mrb[0].mxu0
      %2704 = vmatprep.mubr.bf16.mxu0 0
      %2705 = vmatmul.mubr.bf16.gmra.mrb[0].mxu0 %v1552
      %v2706 = vpop.f32.mrb[0].mxu0
      %v2707 = vadd.f32 0.0, %v2706
      %v2708 = vpop.f32.mrb[0].mxu0
      %v2709 = vpop.f32.mrb[0].mxu0
      %v2710 = vadd.f32 0.0, %v2709
      %v2711 = vpop.f32.mrb[0].mxu0
      %2712 = vmatprep.mubr.bf16.mxu0 0
      %2713 = vmatmul.mubr.bf16.gmra.mrb[0].mxu0 %v1562
      %v2714 = vpop.f32.mrb[0].mxu0
      %v2715 = vadd.f32 0.0, %v2714
      %v2716 = vpop.f32.mrb[0].mxu0
      %v2717 = vpop.f32.mrb[0].mxu0
      %v2718 = vadd.f32 0.0, %v2717
      %v2719 = vpop.f32.mrb[0].mxu0
      %2720 = vmatprep.mubr.bf16.mxu0 0
      %2721 = vmatmul.mubr.bf16.gmra.mrb[0].mxu0 %v1572
      %v2722 = vpop.f32.mrb[0].mxu0
      %v2723 = vadd.f32 0.0, %v2722
      %v2724 = vpop.f32.mrb[0].mxu0
      %v2725 = vpop.f32.mrb[0].mxu0
      %v2726 = vadd.f32 0.0, %v2725
      %v2727 = vpop.f32.mrb[0].mxu0
      %2728 = vmatprep.mubr.bf16.mxu0 0
      %2729 = vmatmul.mubr.bf16.gmra.mrb[0].mxu0 %v1582
      %v2730 = vpop.f32.mrb[0].mxu0
      %v2731 = vadd.f32 0.0, %v2730
      %v2732 = vpop.f32.mrb[0].mxu0
      %v2733 = vpop.f32.mrb[0].mxu0
      %v2734 = vadd.f32 0.0, %v2733
      %v2735 = vpop.f32.mrb[0].mxu0
      %2736 = vmatprep.mubr.bf16.mxu0 0
      %2737 = vmatmul.mubr.bf16.gmra.mrb[0].mxu0 %v1592
      %v2738 = vpop.f32.mrb[0].mxu0
      %v2739 = vadd.f32 0.0, %v2738
      %v2740 = vpop.f32.mrb[0].mxu0
      %v2741 = vpop.f32.mrb[0].mxu0
      %v2742 = vadd.f32 0.0, %v2741
      %v2743 = vpop.f32.mrb[0].mxu0
      %2744 = vmatprep.mubr.bf16.mxu0 0
      %2745 = vmatmul.mubr.bf16.gmra.mrb[0].mxu0 %v1602
      %v2746 = vpop.f32.mrb[0].mxu0
      %v2747 = vadd.f32 0.0, %v2746
      %v2748 = vpop.f32.mrb[0].mxu0
      %v2749 = vpop.f32.mrb[0].mxu0
      %v2750 = vadd.f32 0.0, %v2749
      %v2751 = vpop.f32.mrb[0].mxu0
      %2752 = vmatprep.mubr.bf16.mxu0 0
      %2753 = vmatmul.mubr.bf16.gmra.mrb[0].mxu0 %v1612
      %v2754 = vpop.f32.mrb[0].mxu0
      %v2755 = vadd.f32 0.0, %v2754
      %v2756 = vpop.f32.mrb[0].mxu0
      %v2757 = vpop.f32.mrb[0].mxu0
      %v2758 = vadd.f32 0.0, %v2757
      %v2759 = vpop.f32.mrb[0].mxu0
      %2760 = vmatprep.mubr.bf16.mxu0 0
      %2761 = vmatmul.mubr.bf16.gmra.mrb[0].mxu0 %v1622
      %v2762 = vpop.f32.mrb[0].mxu0
      %v2763 = vadd.f32 0.0, %v2762
      %v2764 = vpop.f32.mrb[0].mxu0
      %v2765 = vpop.f32.mrb[0].mxu0
      %v2766 = vadd.f32 0.0, %v2765
      %v2767 = vpop.f32.mrb[0].mxu0
      %2768 = vmatprep.mubr.bf16.mxu0 0
      %2769 = vmatmul.mubr.bf16.gmra.mrb[0].mxu0 %v1632
      %v2770 = vpop.f32.mrb[0].mxu0
      %v2771 = vadd.f32 0.0, %v2770
      %v2772 = vpop.f32.mrb[0].mxu0
      %v2773 = vpop.f32.mrb[0].mxu0
      %v2774 = vadd.f32 0.0, %v2773
      %v2775 = vpop.f32.mrb[0].mxu0
      %2776 = vmatprep.mubr.bf16.mxu0 0
      %2777 = vmatmul.mubr.bf16.gmra.mrb[0].mxu0 %v1642
      %v2778 = vpop.f32.mrb[0].mxu0
      %v2779 = vadd.f32 0.0, %v2778
      %v2780 = vpop.f32.mrb[0].mxu0
      %v2781 = vpop.f32.mrb[0].mxu0
      %v2782 = vadd.f32 0.0, %v2781
      %v2783 = vpop.f32.mrb[0].mxu0
      %2784 = vmatprep.mubr.bf16.mxu0 0
      %2785 = vmatmul.mubr.bf16.gmra.mrb[0].mxu0 %v2565
      %v2786 = vpop.f32.mrb[0].mxu0
      %v2787 = vadd.f32 0.0, %v2786
      %v2788 = vpop.f32.mrb[0].mxu0
      %v2789 = vpop.f32.mrb[0].mxu0
      %v2790 = vadd.f32 0.0, %v2789
      %v2791 = vpop.f32.mrb[0].mxu0
      %2792 = vdwg.mxu0
      %v2793 = vpack.c.bf16 %v2670, %v2667
      %v2794 = vpack.c.bf16 %v2678, %v2675
      %v2795 = vpack.c.bf16 %v2686, %v2683
      %v2796 = vpack.c.bf16 %v2694, %v2691
      %v2797 = vpack.c.bf16 %v2702, %v2699
      %v2798 = vpack.c.bf16 %v2710, %v2707
      %v2799 = vpack.c.bf16 %v2718, %v2715
      %v2800 = vpack.c.bf16 %v2726, %v2723
      %v2801 = vpack.c.bf16 %v2734, %v2731
      %v2802 = vpack.c.bf16 %v2742, %v2739
      %v2803 = vpack.c.bf16 %v2750, %v2747
      %v2804 = vpack.c.bf16 %v2758, %v2755
      %v2805 = vpack.c.bf16 %v2766, %v2763
      %v2806 = vpack.c.bf16 %v2774, %v2771
      %v2807 = vpack.c.bf16 %v2782, %v2779
      %v2808 = vpack.c.bf16 %v2790, %v2787
      %v2825 = vunpack.c.l.b16 %v2793
      %v2826 = vunpack.c.h.b16 %v2793
      %v2827 = vunpack.c.l.b16 %v2794
      %v2828 = vunpack.c.h.b16 %v2794
      %v2829 = vunpack.c.l.b16 %v2795
      %v2830 = vunpack.c.h.b16 %v2795
      %v2831 = vunpack.c.l.b16 %v2796
      %v2832 = vunpack.c.h.b16 %v2796
      %v2833 = vunpack.c.l.b16 %v2797
      %v2834 = vunpack.c.h.b16 %v2797
      %v2835 = vunpack.c.l.b16 %v2798
      %v2836 = vunpack.c.h.b16 %v2798
      %v2837 = vunpack.c.l.b16 %v2799
      %v2838 = vunpack.c.h.b16 %v2799
      %v2839 = vunpack.c.l.b16 %v2800
      %v2840 = vunpack.c.h.b16 %v2800
      %v2841 = vunpack.c.l.b16 %v2801
      %v2842 = vunpack.c.h.b16 %v2801
      %v2843 = vunpack.c.l.b16 %v2802
      %v2844 = vunpack.c.h.b16 %v2802
      %v2845 = vunpack.c.l.b16 %v2803
      %v2846 = vunpack.c.h.b16 %v2803
      %v2847 = vunpack.c.l.b16 %v2804
      %v2848 = vunpack.c.h.b16 %v2804
      %v2849 = vunpack.c.l.b16 %v2805
      %v2850 = vunpack.c.h.b16 %v2805
      %v2851 = vunpack.c.l.b16 %v2806
      %v2852 = vunpack.c.h.b16 %v2806
      %v2853 = vunpack.c.l.b16 %v2807
      %v2854 = vunpack.c.h.b16 %v2807
      %v2855 = vunpack.c.l.b16 %v2808
      %v2856 = vunpack.c.h.b16 %v2808
      %v2857 = vpack.c.b16 %v2825, %v2825
      %v2858 = vpack.c.b16 %v2826, %v2826
      %v2859 = vpack.c.b16 %v2827, %v2827
      %v2860 = vpack.c.b16 %v2828, %v2828
      %v2861 = vpack.c.b16 %v2829, %v2829
      %v2862 = vpack.c.b16 %v2830, %v2830
      %v2863 = vpack.c.b16 %v2831, %v2831
      %v2864 = vpack.c.b16 %v2832, %v2832
      %v2865 = vpack.c.b16 %v2833, %v2833
      %v2866 = vpack.c.b16 %v2834, %v2834
      %v2867 = vpack.c.b16 %v2835, %v2835
      %v2868 = vpack.c.b16 %v2836, %v2836
      %v2869 = vpack.c.b16 %v2837, %v2837
      %v2870 = vpack.c.b16 %v2838, %v2838
      %v2871 = vpack.c.b16 %v2839, %v2839
      %v2872 = vpack.c.b16 %v2840, %v2840
      %v2873 = vpack.c.b16 %v2841, %v2841
      %v2874 = vpack.c.b16 %v2842, %v2842
      %v2875 = vpack.c.b16 %v2843, %v2843
      %v2876 = vpack.c.b16 %v2844, %v2844
      %v2877 = vpack.c.b16 %v2845, %v2845
      %v2878 = vpack.c.b16 %v2846, %v2846
      %v2879 = vpack.c.b16 %v2847, %v2847
      %v2880 = vpack.c.b16 %v2848, %v2848
      %v2881 = vpack.c.b16 %v2849, %v2849
      %v2882 = vpack.c.b16 %v2850, %v2850
      %v2883 = vpack.c.b16 %v2851, %v2851
      %v2884 = vpack.c.b16 %v2852, %v2852
      %v2885 = vpack.c.b16 %v2853, %v2853
      %v2886 = vpack.c.b16 %v2854, %v2854
      %v2887 = vpack.c.b16 %v2855, %v2855
      %v2888 = vpack.c.b16 %v2856, %v2856
      %s2921 = scalar_lea.vmem %s218, 384
      %2922 = vst.msk [vmem:[%s2921] sm:$0xf] %vm1186, %v2857
      %2923 = vst.msk [vmem:[%s2921 + $0x4] sm:$0xf] %vm1186, %v2858
      %2924 = vst.msk [vmem:[%s2921 + $0x8] sm:$0xf] %vm1186, %v2859
      %2925 = vst.msk [vmem:[%s2921 + $0xc] sm:$0xf] %vm1186, %v2860
      %2926 = vst.msk [vmem:[%s2921 + $0x10] sm:$0xf] %vm1186, %v2861
      %2927 = vst.msk [vmem:[%s2921 + $0x14] sm:$0xf] %vm1186, %v2862
      %2928 = vst.msk [vmem:[%s2921 + $0x18] sm:$0xf] %vm1186, %v2863
      %2929 = vst.msk [vmem:[%s2921 + $0x1c] sm:$0xf] %vm1186, %v2864
      %2930 = vst.msk [vmem:[%s2921 + $0x20] sm:$0xf] %vm1186, %v2865
      %2931 = vst.msk [vmem:[%s2921 + $0x24] sm:$0xf] %vm1186, %v2866
      %2932 = vst.msk [vmem:[%s2921 + $0x28] sm:$0xf] %vm1186, %v2867
      %2933 = vst.msk [vmem:[%s2921 + $0x2c] sm:$0xf] %vm1186, %v2868
      %2934 = vst.msk [vmem:[%s2921 + $0x30] sm:$0xf] %vm1186, %v2869
      %2935 = vst.msk [vmem:[%s2921 + $0x34] sm:$0xf] %vm1186, %v2870
      %2936 = vst.msk [vmem:[%s2921 + $0x38] sm:$0xf] %vm1186, %v2871
      %2937 = vst.msk [vmem:[%s2921 + $0x3c] sm:$0xf] %vm1186, %v2872
      %2938 = vst.msk [vmem:[%s2921 + $0x40] sm:$0xf] %vm1186, %v2873
      %2939 = vst.msk [vmem:[%s2921 + $0x44] sm:$0xf] %vm1186, %v2874
      %2940 = vst.msk [vmem:[%s2921 + $0x48] sm:$0xf] %vm1186, %v2875
      %2941 = vst.msk [vmem:[%s2921 + $0x4c] sm:$0xf] %vm1186, %v2876
      %2942 = vst.msk [vmem:[%s2921 + $0x50] sm:$0xf] %vm1186, %v2877
      %2943 = vst.msk [vmem:[%s2921 + $0x54] sm:$0xf] %vm1186, %v2878
      %2944 = vst.msk [vmem:[%s2921 + $0x58] sm:$0xf] %vm1186, %v2879
      %2945 = vst.msk [vmem:[%s2921 + $0x5c] sm:$0xf] %vm1186, %v2880
      %2946 = vst.msk [vmem:[%s2921 + $0x60] sm:$0xf] %vm1186, %v2881
      %2947 = vst.msk [vmem:[%s2921 + $0x64] sm:$0xf] %vm1186, %v2882
      %2948 = vst.msk [vmem:[%s2921 + $0x68] sm:$0xf] %vm1186, %v2883
      %2949 = vst.msk [vmem:[%s2921 + $0x6c] sm:$0xf] %vm1186, %v2884
      %2950 = vst.msk [vmem:[%s2921 + $0x70] sm:$0xf] %vm1186, %v2885
      %2951 = vst.msk [vmem:[%s2921 + $0x74] sm:$0xf] %vm1186, %v2886
      %2952 = vst.msk [vmem:[%s2921 + $0x78] sm:$0xf] %vm1186, %v2887
      %2953 = vst.msk [vmem:[%s2921 + $0x7c] sm:$0xf] %vm1186, %v2888
      %v2954 = vadd.f32 %v2667, %v2670
      %v2955 = vadd.f32 %v2954, %v2675
      %v2956 = vadd.f32 %v2955, %v2678
      %v2957 = vadd.f32 %v2956, %v2683
      %v2958 = vadd.f32 %v2957, %v2686
      %v2959 = vadd.f32 %v2958, %v2691
      %v2960 = vadd.f32 %v2959, %v2694
      %v2961 = vadd.f32 %v2960, %v2699
      %v2962 = vadd.f32 %v2961, %v2702
      %v2963 = vadd.f32 %v2962, %v2707
      %v2964 = vadd.f32 %v2963, %v2710
      %v2965 = vadd.f32 %v2964, %v2715
      %v2966 = vadd.f32 %v2965, %v2718
      %v2967 = vadd.f32 %v2966, %v2723
      %v2968 = vadd.f32 %v2967, %v2726
      %v2969 = vadd.f32 %v2968, %v2731
      %v2970 = vadd.f32 %v2969, %v2734
      %v2971 = vadd.f32 %v2970, %v2739
      %v2972 = vadd.f32 %v2971, %v2742
      %v2973 = vadd.f32 %v2972, %v2747
      %v2974 = vadd.f32 %v2973, %v2750
      %v2975 = vadd.f32 %v2974, %v2755
      %v2976 = vadd.f32 %v2975, %v2758
      %v2977 = vadd.f32 %v2976, %v2763
      %v2978 = vadd.f32 %v2977, %v2766
      %v2979 = vadd.f32 %v2978, %v2771
      %v2980 = vadd.f32 %v2979, %v2774
      %v2981 = vadd.f32 %v2980, %v2779
      %v2982 = vadd.f32 %v2981, %v2782
      %v2983 = vadd.f32 %v2982, %v2787
      %v2984 = vadd.f32 %v2983, %v2790
      %v2985 = vrot.slane %v2984, 4
      %v2986 = vadd.f32 %v2984, %v2985
      %v2987 = vrot.slane %v2986, 2
      %v2988 = vadd.f32 %v2986, %v2987
      %v2989 = vrot.slane %v2988, 1
      %v2990 = vadd.f32 %v2988, %v2989
      %v2991 = vadd.f32 %v2541, %v2990
      %v2992 = vmul.f32 %v2991, 0.0009765625
      %v2993 = vsub.f32 %v932, %v2992
      %v2994 = vsub.f32 %v935, %v2992
      %v2995 = vsub.f32 %v940, %v2992
      %v2996 = vsub.f32 %v943, %v2992
      %v2997 = vsub.f32 %v948, %v2992
      %v2998 = vsub.f32 %v951, %v2992
      %v2999 = vsub.f32 %v956, %v2992
      %v3000 = vsub.f32 %v959, %v2992
      %v3001 = vsub.f32 %v964, %v2992
      %v3002 = vsub.f32 %v967, %v2992
      %v3003 = vsub.f32 %v972, %v2992
      %v3004 = vsub.f32 %v975, %v2992
      %v3005 = vsub.f32 %v980, %v2992
      %v3006 = vsub.f32 %v983, %v2992
      %v3007 = vsub.f32 %v988, %v2992
      %v3008 = vsub.f32 %v991, %v2992
      %v3009 = vsub.f32 %v996, %v2992
      %v3010 = vsub.f32 %v999, %v2992
      %v3011 = vsub.f32 %v1004, %v2992
      %v3012 = vsub.f32 %v1007, %v2992
      %v3013 = vsub.f32 %v1012, %v2992
      %v3014 = vsub.f32 %v1015, %v2992
      %v3015 = vsub.f32 %v1020, %v2992
      %v3016 = vsub.f32 %v1023, %v2992
      %v3017 = vsub.f32 %v1028, %v2992
      %v3018 = vsub.f32 %v1031, %v2992
      %v3019 = vsub.f32 %v1036, %v2992
      %v3020 = vsub.f32 %v1039, %v2992
      %v3021 = vsub.f32 %v1044, %v2992
      %v3022 = vsub.f32 %v1047, %v2992
      %v3023 = vsub.f32 %v1052, %v2992
      %v3024 = vsub.f32 %v1055, %v2992
      %v3025 = vmul.f32 %v2993, %v2993
      %v3026 = vmul.f32 %v2994, %v2994
      %v3027 = vmul.f32 %v2995, %v2995
      %v3028 = vmul.f32 %v2996, %v2996
      %v3029 = vmul.f32 %v2997, %v2997
      %v3030 = vmul.f32 %v2998, %v2998
      %v3031 = vmul.f32 %v2999, %v2999
      %v3032 = vmul.f32 %v3000, %v3000
      %v3033 = vmul.f32 %v3001, %v3001
      %v3034 = vmul.f32 %v3002, %v3002
      %v3035 = vmul.f32 %v3003, %v3003
      %v3036 = vmul.f32 %v3004, %v3004
      %v3037 = vmul.f32 %v3005, %v3005
      %v3038 = vmul.f32 %v3006, %v3006
      %v3039 = vmul.f32 %v3007, %v3007
      %v3040 = vmul.f32 %v3008, %v3008
      %v3041 = vmul.f32 %v3009, %v3009
      %v3042 = vmul.f32 %v3010, %v3010
      %v3043 = vmul.f32 %v3011, %v3011
      %v3044 = vmul.f32 %v3012, %v3012
      %v3045 = vmul.f32 %v3013, %v3013
      %v3046 = vmul.f32 %v3014, %v3014
      %v3047 = vmul.f32 %v3015, %v3015
      %v3048 = vmul.f32 %v3016, %v3016
      %v3049 = vmul.f32 %v3017, %v3017
      %v3050 = vmul.f32 %v3018, %v3018
      %v3051 = vmul.f32 %v3019, %v3019
      %v3052 = vmul.f32 %v3020, %v3020
      %v3053 = vmul.f32 %v3021, %v3021
      %v3054 = vmul.f32 %v3022, %v3022
      %v3055 = vmul.f32 %v3023, %v3023
      %v3056 = vmul.f32 %v3024, %v3024
      %v3057 = vadd.f32 %v3025, %v3026
      %v3058 = vadd.f32 %v3057, %v3027
      %v3059 = vadd.f32 %v3058, %v3028
      %v3060 = vadd.f32 %v3059, %v3029
      %v3061 = vadd.f32 %v3060, %v3030
      %v3062 = vadd.f32 %v3061, %v3031
      %v3063 = vadd.f32 %v3062, %v3032
      %v3064 = vadd.f32 %v3063, %v3033
      %v3065 = vadd.f32 %v3064, %v3034
      %v3066 = vadd.f32 %v3065, %v3035
      %v3067 = vadd.f32 %v3066, %v3036
      %v3068 = vadd.f32 %v3067, %v3037
      %v3069 = vadd.f32 %v3068, %v3038
      %v3070 = vadd.f32 %v3069, %v3039
      %v3071 = vadd.f32 %v3070, %v3040
      %v3072 = vadd.f32 %v3071, %v3041
      %v3073 = vadd.f32 %v3072, %v3042
      %v3074 = vadd.f32 %v3073, %v3043
      %v3075 = vadd.f32 %v3074, %v3044
      %v3076 = vadd.f32 %v3075, %v3045
      %v3077 = vadd.f32 %v3076, %v3046
      %v3078 = vadd.f32 %v3077, %v3047
      %v3079 = vadd.f32 %v3078, %v3048
      %v3080 = vadd.f32 %v3079, %v3049
      %v3081 = vadd.f32 %v3080, %v3050
      %v3082 = vadd.f32 %v3081, %v3051
      %v3083 = vadd.f32 %v3082, %v3052
      %v3084 = vadd.f32 %v3083, %v3053
      %v3085 = vadd.f32 %v3084, %v3054
      %v3086 = vadd.f32 %v3085, %v3055
      %v3087 = vadd.f32 %v3086, %v3056
      %v3088 = vrot.slane %v3087, 4
      %v3089 = vadd.f32 %v3087, %v3088
      %v3090 = vrot.slane %v3089, 2
      %v3091 = vadd.f32 %v3089, %v3090
      %v3092 = vrot.slane %v3091, 1
      %v3093 = vadd.f32 %v3091, %v3092
      %v3094 = vadd.f32 %v3093, 0.0
      %v3095 = vsub.f32 %v1759, %v2992
      %v3096 = vsub.f32 %v1762, %v2992
      %v3097 = vsub.f32 %v1767, %v2992
      %v3098 = vsub.f32 %v1770, %v2992
      %v3099 = vsub.f32 %v1775, %v2992
      %v3100 = vsub.f32 %v1778, %v2992
      %v3101 = vsub.f32 %v1783, %v2992
      %v3102 = vsub.f32 %v1786, %v2992
      %v3103 = vsub.f32 %v1791, %v2992
      %v3104 = vsub.f32 %v1794, %v2992
      %v3105 = vsub.f32 %v1799, %v2992
      %v3106 = vsub.f32 %v1802, %v2992
      %v3107 = vsub.f32 %v1807, %v2992
      %v3108 = vsub.f32 %v1810, %v2992
      %v3109 = vsub.f32 %v1815, %v2992
      %v3110 = vsub.f32 %v1818, %v2992
      %v3111 = vsub.f32 %v1823, %v2992
      %v3112 = vsub.f32 %v1826, %v2992
      %v3113 = vsub.f32 %v1831, %v2992
      %v3114 = vsub.f32 %v1834, %v2992
      %v3115 = vsub.f32 %v1839, %v2992
      %v3116 = vsub.f32 %v1842, %v2992
      %v3117 = vsub.f32 %v1847, %v2992
      %v3118 = vsub.f32 %v1850, %v2992
      %v3119 = vsub.f32 %v1855, %v2992
      %v3120 = vsub.f32 %v1858, %v2992
      %v3121 = vsub.f32 %v1863, %v2992
      %v3122 = vsub.f32 %v1866, %v2992
      %v3123 = vsub.f32 %v1871, %v2992
      %v3124 = vsub.f32 %v1874, %v2992
      %v3125 = vsub.f32 %v1879, %v2992
      %v3126 = vsub.f32 %v1882, %v2992
      %v3127 = vmul.f32 %v3095, %v3095
      %v3128 = vmul.f32 %v3096, %v3096
      %v3129 = vmul.f32 %v3097, %v3097
      %v3130 = vmul.f32 %v3098, %v3098
      %v3131 = vmul.f32 %v3099, %v3099
      %v3132 = vmul.f32 %v3100, %v3100
      %v3133 = vmul.f32 %v3101, %v3101
      %v3134 = vmul.f32 %v3102, %v3102
      %v3135 = vmul.f32 %v3103, %v3103
      %v3136 = vmul.f32 %v3104, %v3104
      %v3137 = vmul.f32 %v3105, %v3105
      %v3138 = vmul.f32 %v3106, %v3106
      %v3139 = vmul.f32 %v3107, %v3107
      %v3140 = vmul.f32 %v3108, %v3108
      %v3141 = vmul.f32 %v3109, %v3109
      %v3142 = vmul.f32 %v3110, %v3110
      %v3143 = vmul.f32 %v3111, %v3111
      %v3144 = vmul.f32 %v3112, %v3112
      %v3145 = vmul.f32 %v3113, %v3113
      %v3146 = vmul.f32 %v3114, %v3114
      %v3147 = vmul.f32 %v3115, %v3115
      %v3148 = vmul.f32 %v3116, %v3116
      %v3149 = vmul.f32 %v3117, %v3117
      %v3150 = vmul.f32 %v3118, %v3118
      %v3151 = vmul.f32 %v3119, %v3119
      %v3152 = vmul.f32 %v3120, %v3120
      %v3153 = vmul.f32 %v3121, %v3121
      %v3154 = vmul.f32 %v3122, %v3122
      %v3155 = vmul.f32 %v3123, %v3123
      %v3156 = vmul.f32 %v3124, %v3124
      %v3157 = vmul.f32 %v3125, %v3125
      %v3158 = vmul.f32 %v3126, %v3126
      %v3159 = vadd.f32 %v3127, %v3128
      %v3160 = vadd.f32 %v3159, %v3129
      %v3161 = vadd.f32 %v3160, %v3130
      %v3162 = vadd.f32 %v3161, %v3131
      %v3163 = vadd.f32 %v3162, %v3132
      %v3164 = vadd.f32 %v3163, %v3133
      %v3165 = vadd.f32 %v3164, %v3134
      %v3166 = vadd.f32 %v3165, %v3135
      %v3167 = vadd.f32 %v3166, %v3136
      %v3168 = vadd.f32 %v3167, %v3137
      %v3169 = vadd.f32 %v3168, %v3138
      %v3170 = vadd.f32 %v3169, %v3139
      %v3171 = vadd.f32 %v3170, %v3140
      %v3172 = vadd.f32 %v3171, %v3141
      %v3173 = vadd.f32 %v3172, %v3142
      %v3174 = vadd.f32 %v3173, %v3143
      %v3175 = vadd.f32 %v3174, %v3144
      %v3176 = vadd.f32 %v3175, %v3145
      %v3177 = vadd.f32 %v3176, %v3146
      %v3178 = vadd.f32 %v3177, %v3147
      %v3179 = vadd.f32 %v3178, %v3148
      %v3180 = vadd.f32 %v3179, %v3149
      %v3181 = vadd.f32 %v3180, %v3150
      %v3182 = vadd.f32 %v3181, %v3151
      %v3183 = vadd.f32 %v3182, %v3152
      %v3184 = vadd.f32 %v3183, %v3153
      %v3185 = vadd.f32 %v3184, %v3154
      %v3186 = vadd.f32 %v3185, %v3155
      %v3187 = vadd.f32 %v3186, %v3156
      %v3188 = vadd.f32 %v3187, %v3157
      %v3189 = vadd.f32 %v3188, %v3158
      %v3190 = vrot.slane %v3189, 4
      %v3191 = vadd.f32 %v3189, %v3190
      %v3192 = vrot.slane %v3191, 2
      %v3193 = vadd.f32 %v3191, %v3192
      %v3194 = vrot.slane %v3193, 1
      %v3195 = vadd.f32 %v3193, %v3194
      %v3196 = vadd.f32 %v3094, %v3195
      %v3197 = vsub.f32 %v2217, %v2992
      %v3198 = vsub.f32 %v2220, %v2992
      %v3199 = vsub.f32 %v2225, %v2992
      %v3200 = vsub.f32 %v2228, %v2992
      %v3201 = vsub.f32 %v2233, %v2992
      %v3202 = vsub.f32 %v2236, %v2992
      %v3203 = vsub.f32 %v2241, %v2992
      %v3204 = vsub.f32 %v2244, %v2992
      %v3205 = vsub.f32 %v2249, %v2992
      %v3206 = vsub.f32 %v2252, %v2992
      %v3207 = vsub.f32 %v2257, %v2992
      %v3208 = vsub.f32 %v2260, %v2992
      %v3209 = vsub.f32 %v2265, %v2992
      %v3210 = vsub.f32 %v2268, %v2992
      %v3211 = vsub.f32 %v2273, %v2992
      %v3212 = vsub.f32 %v2276, %v2992
      %v3213 = vsub.f32 %v2281, %v2992
      %v3214 = vsub.f32 %v2284, %v2992
      %v3215 = vsub.f32 %v2289, %v2992
      %v3216 = vsub.f32 %v2292, %v2992
      %v3217 = vsub.f32 %v2297, %v2992
      %v3218 = vsub.f32 %v2300, %v2992
      %v3219 = vsub.f32 %v2305, %v2992
      %v3220 = vsub.f32 %v2308, %v2992
      %v3221 = vsub.f32 %v2313, %v2992
      %v3222 = vsub.f32 %v2316, %v2992
      %v3223 = vsub.f32 %v2321, %v2992
      %v3224 = vsub.f32 %v2324, %v2992
      %v3225 = vsub.f32 %v2329, %v2992
      %v3226 = vsub.f32 %v2332, %v2992
      %v3227 = vsub.f32 %v2337, %v2992
      %v3228 = vsub.f32 %v2340, %v2992
      %v3229 = vmul.f32 %v3197, %v3197
      %v3230 = vmul.f32 %v3198, %v3198
      %v3231 = vmul.f32 %v3199, %v3199
      %v3232 = vmul.f32 %v3200, %v3200
      %v3233 = vmul.f32 %v3201, %v3201
      %v3234 = vmul.f32 %v3202, %v3202
      %v3235 = vmul.f32 %v3203, %v3203
      %v3236 = vmul.f32 %v3204, %v3204
      %v3237 = vmul.f32 %v3205, %v3205
      %v3238 = vmul.f32 %v3206, %v3206
      %v3239 = vmul.f32 %v3207, %v3207
      %v3240 = vmul.f32 %v3208, %v3208
      %v3241 = vmul.f32 %v3209, %v3209
      %v3242 = vmul.f32 %v3210, %v3210
      %v3243 = vmul.f32 %v3211, %v3211
      %v3244 = vmul.f32 %v3212, %v3212
      %v3245 = vmul.f32 %v3213, %v3213
      %v3246 = vmul.f32 %v3214, %v3214
      %v3247 = vmul.f32 %v3215, %v3215
      %v3248 = vmul.f32 %v3216, %v3216
      %v3249 = vmul.f32 %v3217, %v3217
      %v3250 = vmul.f32 %v3218, %v3218
      %v3251 = vmul.f32 %v3219, %v3219
      %v3252 = vmul.f32 %v3220, %v3220
      %v3253 = vmul.f32 %v3221, %v3221
      %v3254 = vmul.f32 %v3222, %v3222
      %v3255 = vmul.f32 %v3223, %v3223
      %v3256 = vmul.f32 %v3224, %v3224
      %v3257 = vmul.f32 %v3225, %v3225
      %v3258 = vmul.f32 %v3226, %v3226
      %v3259 = vmul.f32 %v3227, %v3227
      %v3260 = vmul.f32 %v3228, %v3228
      %v3261 = vadd.f32 %v3229, %v3230
      %v3262 = vadd.f32 %v3261, %v3231
      %v3263 = vadd.f32 %v3262, %v3232
      %v3264 = vadd.f32 %v3263, %v3233
      %v3265 = vadd.f32 %v3264, %v3234
      %v3266 = vadd.f32 %v3265, %v3235
      %v3267 = vadd.f32 %v3266, %v3236
      %v3268 = vadd.f32 %v3267, %v3237
      %v3269 = vadd.f32 %v3268, %v3238
      %v3270 = vadd.f32 %v3269, %v3239
      %v3271 = vadd.f32 %v3270, %v3240
      %v3272 = vadd.f32 %v3271, %v3241
      %v3273 = vadd.f32 %v3272, %v3242
      %v3274 = vadd.f32 %v3273, %v3243
      %v3275 = vadd.f32 %v3274, %v3244
      %v3276 = vadd.f32 %v3275, %v3245
      %v3277 = vadd.f32 %v3276, %v3246
      %v3278 = vadd.f32 %v3277, %v3247
      %v3279 = vadd.f32 %v3278, %v3248
      %v3280 = vadd.f32 %v3279, %v3249
      %v3281 = vadd.f32 %v3280, %v3250
      %v3282 = vadd.f32 %v3281, %v3251
      %v3283 = vadd.f32 %v3282, %v3252
      %v3284 = vadd.f32 %v3283, %v3253
      %v3285 = vadd.f32 %v3284, %v3254
      %v3286 = vadd.f32 %v3285, %v3255
      %v3287 = vadd.f32 %v3286, %v3256
      %v3288 = vadd.f32 %v3287, %v3257
      %v3289 = vadd.f32 %v3288, %v3258
      %v3290 = vadd.f32 %v3289, %v3259
      %v3291 = vadd.f32 %v3290, %v3260
      %v3292 = vrot.slane %v3291, 4
      %v3293 = vadd.f32 %v3291, %v3292
      %v3294 = vrot.slane %v3293, 2
      %v3295 = vadd.f32 %v3293, %v3294
      %v3296 = vrot.slane %v3295, 1
      %v3297 = vadd.f32 %v3295, %v3296
      %v3298 = vadd.f32 %v3196, %v3297
      %v3299 = vsub.f32 %v2667, %v2992
      %v3300 = vsub.f32 %v2670, %v2992
      %v3301 = vsub.f32 %v2675, %v2992
      %v3302 = vsub.f32 %v2678, %v2992
      %v3303 = vsub.f32 %v2683, %v2992
      %v3304 = vsub.f32 %v2686, %v2992
      %v3305 = vsub.f32 %v2691, %v2992
      %v3306 = vsub.f32 %v2694, %v2992
      %v3307 = vsub.f32 %v2699, %v2992
      %v3308 = vsub.f32 %v2702, %v2992
      %v3309 = vsub.f32 %v2707, %v2992
      %v3310 = vsub.f32 %v2710, %v2992
      %v3311 = vsub.f32 %v2715, %v2992
      %v3312 = vsub.f32 %v2718, %v2992
      %v3313 = vsub.f32 %v2723, %v2992
      %v3314 = vsub.f32 %v2726, %v2992
      %v3315 = vsub.f32 %v2731, %v2992
      %v3316 = vsub.f32 %v2734, %v2992
      %v3317 = vsub.f32 %v2739, %v2992
      %v3318 = vsub.f32 %v2742, %v2992
      %v3319 = vsub.f32 %v2747, %v2992
      %v3320 = vsub.f32 %v2750, %v2992
      %v3321 = vsub.f32 %v2755, %v2992
      %v3322 = vsub.f32 %v2758, %v2992
      %v3323 = vsub.f32 %v2763, %v2992
      %v3324 = vsub.f32 %v2766, %v2992
      %v3325 = vsub.f32 %v2771, %v2992
      %v3326 = vsub.f32 %v2774, %v2992
      %v3327 = vsub.f32 %v2779, %v2992
      %v3328 = vsub.f32 %v2782, %v2992
      %v3329 = vsub.f32 %v2787, %v2992
      %v3330 = vsub.f32 %v2790, %v2992
      %v3331 = vmul.f32 %v3299, %v3299
      %v3332 = vmul.f32 %v3300, %v3300
      %v3333 = vmul.f32 %v3301, %v3301
      %v3334 = vmul.f32 %v3302, %v3302
      %v3335 = vmul.f32 %v3303, %v3303
      %v3336 = vmul.f32 %v3304, %v3304
      %v3337 = vmul.f32 %v3305, %v3305
      %v3338 = vmul.f32 %v3306, %v3306
      %v3339 = vmul.f32 %v3307, %v3307
      %v3340 = vmul.f32 %v3308, %v3308
      %v3341 = vmul.f32 %v3309, %v3309
      %v3342 = vmul.f32 %v3310, %v3310
      %v3343 = vmul.f32 %v3311, %v3311
      %v3344 = vmul.f32 %v3312, %v3312
      %v3345 = vmul.f32 %v3313, %v3313
      %v3346 = vmul.f32 %v3314, %v3314
      %v3347 = vmul.f32 %v3315, %v3315
      %v3348 = vmul.f32 %v3316, %v3316
      %v3349 = vmul.f32 %v3317, %v3317
      %v3350 = vmul.f32 %v3318, %v3318
      %v3351 = vmul.f32 %v3319, %v3319
      %v3352 = vmul.f32 %v3320, %v3320
      %v3353 = vmul.f32 %v3321, %v3321
      %v3354 = vmul.f32 %v3322, %v3322
      %v3355 = vmul.f32 %v3323, %v3323
      %v3356 = vmul.f32 %v3324, %v3324
      %v3357 = vmul.f32 %v3325, %v3325
      %v3358 = vmul.f32 %v3326, %v3326
      %v3359 = vmul.f32 %v3327, %v3327
      %v3360 = vmul.f32 %v3328, %v3328
      %v3361 = vmul.f32 %v3329, %v3329
      %v3362 = vmul.f32 %v3330, %v3330
      %v3363 = vadd.f32 %v3331, %v3332
      %v3364 = vadd.f32 %v3363, %v3333
      %v3365 = vadd.f32 %v3364, %v3334
      %v3366 = vadd.f32 %v3365, %v3335
      %v3367 = vadd.f32 %v3366, %v3336
      %v3368 = vadd.f32 %v3367, %v3337
      %v3369 = vadd.f32 %v3368, %v3338
      %v3370 = vadd.f32 %v3369, %v3339
      %v3371 = vadd.f32 %v3370, %v3340
      %v3372 = vadd.f32 %v3371, %v3341
      %v3373 = vadd.f32 %v3372, %v3342
      %v3374 = vadd.f32 %v3373, %v3343
      %v3375 = vadd.f32 %v3374, %v3344
      %v3376 = vadd.f32 %v3375, %v3345
      %v3377 = vadd.f32 %v3376, %v3346
      %v3378 = vadd.f32 %v3377, %v3347
      %v3379 = vadd.f32 %v3378, %v3348
      %v3380 = vadd.f32 %v3379, %v3349
      %v3381 = vadd.f32 %v3380, %v3350
      %v3382 = vadd.f32 %v3381, %v3351
      %v3383 = vadd.f32 %v3382, %v3352
      %v3384 = vadd.f32 %v3383, %v3353
      %v3385 = vadd.f32 %v3384, %v3354
      %v3386 = vadd.f32 %v3385, %v3355
      %v3387 = vadd.f32 %v3386, %v3356
      %v3388 = vadd.f32 %v3387, %v3357
      %v3389 = vadd.f32 %v3388, %v3358
      %v3390 = vadd.f32 %v3389, %v3359
      %v3391 = vadd.f32 %v3390, %v3360
      %v3392 = vadd.f32 %v3391, %v3361
      %v3393 = vadd.f32 %v3392, %v3362
      %v3394 = vrot.slane %v3393, 4
      %v3395 = vadd.f32 %v3393, %v3394
      %v3396 = vrot.slane %v3395, 2
      %v3397 = vadd.f32 %v3395, %v3396
      %v3398 = vrot.slane %v3397, 1
      %v3399 = vadd.f32 %v3397, %v3398
      %v3400 = vadd.f32 %v3298, %v3399
      %vm3401 = vcmask 1040384
      %v3402 = vsel %vm3401, %v2991, %v3400
      %3403 = vst [vmem:[%s225] sm:$0x3] %v3402
      %p3404 = scmp.lt.s32.totalorder %s19, 1
      %s3405 = scalar_select %p3404, %s19, 1
      %p3406 = scmp.lt.s32.totalorder %s20, 0
      %s3407 = scalar_select %p3406, %s20, 0
      %s3408 = smul.addr %s3407, 128
      %s3409 = smul.addr %s3405, 128
      %s3410 = sadd.s32 %s3408, %s3409
      %s3411 = smul.addr %s3410, 4
      %s3412 = scalar_lea.vmem %s2, %s3411
      %p3413 = scmp.lt.s32.totalorder %s19, 1
      %s3414 = scalar_select %p3413, %s19, 1
      %p3415 = scmp.lt.s32.totalorder %s20, 0
      %s3416 = scalar_select %p3415, %s20, 0
      %s3417 = sadd.s32 %s3416, %s3414
      %s3418 = smul.addr %s3417, 2
      %s3419 = scalar_lea.vmem %s3, %s3418
      // Predicated region
      $region29: #{uconv_forward.2} parent=27 // pred_check
        %p3420 = pneg %p96
      $region30: #{uconv_forward.2} parent=27 // pred_check_branch
        %3422 = sbr.rel (%p3420) target = $region32
      $region31: #{uconv_forward.2} parent=27 // pred_region
        _
      $region32: #{uconv_forward.2} parent=27 // pred_fallthru
        _
      // Predicated region
      $region33: #{uconv_forward.2} parent=27 // pred_check
        %p3423 = pneg %p124
      $region34: #{uconv_forward.2} parent=27 // pred_check_branch
        %3425 = sbr.rel (%p3423) target = $region36
      $region35: #{uconv_forward.2} parent=27 // pred_region
        _
      $region36: #{uconv_forward.2} parent=27 // pred_fallthru
        _
    $region28: #{uconv_forward.2} parent=5 // pred_fallthru
      _
    %p3426 = scmp.le.s32.totalorder 2, %s10
    // Predicated region
    $region37: #{uconv_forward.2} parent=5 // pred_check
      %p3427 = pneg %p3426
    $region38: #{uconv_forward.2} parent=5 // pred_check_branch
      %3429 = sbr.rel (%p3427) target = $region40
    $region39: #{uconv_forward.2} parent=5 // pred_region
      %s3430 = ssub.s32 %s10, 2
      // Predicated region
      $region41: #{uconv_forward.2} parent=39 // pred_check
        %p3431 = pneg %p102
      $region42: #{uconv_forward.2} parent=39 // pred_check_branch
        %3433 = sbr.rel (%p3431) target = $region44
      $region43: #{uconv_forward.2} parent=39 // pred_region
        %p3434 = scmp.lt.s32.totalorder %s21, 1
        %s3435 = scalar_select %p3434, %s21, 1
        %p3436 = scmp.lt.s32.totalorder %s22, 0
        %s3437 = scalar_select %p3436, %s22, 0
        %s3438 = smul.addr %s3437, 128
        %s3439 = smul.addr %s3435, 128
        %s3440 = sadd.s32 %s3438, %s3439
        %s3441 = smul.addr %s3440, 4
        %s3442 = scalar_lea.vmem %s2, %s3441
      $region44: #{uconv_forward.2} parent=39 // pred_fallthru
        _
      // Predicated region
      $region45: #{uconv_forward.2} parent=39 // pred_check
        %p3443 = pneg %p130
      $region46: #{uconv_forward.2} parent=39 // pred_check_branch
        %3445 = sbr.rel (%p3443) target = $region48
      $region47: #{uconv_forward.2} parent=39 // pred_region
        %p3446 = scmp.lt.s32.totalorder %s21, 1
        %s3447 = scalar_select %p3446, %s21, 1
        %p3448 = scmp.lt.s32.totalorder %s22, 0
        %s3449 = scalar_select %p3448, %s22, 0
        %s3450 = sadd.s32 %s3449, %s3447
        %s3451 = smul.addr %s3450, 2
        %s3452 = scalar_lea.vmem %s3, %s3451
      $region48: #{uconv_forward.2} parent=39 // pred_fallthru
        _
    $region40: #{uconv_forward.2} parent=5 // pred_fallthru
      _
  $region6: #{uconv_forward.2} parent=0 // loop_footer
    %s14 = sadd.s32 1, %s10
  $region7: #{uconv_forward.2} parent=0 // loop_footer_branch
    %9 = sbr.rel target = $region3
  $region8: #{uconv_forward.2} parent=0 // loop_exit
    _

</llo_original>
